<compile_context>
chip_gen: v7x
topology: tpu7x:2x2x1
jax: 0.10.0
libtpu: 0.0.40
codegen_flags: <defaults>
</compile_context>

<pallas_src>
import math

import jax
import jax.numpy as jnp
from jax.experimental import pallas as pl
from jax.experimental.pallas import tpu as pltpu

BN_EPS = 1e-5
_VMEM_LIMIT = 48 * 1024 * 1024
_ROW_TILE_CAP = 512


def _round_up(x, m):
    return (x + m - 1) // m * m


def _cparams(semantics):
    return pltpu.CompilerParams(
        dimension_semantics=semantics, vmem_limit_bytes=_VMEM_LIMIT)


# ----------------------------- Pallas kernels ------------------------------

def _matmul_kernel(p_ref, w_ref, o_ref):
    # p_ref: (1, TR, K) bf16   w_ref: (1, K, Cm) bf16   o_ref: (1, TR, Cm) f32
    o_ref[0] = jnp.dot(p_ref[0], w_ref[0], preferred_element_type=jnp.float32)


def _matmul_tanh_kernel(p_ref, w_ref, o_ref):
    acc = jnp.dot(p_ref[0], w_ref[0], preferred_element_type=jnp.float32)
    o_ref[0] = jnp.tanh(acc)


def _bn_relu_kernel(y_ref, s_ref, b_ref, o_ref):
    # y_ref: (TR, Cm) f32   s_ref/b_ref: (1, Cm) f32   o_ref: (TR, Cm) bf16
    y = y_ref[...] * s_ref[...] + b_ref[...]
    o_ref[...] = jnp.maximum(y, 0.0).astype(o_ref.dtype)


# -------------------------- pallas_call wrappers ----------------------------

def _tiled_matmul(patches, weights, row_tile, activation=None):
    """(P, Rp, K) @ (P, K, Cm) -> (P, Rp, Cm) f32, gridded over (phase, rows)."""
    P, Rp, K = patches.shape
    Cm = weights.shape[-1]
    kernel = _matmul_tanh_kernel if activation == "tanh" else _matmul_kernel
    return pl.pallas_call(
        kernel,
        out_shape=jax.ShapeDtypeStruct((P, Rp, Cm), jnp.float32),
        grid=(P, Rp // row_tile),
        in_specs=[
            pl.BlockSpec((1, row_tile, K), lambda p, i: (p, i, 0)),
            pl.BlockSpec((1, K, Cm), lambda p, i: (p, 0, 0)),  # resident over rows
        ],
        out_specs=pl.BlockSpec((1, row_tile, Cm), lambda p, i: (p, i, 0)),
        compiler_params=_cparams(("parallel", "parallel")),
    )(patches, weights)


def _bn_relu_apply(y2d, scale, shift):
    """Elementwise y*scale + shift -> ReLU -> bf16, row-tiled."""
    rows, Cm = y2d.shape
    tr = math.gcd(rows, _ROW_TILE_CAP)
    if tr % 16 != 0:  # bf16 output wants sublane-16 tiles (or the full dim)
        tr = rows
    return pl.pallas_call(
        _bn_relu_kernel,
        out_shape=jax.ShapeDtypeStruct((rows, Cm), jnp.bfloat16),
        grid=(rows // tr,),
        in_specs=[
            pl.BlockSpec((tr, Cm), lambda i: (i, 0)),
            pl.BlockSpec((1, Cm), lambda i: (0, 0)),
            pl.BlockSpec((1, Cm), lambda i: (0, 0)),
        ],
        out_specs=pl.BlockSpec((tr, Cm), lambda i: (i, 0)),
        compiler_params=_cparams(("parallel",)),
    )(y2d, scale, shift)


# ------------------------------ glue (JAX) ---------------------------------

def _batchnorm_scale_shift(y2d, real_rows, gamma, beta, cout, cnp):
    """Batch-statistics BN folded into per-column scale/shift.

    Padded rows of y2d are exactly zero (zero patch rows), so plain sums with
    the true row count give exact PyTorch training-mode (biased) statistics.
    """
    cnt = jnp.float32(real_rows)
    s1 = jnp.sum(y2d, axis=0)
    s2 = jnp.sum(y2d * y2d, axis=0)
    mean = s1 / cnt
    var = jnp.maximum(s2 / cnt - mean * mean, 0.0)
    g = jnp.pad(gamma, (0, cnp - cout))
    b = jnp.pad(beta, (0, cnp - cout))
    scale = g * jax.lax.rsqrt(var + BN_EPS)
    shift = b - mean * scale
    return (scale.reshape(1, cnp).astype(jnp.float32),
            shift.reshape(1, cnp).astype(jnp.float32))


def _deconv1_bn_relu(z, w, gamma, beta):
    """ConvTranspose2d(k=4, s=1, p=0) on a 1x1 input == plain matmul, + BN + ReLU."""
    n, latent = z.shape
    cin, cout, kh, kw = w.shape
    assert cin == latent
    cnp = _round_up(cout, 128)

    # columns ordered (kh, kw, co_padded) so a later reshape exposes channels last
    w_m = jnp.transpose(w, (0, 2, 3, 1))                       # (Cin, KH, KW, Cout)
    w_m = jnp.pad(w_m, ((0, 0), (0, 0), (0, 0), (0, cnp - cout)))
    w_m = w_m.reshape(cin, kh * kw * cnp).astype(jnp.bfloat16)

    row_tile = min(_ROW_TILE_CAP, _round_up(n, 16))
    rp = _round_up(n, row_tile)
    p = jnp.pad(z.astype(jnp.bfloat16), ((0, rp - n), (0, 0)))[None]   # (1, Rp, Cin)

    y = _tiled_matmul(p, w_m[None], row_tile)                  # (1, Rp, 16*Cnp) f32
    y2 = y.reshape(rp * kh * kw, cnp)
    scale, shift = _batchnorm_scale_shift(y2, n * kh * kw, gamma, beta, cout, cnp)
    a = _bn_relu_apply(y2, scale, shift)                       # bf16
    return a.reshape(rp, kh, kw, cnp)[:n, :, :, :cout]         # (N, 4, 4, Cout) NHWC


def _phase_im2col(x, w):
    """4-phase (sub-pixel) decomposition of ConvTranspose2d(k=4, s=2, p=1).

    Phase (rh, rw) produces output pixels (2m+rh, 2n+rw). Its patch row for
    output (m, n) is the 2x2 window of the 1-padded input starting at
    (m+rh, n+rw); its tap (dh, dw) weight is w[:, :, 3-rh-2*dh, 3-rw-2*dw].
    """
    n, h, wdim, cin = x.shape
    cin_w, cout, kh, kw = w.shape
    assert cin == cin_w and kh == 4 and kw == 4
    cnp = _round_up(cout, 128)

    r = n * h * wdim
    row_tile = min(_ROW_TILE_CAP, _round_up(r, 16))
    rp = _round_up(r, row_tile)

    xp = jnp.pad(x, ((0, 0), (1, 1), (1, 1), (0, 0)))
    wf = w[:, :, ::-1, ::-1]                                   # spatially flipped

    pats, wmats = [], []
    for rh in (0, 1):
        for rw in (0, 1):
            taps = [xp[:, rh + dh:rh + dh + h, rw + dw:rw + dw + wdim, :]
                    for dh in (0, 1) for dw in (0, 1)]
            pat = jnp.stack(taps, axis=3).reshape(r, 4 * cin)  # cols = (tap, cin)
            pats.append(jnp.pad(pat, ((0, rp - r), (0, 0))))
            wsub = jnp.stack([wf[:, :, rh + 2 * dh, rw + 2 * dw]
                              for dh in (0, 1) for dw in (0, 1)], axis=0)
            wsub = wsub.reshape(4 * cin, cout)                 # rows = (tap, cin)
            wmats.append(jnp.pad(wsub, ((0, 0), (0, cnp - cout))))

    patches = jnp.stack(pats).astype(jnp.bfloat16)             # (4, Rp, 4*Cin)
    weights = jnp.stack(wmats).astype(jnp.bfloat16)            # (4, 4*Cin, Cnp)
    return patches, weights, (n, h, wdim, cout, cnp, r, rp, row_tile)


def _phase_merge(y_phases, n, h, wdim, cout):
    # y_phases: (4, R, Cout) with phase index p = rh*2 + rw
    y = y_phases.reshape(2, 2, n, h, wdim, cout)
    y = jnp.transpose(y, (2, 3, 0, 4, 1, 5))                   # (N, H, rh, W, rw, C)
    return y.reshape(n, 2 * h, 2 * wdim, cout)


def _deconv_s2_bn_relu(x, w, gamma, beta):
    patches, weights, (n, h, wdim, cout, cnp, r, rp, row_tile) = _phase_im2col(x, w)
    y = _tiled_matmul(patches, weights, row_tile)              # (4, Rp, Cnp) f32
    y2 = y.reshape(4 * rp, cnp)
    scale, shift = _batchnorm_scale_shift(y2, 4 * r, gamma, beta, cout, cnp)
    a = _bn_relu_apply(y2, scale, shift)                       # (4*Rp, Cnp) bf16
    a = a.reshape(4, rp, cnp)[:, :r, :cout]
    return _phase_merge(a, n, h, wdim, cout)                   # (N, 2H, 2W, Cout) bf16


def _deconv_s2_tanh(x, w):
    patches, weights, (n, h, wdim, cout, cnp, r, rp, row_tile) = _phase_im2col(x, w)
    y = _tiled_matmul(patches, weights, row_tile, activation="tanh")   # f32
    y = y[:, :r, :cout]
    return _phase_merge(y, n, h, wdim, cout)                   # (N, 2H, 2W, Cout) f32


# ------------------------------ model setup --------------------------------

def make_params(key, latent_dim, image_shape, feature_size):
    """DCGAN-style init: conv weights ~ N(0, 0.02), BN gamma ~ N(1, 0.02), beta = 0."""
    fs = feature_size
    c_img = image_shape[0]
    chans = [(latent_dim, fs * 8), (fs * 8, fs * 4), (fs * 4, fs * 2),
             (fs * 2, fs), (fs, c_img)]
    params = {}
    for i, (cin, cout) in enumerate(chans, start=1):
        key, kw_key, kg_key = jax.random.split(key, 3)
        params[f"w{i}"] = 0.02 * jax.random.normal(kw_key, (cin, cout, 4, 4), jnp.float32)
        if i < 5:   # last layer has Tanh, no BN
            params[f"g{i}"] = 1.0 + 0.02 * jax.random.normal(kg_key, (cout,), jnp.float32)
            params[f"b{i}"] = jnp.zeros((cout,), jnp.float32)
    return params


def netg_celeba_forward(params, z):
    """z: (N, latent_dim) -> images (N, C, 64, 64), mirroring NetG_CelebA."""
    x = _deconv1_bn_relu(z.astype(jnp.float32), params["w1"], params["g1"], params["b1"])  # 4x4
    x = _deconv_s2_bn_relu(x, params["w2"], params["g2"], params["b2"])                    # 8x8
    x = _deconv_s2_bn_relu(x, params["w3"], params["g3"], params["b3"])                    # 16x16
    x = _deconv_s2_bn_relu(x, params["w4"], params["g4"], params["b4"])                    # 32x32
    x = _deconv_s2_tanh(x, params["w5"])                                                   # 64x64
    return jnp.transpose(x, (0, 3, 1, 2))                      # NCHW, f32


# TODO(synk): BatchNorm running_mean/running_var buffer updates (training-time
# side effect, not part of the forward output) are not reproduced.

if __name__ == "__main__":
    latent_dim = 8
    feature_size = 8
    image_shape = (3, 64, 64)
    batch = 2

    key = jax.random.PRNGKey(0)
    key, kz = jax.random.split(key)
    params = make_params(key, latent_dim, image_shape, feature_size)
    z = jax.random.normal(kz, (batch, latent_dim), jnp.float32)

    fwd = jax.jit(netg_celeba_forward)
    out = fwd(params, z)
    out = jax.block_until_ready(out)

    assert out.shape == (batch, image_shape[0], 64, 64), out.shape
    assert out.dtype == jnp.float32
    assert bool(jnp.all(jnp.isfinite(out)))
    assert bool(jnp.all(jnp.abs(out) <= 1.0 + 1e-6))  # tanh range
    print("KERNEL_OK")
</pallas_src>

<mosaic_0001>
module attributes {stable_mosaic.version = 11 : i64} {
  func.func @_matmul_kernel(%arg0: i32, %arg1: i32, %arg2: memref<1x16x8xbf16, #tpu.memory_space<vmem>>, %arg3: memref<1x8x2048xbf16, #tpu.memory_space<vmem>>, %arg4: memref<1x16x2048xf32, #tpu.memory_space<vmem>>) attributes {dimension_semantics = [#tpu.dimension_semantics<parallel>, #tpu.dimension_semantics<parallel>], iteration_bounds = array<i64: 1, 1>, scalar_prefetch = 0 : i64, scratch_operands = 0 : i64, tpu.core_type = #tpu.core_type<tc>, window_params = [{transform_indices = @transform_0, window_bounds = array<i64: 1, 16, 8>}, {transform_indices = @transform_1, window_bounds = array<i64: 1, 8, 2048>}, {transform_indices = @transform_2, window_bounds = array<i64: 1, 16, 2048>}]} {
    %c0 = arith.constant 0 : index
    %c0_0 = arith.constant 0 : index
    %c0_1 = arith.constant 0 : index
    %0 = vector.load %arg2[%c0, %c0_0, %c0_1] : memref<1x16x8xbf16, #tpu.memory_space<vmem>>, vector<1x16x8xbf16>
    %1 = vector.shape_cast %0 : vector<1x16x8xbf16> to vector<16x8xbf16>
    %c0_2 = arith.constant 0 : index
    %c0_3 = arith.constant 0 : index
    %c0_4 = arith.constant 0 : index
    %2 = vector.load %arg3[%c0_2, %c0_3, %c0_4] : memref<1x8x2048xbf16, #tpu.memory_space<vmem>>, vector<1x8x2048xbf16>
    %3 = vector.shape_cast %2 : vector<1x8x2048xbf16> to vector<8x2048xbf16>
    %cst = arith.constant dense<0.000000e+00> : vector<16x2048xf32>
    %4 = tpu.matmul %1, %3, %cst {dimension_numbers = #tpu.dot_dimension_numbers<[1], [0], [0], [1], [0, 0, 1, 1], [], []>} : vector<16x8xbf16>, vector<8x2048xbf16>, vector<16x2048xf32> -> vector<16x2048xf32>
    %c0_5 = arith.constant 0 : index
    %c0_6 = arith.constant 0 : index
    %c0_7 = arith.constant 0 : index
    %5 = vector.load %arg4[%c0_5, %c0_6, %c0_7] : memref<1x16x2048xf32, #tpu.memory_space<vmem>>, vector<1x16x2048xf32>
    %6 = vector.shape_cast %5 : vector<1x16x2048xf32> to vector<16x2048xf32>
    %7 = vector.shape_cast %4 : vector<16x2048xf32> to vector<1x16x2048xf32>
    tpu.vector_store %arg4[%c0_5, %c0_6, %c0_7], %7 {strides = array<i32>} : memref<1x16x2048xf32, #tpu.memory_space<vmem>>, vector<1x16x2048xf32>,
    return
  }
  func.func @transform_0(%arg0: i32, %arg1: i32) -> (i32, i32, i32) {
    %c0_i32 = arith.constant 0 : i32
    %c0_i32_0 = arith.constant 0 : i32
    return %arg0, %arg1, %c0_i32 : i32, i32, i32
  }
  func.func @transform_1(%arg0: i32, %arg1: i32) -> (i32, i32, i32) {
    %c0_i32 = arith.constant 0 : i32
    %c0_i32_0 = arith.constant 0 : i32
    %c0_i32_1 = arith.constant 0 : i32
    return %arg0, %c0_i32, %c0_i32_0 : i32, i32, i32
  }
  func.func @transform_2(%arg0: i32, %arg1: i32) -> (i32, i32, i32) {
    %c0_i32 = arith.constant 0 : i32
    %c0_i32_0 = arith.constant 0 : i32
    return %arg0, %arg1, %c0_i32 : i32, i32, i32
  }
}

module attributes {stable_mosaic.version = 11 : i64} {
  func.func @_bn_relu_kernel(%arg0: i32, %arg1: memref<256x128xf32, #tpu.memory_space<vmem>>, %arg2: memref<1x128xf32, #tpu.memory_space<vmem>>, %arg3: memref<1x128xf32, #tpu.memory_space<vmem>>, %arg4: memref<256x128xbf16, #tpu.memory_space<vmem>>) attributes {dimension_semantics = [#tpu.dimension_semantics<parallel>], iteration_bounds = array<i64: 1>, scalar_prefetch = 0 : i64, scratch_operands = 0 : i64, tpu.core_type = #tpu.core_type<tc>, window_params = [{transform_indices = @transform_0, window_bounds = array<i64: 256, 128>}, {pipeline_mode = #tpu.pipeline_mode<synchronous>, transform_indices = @transform_1, window_bounds = array<i64: 1, 128>}, {pipeline_mode = #tpu.pipeline_mode<synchronous>, transform_indices = @transform_2, window_bounds = array<i64: 1, 128>}, {transform_indices = @transform_3, window_bounds = array<i64: 256, 128>}]} {
    %c0 = arith.constant 0 : index
    %c0_0 = arith.constant 0 : index
    %0 = vector.load %arg1[%c0, %c0_0] : memref<256x128xf32, #tpu.memory_space<vmem>>, vector<256x128xf32>
    %c0_1 = arith.constant 0 : index
    %c0_2 = arith.constant 0 : index
    %1 = vector.load %arg2[%c0_1, %c0_2] : memref<1x128xf32, #tpu.memory_space<vmem>>, vector<1x128xf32>
    %2 = vector.broadcast %1 : vector<1x128xf32> to vector<256x128xf32>
    %3 = arith.mulf %0, %2 : vector<256x128xf32>
    %c0_3 = arith.constant 0 : index
    %c0_4 = arith.constant 0 : index
    %4 = vector.load %arg3[%c0_3, %c0_4] : memref<1x128xf32, #tpu.memory_space<vmem>>, vector<1x128xf32>
    %5 = vector.broadcast %4 : vector<1x128xf32> to vector<256x128xf32>
    %6 = arith.addf %3, %5 : vector<256x128xf32>
    %cst = arith.constant 0.000000e+00 : f32
    %7 = vector.broadcast %cst : f32 to vector<256x128xf32>
    %8 = arith.maximumf %6, %7 : vector<256x128xf32>
    %9 = arith.truncf %8 : vector<256x128xf32> to vector<256x128xbf16>
    %c0_5 = arith.constant 0 : index
    %c0_6 = arith.constant 0 : index
    %10 = vector.load %arg4[%c0_5, %c0_6] : memref<256x128xbf16, #tpu.memory_space<vmem>>, vector<256x128xbf16>
    tpu.vector_store %arg4[%c0_5, %c0_6], %9 {strides = array<i32>} : memref<256x128xbf16, #tpu.memory_space<vmem>>, vector<256x128xbf16>,
    return
  }
  func.func @transform_0(%arg0: i32) -> (i32, i32) {
    %c0_i32 = arith.constant 0 : i32
    %c0_i32_0 = arith.constant 0 : i32
    return %arg0, %c0_i32 : i32, i32
  }
  func.func @transform_1(%arg0: i32) -> (i32, i32) {
    %c0_i32 = arith.constant 0 : i32
    %c0_i32_0 = arith.constant 0 : i32
    %c0_i32_1 = arith.constant 0 : i32
    return %c0_i32, %c0_i32_0 : i32, i32
  }
  func.func @transform_2(%arg0: i32) -> (i32, i32) {
    %c0_i32 = arith.constant 0 : i32
    %c0_i32_0 = arith.constant 0 : i32
    %c0_i32_1 = arith.constant 0 : i32
    return %c0_i32, %c0_i32_0 : i32, i32
  }
  func.func @transform_3(%arg0: i32) -> (i32, i32) {
    %c0_i32 = arith.constant 0 : i32
    %c0_i32_0 = arith.constant 0 : i32
    return %arg0, %c0_i32 : i32, i32
  }
}

module attributes {stable_mosaic.version = 11 : i64} {
  func.func @_matmul_kernel(%arg0: i32, %arg1: i32, %arg2: memref<1x32x256xbf16, #tpu.memory_space<vmem>>, %arg3: memref<1x256x128xbf16, #tpu.memory_space<vmem>>, %arg4: memref<1x32x128xf32, #tpu.memory_space<vmem>>) attributes {dimension_semantics = [#tpu.dimension_semantics<parallel>, #tpu.dimension_semantics<parallel>], iteration_bounds = array<i64: 4, 1>, scalar_prefetch = 0 : i64, scratch_operands = 0 : i64, tpu.core_type = #tpu.core_type<tc>, window_params = [{transform_indices = @transform_0, window_bounds = array<i64: 1, 32, 256>}, {transform_indices = @transform_1, window_bounds = array<i64: 1, 256, 128>}, {transform_indices = @transform_2, window_bounds = array<i64: 1, 32, 128>}]} {
    %c0 = arith.constant 0 : index
    %c0_0 = arith.constant 0 : index
    %c0_1 = arith.constant 0 : index
    %0 = vector.load %arg2[%c0, %c0_0, %c0_1] : memref<1x32x256xbf16, #tpu.memory_space<vmem>>, vector<1x32x256xbf16>
    %1 = vector.shape_cast %0 : vector<1x32x256xbf16> to vector<32x256xbf16>
    %c0_2 = arith.constant 0 : index
    %c0_3 = arith.constant 0 : index
    %c0_4 = arith.constant 0 : index
    %2 = vector.load %arg3[%c0_2, %c0_3, %c0_4] : memref<1x256x128xbf16, #tpu.memory_space<vmem>>, vector<1x256x128xbf16>
    %3 = vector.shape_cast %2 : vector<1x256x128xbf16> to vector<256x128xbf16>
    %cst = arith.constant dense<0.000000e+00> : vector<32x128xf32>
    %4 = tpu.matmul %1, %3, %cst {dimension_numbers = #tpu.dot_dimension_numbers<[1], [0], [0], [1], [0, 0, 1, 1], [], []>} : vector<32x256xbf16>, vector<256x128xbf16>, vector<32x128xf32> -> vector<32x128xf32>
    %c0_5 = arith.constant 0 : index
    %c0_6 = arith.constant 0 : index
    %c0_7 = arith.constant 0 : index
    %5 = vector.load %arg4[%c0_5, %c0_6, %c0_7] : memref<1x32x128xf32, #tpu.memory_space<vmem>>, vector<1x32x128xf32>
    %6 = vector.shape_cast %5 : vector<1x32x128xf32> to vector<32x128xf32>
    %7 = vector.shape_cast %4 : vector<32x128xf32> to vector<1x32x128xf32>
    tpu.vector_store %arg4[%c0_5, %c0_6, %c0_7], %7 {strides = array<i32>} : memref<1x32x128xf32, #tpu.memory_space<vmem>>, vector<1x32x128xf32>,
    return
  }
  func.func @transform_0(%arg0: i32, %arg1: i32) -> (i32, i32, i32) {
    %c0_i32 = arith.constant 0 : i32
    %c0_i32_0 = arith.constant 0 : i32
    return %arg0, %arg1, %c0_i32 : i32, i32, i32
  }
  func.func @transform_1(%arg0: i32, %arg1: i32) -> (i32, i32, i32) {
    %c0_i32 = arith.constant 0 : i32
    %c0_i32_0 = arith.constant 0 : i32
    %c0_i32_1 = arith.constant 0 : i32
    return %arg0, %c0_i32, %c0_i32_0 : i32, i32, i32
  }
  func.func @transform_2(%arg0: i32, %arg1: i32) -> (i32, i32, i32) {
    %c0_i32 = arith.constant 0 : i32
    %c0_i32_0 = arith.constant 0 : i32
    return %arg0, %arg1, %c0_i32 : i32, i32, i32
  }
}

module attributes {stable_mosaic.version = 11 : i64} {
  func.func @_bn_relu_kernel(%arg0: i32, %arg1: memref<128x128xf32, #tpu.memory_space<vmem>>, %arg2: memref<1x128xf32, #tpu.memory_space<vmem>>, %arg3: memref<1x128xf32, #tpu.memory_space<vmem>>, %arg4: memref<128x128xbf16, #tpu.memory_space<vmem>>) attributes {dimension_semantics = [#tpu.dimension_semantics<parallel>], iteration_bounds = array<i64: 1>, scalar_prefetch = 0 : i64, scratch_operands = 0 : i64, tpu.core_type = #tpu.core_type<tc>, window_params = [{transform_indices = @transform_0, window_bounds = array<i64: 128, 128>}, {pipeline_mode = #tpu.pipeline_mode<synchronous>, transform_indices = @transform_1, window_bounds = array<i64: 1, 128>}, {pipeline_mode = #tpu.pipeline_mode<synchronous>, transform_indices = @transform_2, window_bounds = array<i64: 1, 128>}, {transform_indices = @transform_3, window_bounds = array<i64: 128, 128>}]} {
    %c0 = arith.constant 0 : index
    %c0_0 = arith.constant 0 : index
    %0 = vector.load %arg1[%c0, %c0_0] : memref<128x128xf32, #tpu.memory_space<vmem>>, vector<128x128xf32>
    %c0_1 = arith.constant 0 : index
    %c0_2 = arith.constant 0 : index
    %1 = vector.load %arg2[%c0_1, %c0_2] : memref<1x128xf32, #tpu.memory_space<vmem>>, vector<1x128xf32>
    %2 = vector.broadcast %1 : vector<1x128xf32> to vector<128x128xf32>
    %3 = arith.mulf %0, %2 : vector<128x128xf32>
    %c0_3 = arith.constant 0 : index
    %c0_4 = arith.constant 0 : index
    %4 = vector.load %arg3[%c0_3, %c0_4] : memref<1x128xf32, #tpu.memory_space<vmem>>, vector<1x128xf32>
    %5 = vector.broadcast %4 : vector<1x128xf32> to vector<128x128xf32>
    %6 = arith.addf %3, %5 : vector<128x128xf32>
    %cst = arith.constant 0.000000e+00 : f32
    %7 = vector.broadcast %cst : f32 to vector<128x128xf32>
    %8 = arith.maximumf %6, %7 : vector<128x128xf32>
    %9 = arith.truncf %8 : vector<128x128xf32> to vector<128x128xbf16>
    %c0_5 = arith.constant 0 : index
    %c0_6 = arith.constant 0 : index
    %10 = vector.load %arg4[%c0_5, %c0_6] : memref<128x128xbf16, #tpu.memory_space<vmem>>, vector<128x128xbf16>
    tpu.vector_store %arg4[%c0_5, %c0_6], %9 {strides = array<i32>} : memref<128x128xbf16, #tpu.memory_space<vmem>>, vector<128x128xbf16>,
    return
  }
  func.func @transform_0(%arg0: i32) -> (i32, i32) {
    %c0_i32 = arith.constant 0 : i32
    %c0_i32_0 = arith.constant 0 : i32
    return %arg0, %c0_i32 : i32, i32
  }
  func.func @transform_1(%arg0: i32) -> (i32, i32) {
    %c0_i32 = arith.constant 0 : i32
    %c0_i32_0 = arith.constant 0 : i32
    %c0_i32_1 = arith.constant 0 : i32
    return %c0_i32, %c0_i32_0 : i32, i32
  }
  func.func @transform_2(%arg0: i32) -> (i32, i32) {
    %c0_i32 = arith.constant 0 : i32
    %c0_i32_0 = arith.constant 0 : i32
    %c0_i32_1 = arith.constant 0 : i32
    return %c0_i32, %c0_i32_0 : i32, i32
  }
  func.func @transform_3(%arg0: i32) -> (i32, i32) {
    %c0_i32 = arith.constant 0 : i32
    %c0_i32_0 = arith.constant 0 : i32
    return %arg0, %c0_i32 : i32, i32
  }
}

module attributes {stable_mosaic.version = 11 : i64} {
  func.func @_matmul_kernel(%arg0: i32, %arg1: i32, %arg2: memref<1x128x128xbf16, #tpu.memory_space<vmem>>, %arg3: memref<1x128x128xbf16, #tpu.memory_space<vmem>>, %arg4: memref<1x128x128xf32, #tpu.memory_space<vmem>>) attributes {dimension_semantics = [#tpu.dimension_semantics<parallel>, #tpu.dimension_semantics<parallel>], iteration_bounds = array<i64: 4, 1>, scalar_prefetch = 0 : i64, scratch_operands = 0 : i64, tpu.core_type = #tpu.core_type<tc>, window_params = [{transform_indices = @transform_0, window_bounds = array<i64: 1, 128, 128>}, {transform_indices = @transform_1, window_bounds = array<i64: 1, 128, 128>}, {transform_indices = @transform_2, window_bounds = array<i64: 1, 128, 128>}]} {
    %c0 = arith.constant 0 : index
    %c0_0 = arith.constant 0 : index
    %c0_1 = arith.constant 0 : index
    %0 = vector.load %arg2[%c0, %c0_0, %c0_1] : memref<1x128x128xbf16, #tpu.memory_space<vmem>>, vector<1x128x128xbf16>
    %1 = vector.shape_cast %0 : vector<1x128x128xbf16> to vector<128x128xbf16>
    %c0_2 = arith.constant 0 : index
    %c0_3 = arith.constant 0 : index
    %c0_4 = arith.constant 0 : index
    %2 = vector.load %arg3[%c0_2, %c0_3, %c0_4] : memref<1x128x128xbf16, #tpu.memory_space<vmem>>, vector<1x128x128xbf16>
    %3 = vector.shape_cast %2 : vector<1x128x128xbf16> to vector<128x128xbf16>
    %cst = arith.constant dense<0.000000e+00> : vector<128x128xf32>
    %4 = tpu.matmul %1, %3, %cst {dimension_numbers = #tpu.dot_dimension_numbers<[1], [0], [0], [1], [0, 0, 1, 1], [], []>} : vector<128x128xbf16>, vector<128x128xbf16>, vector<128x128xf32> -> vector<128x128xf32>
    %c0_5 = arith.constant 0 : index
    %c0_6 = arith.constant 0 : index
    %c0_7 = arith.constant 0 : index
    %5 = vector.load %arg4[%c0_5, %c0_6, %c0_7] : memref<1x128x128xf32, #tpu.memory_space<vmem>>, vector<1x128x128xf32>
    %6 = vector.shape_cast %5 : vector<1x128x128xf32> to vector<128x128xf32>
    %7 = vector.shape_cast %4 : vector<128x128xf32> to vector<1x128x128xf32>
    tpu.vector_store %arg4[%c0_5, %c0_6, %c0_7], %7 {strides = array<i32>} : memref<1x128x128xf32, #tpu.memory_space<vmem>>, vector<1x128x128xf32>,
    return
  }
  func.func @transform_0(%arg0: i32, %arg1: i32) -> (i32, i32, i32) {
    %c0_i32 = arith.constant 0 : i32
    %c0_i32_0 = arith.constant 0 : i32
    return %arg0, %arg1, %c0_i32 : i32, i32, i32
  }
  func.func @transform_1(%arg0: i32, %arg1: i32) -> (i32, i32, i32) {
    %c0_i32 = arith.constant 0 : i32
    %c0_i32_0 = arith.constant 0 : i32
    %c0_i32_1 = arith.constant 0 : i32
    return %arg0, %c0_i32, %c0_i32_0 : i32, i32, i32
  }
  func.func @transform_2(%arg0: i32, %arg1: i32) -> (i32, i32, i32) {
    %c0_i32 = arith.constant 0 : i32
    %c0_i32_0 = arith.constant 0 : i32
    return %arg0, %arg1, %c0_i32 : i32, i32, i32
  }
}

module attributes {stable_mosaic.version = 11 : i64} {
  func.func @_bn_relu_kernel(%arg0: i32, %arg1: memref<512x128xf32, #tpu.memory_space<vmem>>, %arg2: memref<1x128xf32, #tpu.memory_space<vmem>>, %arg3: memref<1x128xf32, #tpu.memory_space<vmem>>, %arg4: memref<512x128xbf16, #tpu.memory_space<vmem>>) attributes {dimension_semantics = [#tpu.dimension_semantics<parallel>], iteration_bounds = array<i64: 1>, scalar_prefetch = 0 : i64, scratch_operands = 0 : i64, tpu.core_type = #tpu.core_type<tc>, window_params = [{transform_indices = @transform_0, window_bounds = array<i64: 512, 128>}, {pipeline_mode = #tpu.pipeline_mode<synchronous>, transform_indices = @transform_1, window_bounds = array<i64: 1, 128>}, {pipeline_mode = #tpu.pipeline_mode<synchronous>, transform_indices = @transform_2, window_bounds = array<i64: 1, 128>}, {transform_indices = @transform_3, window_bounds = array<i64: 512, 128>}]} {
    %c0 = arith.constant 0 : index
    %c0_0 = arith.constant 0 : index
    %0 = vector.load %arg1[%c0, %c0_0] : memref<512x128xf32, #tpu.memory_space<vmem>>, vector<512x128xf32>
    %c0_1 = arith.constant 0 : index
    %c0_2 = arith.constant 0 : index
    %1 = vector.load %arg2[%c0_1, %c0_2] : memref<1x128xf32, #tpu.memory_space<vmem>>, vector<1x128xf32>
    %2 = vector.broadcast %1 : vector<1x128xf32> to vector<512x128xf32>
    %3 = arith.mulf %0, %2 : vector<512x128xf32>
    %c0_3 = arith.constant 0 : index
    %c0_4 = arith.constant 0 : index
    %4 = vector.load %arg3[%c0_3, %c0_4] : memref<1x128xf32, #tpu.memory_space<vmem>>, vector<1x128xf32>
    %5 = vector.broadcast %4 : vector<1x128xf32> to vector<512x128xf32>
    %6 = arith.addf %3, %5 : vector<512x128xf32>
    %cst = arith.constant 0.000000e+00 : f32
    %7 = vector.broadcast %cst : f32 to vector<512x128xf32>
    %8 = arith.maximumf %6, %7 : vector<512x128xf32>
    %9 = arith.truncf %8 : vector<512x128xf32> to vector<512x128xbf16>
    %c0_5 = arith.constant 0 : index
    %c0_6 = arith.constant 0 : index
    %10 = vector.load %arg4[%c0_5, %c0_6] : memref<512x128xbf16, #tpu.memory_space<vmem>>, vector<512x128xbf16>
    tpu.vector_store %arg4[%c0_5, %c0_6], %9 {strides = array<i32>} : memref<512x128xbf16, #tpu.memory_space<vmem>>, vector<512x128xbf16>,
    return
  }
  func.func @transform_0(%arg0: i32) -> (i32, i32) {
    %c0_i32 = arith.constant 0 : i32
    %c0_i32_0 = arith.constant 0 : i32
    return %arg0, %c0_i32 : i32, i32
  }
  func.func @transform_1(%arg0: i32) -> (i32, i32) {
    %c0_i32 = arith.constant 0 : i32
    %c0_i32_0 = arith.constant 0 : i32
    %c0_i32_1 = arith.constant 0 : i32
    return %c0_i32, %c0_i32_0 : i32, i32
  }
  func.func @transform_2(%arg0: i32) -> (i32, i32) {
    %c0_i32 = arith.constant 0 : i32
    %c0_i32_0 = arith.constant 0 : i32
    %c0_i32_1 = arith.constant 0 : i32
    return %c0_i32, %c0_i32_0 : i32, i32
  }
  func.func @transform_3(%arg0: i32) -> (i32, i32) {
    %c0_i32 = arith.constant 0 : i32
    %c0_i32_0 = arith.constant 0 : i32
    return %arg0, %c0_i32 : i32, i32
  }
}

module attributes {stable_mosaic.version = 11 : i64} {
  func.func @_matmul_kernel(%arg0: i32, %arg1: i32, %arg2: memref<1x512x64xbf16, #tpu.memory_space<vmem>>, %arg3: memref<1x64x128xbf16, #tpu.memory_space<vmem>>, %arg4: memref<1x512x128xf32, #tpu.memory_space<vmem>>) attributes {dimension_semantics = [#tpu.dimension_semantics<parallel>, #tpu.dimension_semantics<parallel>], iteration_bounds = array<i64: 4, 1>, scalar_prefetch = 0 : i64, scratch_operands = 0 : i64, tpu.core_type = #tpu.core_type<tc>, window_params = [{transform_indices = @transform_0, window_bounds = array<i64: 1, 512, 64>}, {transform_indices = @transform_1, window_bounds = array<i64: 1, 64, 128>}, {transform_indices = @transform_2, window_bounds = array<i64: 1, 512, 128>}]} {
    %c0 = arith.constant 0 : index
    %c0_0 = arith.constant 0 : index
    %c0_1 = arith.constant 0 : index
    %0 = vector.load %arg2[%c0, %c0_0, %c0_1] : memref<1x512x64xbf16, #tpu.memory_space<vmem>>, vector<1x512x64xbf16>
    %1 = vector.shape_cast %0 : vector<1x512x64xbf16> to vector<512x64xbf16>
    %c0_2 = arith.constant 0 : index
    %c0_3 = arith.constant 0 : index
    %c0_4 = arith.constant 0 : index
    %2 = vector.load %arg3[%c0_2, %c0_3, %c0_4] : memref<1x64x128xbf16, #tpu.memory_space<vmem>>, vector<1x64x128xbf16>
    %3 = vector.shape_cast %2 : vector<1x64x128xbf16> to vector<64x128xbf16>
    %cst = arith.constant dense<0.000000e+00> : vector<512x128xf32>
    %4 = tpu.matmul %1, %3, %cst {dimension_numbers = #tpu.dot_dimension_numbers<[1], [0], [0], [1], [0, 0, 1, 1], [], []>} : vector<512x64xbf16>, vector<64x128xbf16>, vector<512x128xf32> -> vector<512x128xf32>
    %c0_5 = arith.constant 0 : index
    %c0_6 = arith.constant 0 : index
    %c0_7 = arith.constant 0 : index
    %5 = vector.load %arg4[%c0_5, %c0_6, %c0_7] : memref<1x512x128xf32, #tpu.memory_space<vmem>>, vector<1x512x128xf32>
    %6 = vector.shape_cast %5 : vector<1x512x128xf32> to vector<512x128xf32>
    %7 = vector.shape_cast %4 : vector<512x128xf32> to vector<1x512x128xf32>
    tpu.vector_store %arg4[%c0_5, %c0_6, %c0_7], %7 {strides = array<i32>} : memref<1x512x128xf32, #tpu.memory_space<vmem>>, vector<1x512x128xf32>,
    return
  }
  func.func @transform_0(%arg0: i32, %arg1: i32) -> (i32, i32, i32) {
    %c0_i32 = arith.constant 0 : i32
    %c0_i32_0 = arith.constant 0 : i32
    return %arg0, %arg1, %c0_i32 : i32, i32, i32
  }
  func.func @transform_1(%arg0: i32, %arg1: i32) -> (i32, i32, i32) {
    %c0_i32 = arith.constant 0 : i32
    %c0_i32_0 = arith.constant 0 : i32
    %c0_i32_1 = arith.constant 0 : i32
    return %arg0, %c0_i32, %c0_i32_0 : i32, i32, i32
  }
  func.func @transform_2(%arg0: i32, %arg1: i32) -> (i32, i32, i32) {
    %c0_i32 = arith.constant 0 : i32
    %c0_i32_0 = arith.constant 0 : i32
    return %arg0, %arg1, %c0_i32 : i32, i32, i32
  }
}

module attributes {stable_mosaic.version = 11 : i64} {
  func.func @_bn_relu_kernel(%arg0: i32, %arg1: memref<512x128xf32, #tpu.memory_space<vmem>>, %arg2: memref<1x128xf32, #tpu.memory_space<vmem>>, %arg3: memref<1x128xf32, #tpu.memory_space<vmem>>, %arg4: memref<512x128xbf16, #tpu.memory_space<vmem>>) attributes {dimension_semantics = [#tpu.dimension_semantics<parallel>], iteration_bounds = array<i64: 4>, scalar_prefetch = 0 : i64, scratch_operands = 0 : i64, tpu.core_type = #tpu.core_type<tc>, window_params = [{transform_indices = @transform_0, window_bounds = array<i64: 512, 128>}, {pipeline_mode = #tpu.pipeline_mode<synchronous>, transform_indices = @transform_1, window_bounds = array<i64: 1, 128>}, {pipeline_mode = #tpu.pipeline_mode<synchronous>, transform_indices = @transform_2, window_bounds = array<i64: 1, 128>}, {transform_indices = @transform_3, window_bounds = array<i64: 512, 128>}]} {
    %c0 = arith.constant 0 : index
    %c0_0 = arith.constant 0 : index
    %0 = vector.load %arg1[%c0, %c0_0] : memref<512x128xf32, #tpu.memory_space<vmem>>, vector<512x128xf32>
    %c0_1 = arith.constant 0 : index
    %c0_2 = arith.constant 0 : index
    %1 = vector.load %arg2[%c0_1, %c0_2] : memref<1x128xf32, #tpu.memory_space<vmem>>, vector<1x128xf32>
    %2 = vector.broadcast %1 : vector<1x128xf32> to vector<512x128xf32>
    %3 = arith.mulf %0, %2 : vector<512x128xf32>
    %c0_3 = arith.constant 0 : index
    %c0_4 = arith.constant 0 : index
    %4 = vector.load %arg3[%c0_3, %c0_4] : memref<1x128xf32, #tpu.memory_space<vmem>>, vector<1x128xf32>
    %5 = vector.broadcast %4 : vector<1x128xf32> to vector<512x128xf32>
    %6 = arith.addf %3, %5 : vector<512x128xf32>
    %cst = arith.constant 0.000000e+00 : f32
    %7 = vector.broadcast %cst : f32 to vector<512x128xf32>
    %8 = arith.maximumf %6, %7 : vector<512x128xf32>
    %9 = arith.truncf %8 : vector<512x128xf32> to vector<512x128xbf16>
    %c0_5 = arith.constant 0 : index
    %c0_6 = arith.constant 0 : index
    %10 = vector.load %arg4[%c0_5, %c0_6] : memref<512x128xbf16, #tpu.memory_space<vmem>>, vector<512x128xbf16>
    tpu.vector_store %arg4[%c0_5, %c0_6], %9 {strides = array<i32>} : memref<512x128xbf16, #tpu.memory_space<vmem>>, vector<512x128xbf16>,
    return
  }
  func.func @transform_0(%arg0: i32) -> (i32, i32) {
    %c0_i32 = arith.constant 0 : i32
    %c0_i32_0 = arith.constant 0 : i32
    return %arg0, %c0_i32 : i32, i32
  }
  func.func @transform_1(%arg0: i32) -> (i32, i32) {
    %c0_i32 = arith.constant 0 : i32
    %c0_i32_0 = arith.constant 0 : i32
    %c0_i32_1 = arith.constant 0 : i32
    return %c0_i32, %c0_i32_0 : i32, i32
  }
  func.func @transform_2(%arg0: i32) -> (i32, i32) {
    %c0_i32 = arith.constant 0 : i32
    %c0_i32_0 = arith.constant 0 : i32
    %c0_i32_1 = arith.constant 0 : i32
    return %c0_i32, %c0_i32_0 : i32, i32
  }
  func.func @transform_3(%arg0: i32) -> (i32, i32) {
    %c0_i32 = arith.constant 0 : i32
    %c0_i32_0 = arith.constant 0 : i32
    return %arg0, %c0_i32 : i32, i32
  }
}

module attributes {stable_mosaic.version = 11 : i64} {
  func.func @_matmul_tanh_kernel(%arg0: i32, %arg1: i32, %arg2: memref<1x512x32xbf16, #tpu.memory_space<vmem>>, %arg3: memref<1x32x128xbf16, #tpu.memory_space<vmem>>, %arg4: memref<1x512x128xf32, #tpu.memory_space<vmem>>) attributes {dimension_semantics = [#tpu.dimension_semantics<parallel>, #tpu.dimension_semantics<parallel>], iteration_bounds = array<i64: 4, 4>, scalar_prefetch = 0 : i64, scratch_operands = 0 : i64, tpu.core_type = #tpu.core_type<tc>, window_params = [{transform_indices = @transform_0, window_bounds = array<i64: 1, 512, 32>}, {transform_indices = @transform_1, window_bounds = array<i64: 1, 32, 128>}, {transform_indices = @transform_2, window_bounds = array<i64: 1, 512, 128>}]} {
    %c0 = arith.constant 0 : index
    %c0_0 = arith.constant 0 : index
    %c0_1 = arith.constant 0 : index
    %0 = vector.load %arg2[%c0, %c0_0, %c0_1] : memref<1x512x32xbf16, #tpu.memory_space<vmem>>, vector<1x512x32xbf16>
    %1 = vector.shape_cast %0 : vector<1x512x32xbf16> to vector<512x32xbf16>
    %c0_2 = arith.constant 0 : index
    %c0_3 = arith.constant 0 : index
    %c0_4 = arith.constant 0 : index
    %2 = vector.load %arg3[%c0_2, %c0_3, %c0_4] : memref<1x32x128xbf16, #tpu.memory_space<vmem>>, vector<1x32x128xbf16>
    %3 = vector.shape_cast %2 : vector<1x32x128xbf16> to vector<32x128xbf16>
    %cst = arith.constant dense<0.000000e+00> : vector<512x128xf32>
    %4 = tpu.matmul %1, %3, %cst {dimension_numbers = #tpu.dot_dimension_numbers<[1], [0], [0], [1], [0, 0, 1, 1], [], []>} : vector<512x32xbf16>, vector<32x128xbf16>, vector<512x128xf32> -> vector<512x128xf32>
    %5 = math.tanh %4 : vector<512x128xf32>
    %c0_5 = arith.constant 0 : index
    %c0_6 = arith.constant 0 : index
    %c0_7 = arith.constant 0 : index
    %6 = vector.load %arg4[%c0_5, %c0_6, %c0_7] : memref<1x512x128xf32, #tpu.memory_space<vmem>>, vector<1x512x128xf32>
    %7 = vector.shape_cast %6 : vector<1x512x128xf32> to vector<512x128xf32>
    %8 = vector.shape_cast %5 : vector<512x128xf32> to vector<1x512x128xf32>
    tpu.vector_store %arg4[%c0_5, %c0_6, %c0_7], %8 {strides = array<i32>} : memref<1x512x128xf32, #tpu.memory_space<vmem>>, vector<1x512x128xf32>,
    return
  }
  func.func @transform_0(%arg0: i32, %arg1: i32) -> (i32, i32, i32) {
    %c0_i32 = arith.constant 0 : i32
    %c0_i32_0 = arith.constant 0 : i32
    return %arg0, %arg1, %c0_i32 : i32, i32, i32
  }
  func.func @transform_1(%arg0: i32, %arg1: i32) -> (i32, i32, i32) {
    %c0_i32 = arith.constant 0 : i32
    %c0_i32_0 = arith.constant 0 : i32
    %c0_i32_1 = arith.constant 0 : i32
    return %arg0, %c0_i32, %c0_i32_0 : i32, i32, i32
  }
  func.func @transform_2(%arg0: i32, %arg1: i32) -> (i32, i32, i32) {
    %c0_i32 = arith.constant 0 : i32
    %c0_i32_0 = arith.constant 0 : i32
    return %arg0, %arg1, %c0_i32 : i32, i32, i32
  }
}

</mosaic_0001>

<llo_original>
// kernel: netg_celeba_forward.9
$region0: #{netg_celeba_forward.9}
  #allocation0 [shape = 'u32[]', space=smem, size = 0x4, offset = 0x4, fixed_abs, tag = 'smem constant byte address 0x4 - core index']
  #allocation1 [shape = 'u32[144,128]{1,0:T(1,128)}', space=vmem, size = 0x12000, scoped, tag = 'internal scratch']
  %s0 = inlined_call_operand.vmem [shape: bf16[1,16,8], index: 0, kind: input, shape index: {}]
  %s1 = inlined_call_operand.vmem [shape: bf16[1,8,2048], index: 1, kind: input, shape index: {}]
  %s2 = inlined_call_operand.vmem [shape: f32[1,16,2048], index: 2, kind: output, shape index: {}]
  %s3 = sld [smem:[#allocation0]]
  $region18: #{netg_celeba_forward.9} parent=0
    _
  %s5 = ssub.s32 1, %s3
  %s6 = scalar_select 0, %s5, %s3
  // Predicated region
  $region2: #{netg_celeba_forward.9} parent=0 // pred_check
    _
  $region3: #{netg_celeba_forward.9} parent=0 // pred_check_branch
    %8 = sbr.rel (0) target = $region5
  $region4: #{netg_celeba_forward.9} parent=0 // pred_region
    _
  $region5: #{netg_celeba_forward.9} parent=0 // pred_fallthru
    _
  // Predicated region
  $region6: #{netg_celeba_forward.9} parent=0 // pred_check
    _
  $region7: #{netg_celeba_forward.9} parent=0 // pred_check_branch
    %10 = sbr.rel (0) target = $region9
  $region8: #{netg_celeba_forward.9} parent=0 // pred_region
    _
  $region9: #{netg_celeba_forward.9} parent=0 // pred_fallthru
    _
  %v12 = vld [vmem:[%s0] sm:$0xf]
  %v13 = vld [vmem:[%s0 + $0x4] sm:$0xf]
  %v14 = vld [vmem:[%s1] sm:$0xff]
  %v15 = vld [vmem:[%s1 + $0x8] sm:$0xff]
  %v16 = vld [vmem:[%s1 + $0x10] sm:$0xff]
  %v17 = vld [vmem:[%s1 + $0x18] sm:$0xff]
  %v18 = vld [vmem:[%s1 + $0x20] sm:$0xff]
  %v19 = vld [vmem:[%s1 + $0x28] sm:$0xff]
  %v20 = vld [vmem:[%s1 + $0x30] sm:$0xff]
  %v21 = vld [vmem:[%s1 + $0x38] sm:$0xff]
  %v24 = vunpack.c.l.b16 %v12
  %v25 = vunpack.c.l.b16 %v13
  %v26 = vpack.c.b16 %v25, %v24
  %v35 = vunpack.c.l.b16 %v14
  %v36 = vunpack.c.h.b16 %v14
  %v37 = vunpack.c.l.b16 %v15
  %v38 = vunpack.c.h.b16 %v15
  %v39 = vunpack.c.l.b16 %v16
  %v40 = vunpack.c.h.b16 %v16
  %v41 = vunpack.c.l.b16 %v17
  %v42 = vunpack.c.h.b16 %v17
  %v43 = vunpack.c.l.b16 %v18
  %v44 = vunpack.c.h.b16 %v18
  %v45 = vunpack.c.l.b16 %v19
  %v46 = vunpack.c.h.b16 %v19
  %v47 = vunpack.c.l.b16 %v20
  %v48 = vunpack.c.h.b16 %v20
  %v49 = vunpack.c.l.b16 %v21
  %v50 = vunpack.c.h.b16 %v21
  %v51 = vpack.c.b16 %v35, %v35
  %v52 = vpack.c.b16 %v36, %v36
  %v53 = vpack.c.b16 %v37, %v37
  %v54 = vpack.c.b16 %v38, %v38
  %v55 = vpack.c.b16 %v39, %v39
  %v56 = vpack.c.b16 %v40, %v40
  %v57 = vpack.c.b16 %v41, %v41
  %v58 = vpack.c.b16 %v42, %v42
  %v59 = vpack.c.b16 %v43, %v43
  %v60 = vpack.c.b16 %v44, %v44
  %v61 = vpack.c.b16 %v45, %v45
  %v62 = vpack.c.b16 %v46, %v46
  %v63 = vpack.c.b16 %v47, %v47
  %v64 = vpack.c.b16 %v48, %v48
  %v65 = vpack.c.b16 %v49, %v49
  %v66 = vpack.c.b16 %v50, %v50
  %vm67 = vcmask 64512
  %v69 = vsel %vm67, %v26, 0
  %vm71 = vcmask 1043456
  %v73 = vsel %vm71, %v51, 0
  %v76 = vsel %vm71, %v52, 0
  %v79 = vsel %vm71, %v53, 0
  %v82 = vsel %vm71, %v54, 0
  %v85 = vsel %vm71, %v55, 0
  %v88 = vsel %vm71, %v56, 0
  %v91 = vsel %vm71, %v57, 0
  %v94 = vsel %vm71, %v58, 0
  %v97 = vsel %vm71, %v59, 0
  %v100 = vsel %vm71, %v60, 0
  %v103 = vsel %vm71, %v61, 0
  %v106 = vsel %vm71, %v62, 0
  %v109 = vsel %vm71, %v63, 0
  %v112 = vsel %vm71, %v64, 0
  %v115 = vsel %vm71, %v65, 0
  %v118 = vsel %vm71, %v66, 0
  %120 = vmatprep.subr.bf16.mxu0 %v76
  %121 = vmatpush1.bf16.msra.mxu0 %v73
  %122 = vmatprep.subr.bf16.mxu0 0
  %123 = vmatpush1.bf16.msra.mxu0 0
  %124 = vmatprep.subr.bf16.mxu0 0
  %125 = vmatpush1.bf16.msra.mxu0 0
  %126 = vmatprep.subr.bf16.mxu0 0
  %127 = vmatpush1.bf16.msra.mxu0 0
  %128 = vmatprep.subr.bf16.mxu0 0
  %129 = vmatpush1.bf16.msra.mxu0 0
  %130 = vmatprep.subr.bf16.mxu0 0
  %131 = vmatpush1.bf16.msra.mxu0 0
  %132 = vmatprep.subr.bf16.mxu0 0
  %133 = vmatpush1.bf16.msra.mxu0 0
  %134 = vmatprep.subr.bf16.mxu0 0
  %135 = vmatpush1.bf16.msra.mxu0 0
  %136 = vmatprep.subr.bf16.mxu0 0
  %137 = vmatpush1.bf16.msra.mxu0 0
  %138 = vmatprep.subr.bf16.mxu0 0
  %139 = vmatpush1.bf16.msra.mxu0 0
  %140 = vmatprep.subr.bf16.mxu0 0
  %141 = vmatpush1.bf16.msra.mxu0 0
  %142 = vmatprep.subr.bf16.mxu0 0
  %143 = vmatpush1.bf16.msra.mxu0 0
  %144 = vmatprep.subr.bf16.mxu0 0
  %145 = vmatpush1.bf16.msra.mxu0 0
  %146 = vmatprep.subr.bf16.mxu0 0
  %147 = vmatpush1.bf16.msra.mxu0 0
  %148 = vmatprep.subr.bf16.mxu0 0
  %149 = vmatpush1.bf16.msra.mxu0 0
  %150 = vmatprep.subr.bf16.mxu0 0
  %151 = vmatpush1.bf16.msra.mxu0 0
  %152 = vmatprep.mubr.bf16.mxu0 0
  %153 = vmatmul.mubr.bf16.gmra.mrb[0].mxu0 %v69
  %v154 = vpop.f32.mrb[0].mxu0
  %v155 = vadd.f32 0.0, %v154
  %v156 = vpop.f32.mrb[0].mxu0
  %v157 = vadd.f32 0.0, %v156
  %v158 = vpop.f32.mrb[0].mxu0
  %v159 = vadd.f32 0.0, %v158
  %v160 = vpop.f32.mrb[0].mxu0
  %v161 = vadd.f32 0.0, %v160
  %162 = vdwg.mxu0
  %163 = vmatprep.subr.bf16.mxu0 %v82
  %164 = vmatpush1.bf16.msra.mxu0 %v79
  %165 = vmatprep.subr.bf16.mxu0 0
  %166 = vmatpush1.bf16.msra.mxu0 0
  %167 = vmatprep.subr.bf16.mxu0 0
  %168 = vmatpush1.bf16.msra.mxu0 0
  %169 = vmatprep.subr.bf16.mxu0 0
  %170 = vmatpush1.bf16.msra.mxu0 0
  %171 = vmatprep.subr.bf16.mxu0 0
  %172 = vmatpush1.bf16.msra.mxu0 0
  %173 = vmatprep.subr.bf16.mxu0 0
  %174 = vmatpush1.bf16.msra.mxu0 0
  %175 = vmatprep.subr.bf16.mxu0 0
  %176 = vmatpush1.bf16.msra.mxu0 0
  %177 = vmatprep.subr.bf16.mxu0 0
  %178 = vmatpush1.bf16.msra.mxu0 0
  %179 = vmatprep.subr.bf16.mxu0 0
  %180 = vmatpush1.bf16.msra.mxu0 0
  %181 = vmatprep.subr.bf16.mxu0 0
  %182 = vmatpush1.bf16.msra.mxu0 0
  %183 = vmatprep.subr.bf16.mxu0 0
  %184 = vmatpush1.bf16.msra.mxu0 0
  %185 = vmatprep.subr.bf16.mxu0 0
  %186 = vmatpush1.bf16.msra.mxu0 0
  %187 = vmatprep.subr.bf16.mxu0 0
  %188 = vmatpush1.bf16.msra.mxu0 0
  %189 = vmatprep.subr.bf16.mxu0 0
  %190 = vmatpush1.bf16.msra.mxu0 0
  %191 = vmatprep.subr.bf16.mxu0 0
  %192 = vmatpush1.bf16.msra.mxu0 0
  %193 = vmatprep.subr.bf16.mxu0 0
  %194 = vmatpush1.bf16.msra.mxu0 0
  %195 = vmatprep.mubr.bf16.mxu0 0
  %196 = vmatmul.mubr.bf16.gmra.mrb[0].mxu0 %v69
  %v197 = vpop.f32.mrb[0].mxu0
  %v198 = vadd.f32 0.0, %v197
  %v199 = vpop.f32.mrb[0].mxu0
  %v200 = vadd.f32 0.0, %v199
  %v201 = vpop.f32.mrb[0].mxu0
  %v202 = vadd.f32 0.0, %v201
  %v203 = vpop.f32.mrb[0].mxu0
  %v204 = vadd.f32 0.0, %v203
  %205 = vdwg.mxu0
  %206 = vmatprep.subr.bf16.mxu0 %v88
  %207 = vmatpush1.bf16.msra.mxu0 %v85
  %208 = vmatprep.subr.bf16.mxu0 0
  %209 = vmatpush1.bf16.msra.mxu0 0
  %210 = vmatprep.subr.bf16.mxu0 0
  %211 = vmatpush1.bf16.msra.mxu0 0
  %212 = vmatprep.subr.bf16.mxu0 0
  %213 = vmatpush1.bf16.msra.mxu0 0
  %214 = vmatprep.subr.bf16.mxu0 0
  %215 = vmatpush1.bf16.msra.mxu0 0
  %216 = vmatprep.subr.bf16.mxu0 0
  %217 = vmatpush1.bf16.msra.mxu0 0
  %218 = vmatprep.subr.bf16.mxu0 0
  %219 = vmatpush1.bf16.msra.mxu0 0
  %220 = vmatprep.subr.bf16.mxu0 0
  %221 = vmatpush1.bf16.msra.mxu0 0
  %222 = vmatprep.subr.bf16.mxu0 0
  %223 = vmatpush1.bf16.msra.mxu0 0
  %224 = vmatprep.subr.bf16.mxu0 0
  %225 = vmatpush1.bf16.msra.mxu0 0
  %226 = vmatprep.subr.bf16.mxu0 0
  %227 = vmatpush1.bf16.msra.mxu0 0
  %228 = vmatprep.subr.bf16.mxu0 0
  %229 = vmatpush1.bf16.msra.mxu0 0
  %230 = vmatprep.subr.bf16.mxu0 0
  %231 = vmatpush1.bf16.msra.mxu0 0
  %232 = vmatprep.subr.bf16.mxu0 0
  %233 = vmatpush1.bf16.msra.mxu0 0
  %234 = vmatprep.subr.bf16.mxu0 0
  %235 = vmatpush1.bf16.msra.mxu0 0
  %236 = vmatprep.subr.bf16.mxu0 0
  %237 = vmatpush1.bf16.msra.mxu0 0
  %238 = vmatprep.mubr.bf16.mxu0 0
  %239 = vmatmul.mubr.bf16.gmra.mrb[0].mxu0 %v69
  %v240 = vpop.f32.mrb[0].mxu0
  %v241 = vadd.f32 0.0, %v240
  %v242 = vpop.f32.mrb[0].mxu0
  %v243 = vadd.f32 0.0, %v242
  %v244 = vpop.f32.mrb[0].mxu0
  %v245 = vadd.f32 0.0, %v244
  %v246 = vpop.f32.mrb[0].mxu0
  %v247 = vadd.f32 0.0, %v246
  %248 = vdwg.mxu0
  %249 = vmatprep.subr.bf16.mxu0 %v94
  %250 = vmatpush1.bf16.msra.mxu0 %v91
  %251 = vmatprep.subr.bf16.mxu0 0
  %252 = vmatpush1.bf16.msra.mxu0 0
  %253 = vmatprep.subr.bf16.mxu0 0
  %254 = vmatpush1.bf16.msra.mxu0 0
  %255 = vmatprep.subr.bf16.mxu0 0
  %256 = vmatpush1.bf16.msra.mxu0 0
  %257 = vmatprep.subr.bf16.mxu0 0
  %258 = vmatpush1.bf16.msra.mxu0 0
  %259 = vmatprep.subr.bf16.mxu0 0
  %260 = vmatpush1.bf16.msra.mxu0 0
  %261 = vmatprep.subr.bf16.mxu0 0
  %262 = vmatpush1.bf16.msra.mxu0 0
  %263 = vmatprep.subr.bf16.mxu0 0
  %264 = vmatpush1.bf16.msra.mxu0 0
  %265 = vmatprep.subr.bf16.mxu0 0
  %266 = vmatpush1.bf16.msra.mxu0 0
  %267 = vmatprep.subr.bf16.mxu0 0
  %268 = vmatpush1.bf16.msra.mxu0 0
  %269 = vmatprep.subr.bf16.mxu0 0
  %270 = vmatpush1.bf16.msra.mxu0 0
  %271 = vmatprep.subr.bf16.mxu0 0
  %272 = vmatpush1.bf16.msra.mxu0 0
  %273 = vmatprep.subr.bf16.mxu0 0
  %274 = vmatpush1.bf16.msra.mxu0 0
  %275 = vmatprep.subr.bf16.mxu0 0
  %276 = vmatpush1.bf16.msra.mxu0 0
  %277 = vmatprep.subr.bf16.mxu0 0
  %278 = vmatpush1.bf16.msra.mxu0 0
  %279 = vmatprep.subr.bf16.mxu0 0
  %280 = vmatpush1.bf16.msra.mxu0 0
  %281 = vmatprep.mubr.bf16.mxu0 0
  %282 = vmatmul.mubr.bf16.gmra.mrb[0].mxu0 %v69
  %v283 = vpop.f32.mrb[0].mxu0
  %v284 = vadd.f32 0.0, %v283
  %v285 = vpop.f32.mrb[0].mxu0
  %v286 = vadd.f32 0.0, %v285
  %v287 = vpop.f32.mrb[0].mxu0
  %v288 = vadd.f32 0.0, %v287
  %v289 = vpop.f32.mrb[0].mxu0
  %v290 = vadd.f32 0.0, %v289
  %291 = vdwg.mxu0
  %292 = vmatprep.subr.bf16.mxu0 %v100
  %293 = vmatpush1.bf16.msra.mxu0 %v97
  %294 = vmatprep.subr.bf16.mxu0 0
  %295 = vmatpush1.bf16.msra.mxu0 0
  %296 = vmatprep.subr.bf16.mxu0 0
  %297 = vmatpush1.bf16.msra.mxu0 0
  %298 = vmatprep.subr.bf16.mxu0 0
  %299 = vmatpush1.bf16.msra.mxu0 0
  %300 = vmatprep.subr.bf16.mxu0 0
  %301 = vmatpush1.bf16.msra.mxu0 0
  %302 = vmatprep.subr.bf16.mxu0 0
  %303 = vmatpush1.bf16.msra.mxu0 0
  %304 = vmatprep.subr.bf16.mxu0 0
  %305 = vmatpush1.bf16.msra.mxu0 0
  %306 = vmatprep.subr.bf16.mxu0 0
  %307 = vmatpush1.bf16.msra.mxu0 0
  %308 = vmatprep.subr.bf16.mxu0 0
  %309 = vmatpush1.bf16.msra.mxu0 0
  %310 = vmatprep.subr.bf16.mxu0 0
  %311 = vmatpush1.bf16.msra.mxu0 0
  %312 = vmatprep.subr.bf16.mxu0 0
  %313 = vmatpush1.bf16.msra.mxu0 0
  %314 = vmatprep.subr.bf16.mxu0 0
  %315 = vmatpush1.bf16.msra.mxu0 0
  %316 = vmatprep.subr.bf16.mxu0 0
  %317 = vmatpush1.bf16.msra.mxu0 0
  %318 = vmatprep.subr.bf16.mxu0 0
  %319 = vmatpush1.bf16.msra.mxu0 0
  %320 = vmatprep.subr.bf16.mxu0 0
  %321 = vmatpush1.bf16.msra.mxu0 0
  %322 = vmatprep.subr.bf16.mxu0 0
  %323 = vmatpush1.bf16.msra.mxu0 0
  %324 = vmatprep.mubr.bf16.mxu0 0
  %325 = vmatmul.mubr.bf16.gmra.mrb[0].mxu0 %v69
  %v326 = vpop.f32.mrb[0].mxu0
  %v327 = vadd.f32 0.0, %v326
  %v328 = vpop.f32.mrb[0].mxu0
  %v329 = vadd.f32 0.0, %v328
  %v330 = vpop.f32.mrb[0].mxu0
  %v331 = vadd.f32 0.0, %v330
  %v332 = vpop.f32.mrb[0].mxu0
  %v333 = vadd.f32 0.0, %v332
  %334 = vdwg.mxu0
  %335 = vmatprep.subr.bf16.mxu0 %v106
  %336 = vmatpush1.bf16.msra.mxu0 %v103
  %337 = vmatprep.subr.bf16.mxu0 0
  %338 = vmatpush1.bf16.msra.mxu0 0
  %339 = vmatprep.subr.bf16.mxu0 0
  %340 = vmatpush1.bf16.msra.mxu0 0
  %341 = vmatprep.subr.bf16.mxu0 0
  %342 = vmatpush1.bf16.msra.mxu0 0
  %343 = vmatprep.subr.bf16.mxu0 0
  %344 = vmatpush1.bf16.msra.mxu0 0
  %345 = vmatprep.subr.bf16.mxu0 0
  %346 = vmatpush1.bf16.msra.mxu0 0
  %347 = vmatprep.subr.bf16.mxu0 0
  %348 = vmatpush1.bf16.msra.mxu0 0
  %349 = vmatprep.subr.bf16.mxu0 0
  %350 = vmatpush1.bf16.msra.mxu0 0
  %351 = vmatprep.subr.bf16.mxu0 0
  %352 = vmatpush1.bf16.msra.mxu0 0
  %353 = vmatprep.subr.bf16.mxu0 0
  %354 = vmatpush1.bf16.msra.mxu0 0
  %355 = vmatprep.subr.bf16.mxu0 0
  %356 = vmatpush1.bf16.msra.mxu0 0
  %357 = vmatprep.subr.bf16.mxu0 0
  %358 = vmatpush1.bf16.msra.mxu0 0
  %359 = vmatprep.subr.bf16.mxu0 0
  %360 = vmatpush1.bf16.msra.mxu0 0
  %361 = vmatprep.subr.bf16.mxu0 0
  %362 = vmatpush1.bf16.msra.mxu0 0
  %363 = vmatprep.subr.bf16.mxu0 0
  %364 = vmatpush1.bf16.msra.mxu0 0
  %365 = vmatprep.subr.bf16.mxu0 0
  %366 = vmatpush1.bf16.msra.mxu0 0
  %367 = vmatprep.mubr.bf16.mxu0 0
  %368 = vmatmul.mubr.bf16.gmra.mrb[0].mxu0 %v69
  %v369 = vpop.f32.mrb[0].mxu0
  %v370 = vadd.f32 0.0, %v369
  %v371 = vpop.f32.mrb[0].mxu0
  %v372 = vadd.f32 0.0, %v371
  %v373 = vpop.f32.mrb[0].mxu0
  %v374 = vadd.f32 0.0, %v373
  %v375 = vpop.f32.mrb[0].mxu0
  %v376 = vadd.f32 0.0, %v375
  %377 = vdwg.mxu0
  %378 = vmatprep.subr.bf16.mxu0 %v112
  %379 = vmatpush1.bf16.msra.mxu0 %v109
  %380 = vmatprep.subr.bf16.mxu0 0
  %381 = vmatpush1.bf16.msra.mxu0 0
  %382 = vmatprep.subr.bf16.mxu0 0
  %383 = vmatpush1.bf16.msra.mxu0 0
  %384 = vmatprep.subr.bf16.mxu0 0
  %385 = vmatpush1.bf16.msra.mxu0 0
  %386 = vmatprep.subr.bf16.mxu0 0
  %387 = vmatpush1.bf16.msra.mxu0 0
  %388 = vmatprep.subr.bf16.mxu0 0
  %389 = vmatpush1.bf16.msra.mxu0 0
  %390 = vmatprep.subr.bf16.mxu0 0
  %391 = vmatpush1.bf16.msra.mxu0 0
  %392 = vmatprep.subr.bf16.mxu0 0
  %393 = vmatpush1.bf16.msra.mxu0 0
  %394 = vmatprep.subr.bf16.mxu0 0
  %395 = vmatpush1.bf16.msra.mxu0 0
  %396 = vmatprep.subr.bf16.mxu0 0
  %397 = vmatpush1.bf16.msra.mxu0 0
  %398 = vmatprep.subr.bf16.mxu0 0
  %399 = vmatpush1.bf16.msra.mxu0 0
  %400 = vmatprep.subr.bf16.mxu0 0
  %401 = vmatpush1.bf16.msra.mxu0 0
  %402 = vmatprep.subr.bf16.mxu0 0
  %403 = vmatpush1.bf16.msra.mxu0 0
  %404 = vmatprep.subr.bf16.mxu0 0
  %405 = vmatpush1.bf16.msra.mxu0 0
  %406 = vmatprep.subr.bf16.mxu0 0
  %407 = vmatpush1.bf16.msra.mxu0 0
  %408 = vmatprep.subr.bf16.mxu0 0
  %409 = vmatpush1.bf16.msra.mxu0 0
  %410 = vmatprep.mubr.bf16.mxu0 0
  %411 = vmatmul.mubr.bf16.gmra.mrb[0].mxu0 %v69
  %v412 = vpop.f32.mrb[0].mxu0
  %v413 = vadd.f32 0.0, %v412
  %v414 = vpop.f32.mrb[0].mxu0
  %v415 = vadd.f32 0.0, %v414
  %v416 = vpop.f32.mrb[0].mxu0
  %v417 = vadd.f32 0.0, %v416
  %v418 = vpop.f32.mrb[0].mxu0
  %v419 = vadd.f32 0.0, %v418
  %420 = vdwg.mxu0
  %421 = vmatprep.subr.bf16.mxu0 %v118
  %422 = vmatpush1.bf16.msra.mxu0 %v115
  %423 = vmatprep.subr.bf16.mxu0 0
  %424 = vmatpush1.bf16.msra.mxu0 0
  %425 = vmatprep.subr.bf16.mxu0 0
  %426 = vmatpush1.bf16.msra.mxu0 0
  %427 = vmatprep.subr.bf16.mxu0 0
  %428 = vmatpush1.bf16.msra.mxu0 0
  %429 = vmatprep.subr.bf16.mxu0 0
  %430 = vmatpush1.bf16.msra.mxu0 0
  %431 = vmatprep.subr.bf16.mxu0 0
  %432 = vmatpush1.bf16.msra.mxu0 0
  %433 = vmatprep.subr.bf16.mxu0 0
  %434 = vmatpush1.bf16.msra.mxu0 0
  %435 = vmatprep.subr.bf16.mxu0 0
  %436 = vmatpush1.bf16.msra.mxu0 0
  %437 = vmatprep.subr.bf16.mxu0 0
  %438 = vmatpush1.bf16.msra.mxu0 0
  %439 = vmatprep.subr.bf16.mxu0 0
  %440 = vmatpush1.bf16.msra.mxu0 0
  %441 = vmatprep.subr.bf16.mxu0 0
  %442 = vmatpush1.bf16.msra.mxu0 0
  %443 = vmatprep.subr.bf16.mxu0 0
  %444 = vmatpush1.bf16.msra.mxu0 0
  %445 = vmatprep.subr.bf16.mxu0 0
  %446 = vmatpush1.bf16.msra.mxu0 0
  %447 = vmatprep.subr.bf16.mxu0 0
  %448 = vmatpush1.bf16.msra.mxu0 0
  %449 = vmatprep.subr.bf16.mxu0 0
  %450 = vmatpush1.bf16.msra.mxu0 0
  %451 = vmatprep.subr.bf16.mxu0 0
  %452 = vmatpush1.bf16.msra.mxu0 0
  %453 = vmatprep.mubr.bf16.mxu0 0
  %454 = vmatmul.mubr.bf16.gmra.mrb[0].mxu0 %v69
  %v455 = vpop.f32.mrb[0].mxu0
  %v456 = vadd.f32 0.0, %v455
  %v457 = vpop.f32.mrb[0].mxu0
  %v458 = vadd.f32 0.0, %v457
  %v459 = vpop.f32.mrb[0].mxu0
  %v460 = vadd.f32 0.0, %v459
  %v461 = vpop.f32.mrb[0].mxu0
  %v462 = vadd.f32 0.0, %v461
  %463 = vdwg.mxu0
  %464 = vst [vmem:[%s2] sm:$0xff] %v155
  %465 = vst [vmem:[%s2 + $0x8] sm:$0xff] %v157
  %466 = vst [vmem:[%s2 + $0x10] sm:$0xff] %v198
  %467 = vst [vmem:[%s2 + $0x18] sm:$0xff] %v200
  %468 = vst [vmem:[%s2 + $0x20] sm:$0xff] %v241
  %469 = vst [vmem:[%s2 + $0x28] sm:$0xff] %v243
  %470 = vst [vmem:[%s2 + $0x30] sm:$0xff] %v284
  %471 = vst [vmem:[%s2 + $0x38] sm:$0xff] %v286
  %472 = vst [vmem:[%s2 + $0x40] sm:$0xff] %v327
  %473 = vst [vmem:[%s2 + $0x48] sm:$0xff] %v329
  %474 = vst [vmem:[%s2 + $0x50] sm:$0xff] %v370
  %475 = vst [vmem:[%s2 + $0x58] sm:$0xff] %v372
  %476 = vst [vmem:[%s2 + $0x60] sm:$0xff] %v413
  %477 = vst [vmem:[%s2 + $0x68] sm:$0xff] %v415
  %478 = vst [vmem:[%s2 + $0x70] sm:$0xff] %v456
  %479 = vst [vmem:[%s2 + $0x78] sm:$0xff] %v458
  %480 = vst [vmem:[%s2 + $0x80] sm:$0xff] %v159
  %481 = vst [vmem:[%s2 + $0x88] sm:$0xff] %v161
  %482 = vst [vmem:[%s2 + $0x90] sm:$0xff] %v202
  %483 = vst [vmem:[%s2 + $0x98] sm:$0xff] %v204
  %484 = vst [vmem:[%s2 + $0xa0] sm:$0xff] %v245
  %485 = vst [vmem:[%s2 + $0xa8] sm:$0xff] %v247
  %486 = vst [vmem:[%s2 + $0xb0] sm:$0xff] %v288
  %487 = vst [vmem:[%s2 + $0xb8] sm:$0xff] %v290
  %488 = vst [vmem:[%s2 + $0xc0] sm:$0xff] %v331
  %489 = vst [vmem:[%s2 + $0xc8] sm:$0xff] %v333
  %490 = vst [vmem:[%s2 + $0xd0] sm:$0xff] %v374
  %491 = vst [vmem:[%s2 + $0xd8] sm:$0xff] %v376
  %492 = vst [vmem:[%s2 + $0xe0] sm:$0xff] %v417
  %493 = vst [vmem:[%s2 + $0xe8] sm:$0xff] %v419
  %494 = vst [vmem:[%s2 + $0xf0] sm:$0xff] %v460
  %495 = vst [vmem:[%s2 + $0xf8] sm:$0xff] %v462
  // Predicated region
  $region10: #{netg_celeba_forward.9} parent=0 // pred_check
    _
  $region11: #{netg_celeba_forward.9} parent=0 // pred_check_branch
    %497 = sbr.rel (0) target = $region13
  $region12: #{netg_celeba_forward.9} parent=0 // pred_region
    _
  $region13: #{netg_celeba_forward.9} parent=0 // pred_fallthru
    _
  // Predicated region
  $region14: #{netg_celeba_forward.9} parent=0 // pred_check
    _
  $region15: #{netg_celeba_forward.9} parent=0 // pred_check_branch
    %499 = sbr.rel (0) target = $region17
  $region16: #{netg_celeba_forward.9} parent=0 // pred_region
    _
  $region17: #{netg_celeba_forward.9} parent=0 // pred_fallthru
    _

// kernel: netg_celeba_forward.10
$region0: #{netg_celeba_forward.10}
  #allocation0 [shape = 'u32[]', space=smem, size = 0x4, offset = 0x4, fixed_abs, tag = 'smem constant byte address 0x4 - core index']
  #allocation1 [shape = 'u32[144,128]{1,0:T(1,128)}', space=vmem, size = 0x12000, scoped, tag = 'internal scratch']
  %s0 = inlined_call_operand.vmem [shape: f32[256,128], index: 0, kind: input, shape index: {}]
  %s1 = inlined_call_operand.vmem [shape: f32[1,128], index: 1, kind: input, shape index: {}]
  %s2 = inlined_call_operand.vmem [shape: f32[1,128], index: 2, kind: input, shape index: {}]
  %s3 = inlined_call_operand.vmem [shape: bf16[256,128], index: 3, kind: output, shape index: {}]
  %s4 = sld [smem:[#allocation0]]
  $region22: #{netg_celeba_forward.10} parent=0
    _
  %s6 = ssub.s32 1, %s4
  %s7 = scalar_select 0, %s6, %s4
  // Predicated region
  $region2: #{netg_celeba_forward.10} parent=0 // pred_check
    _
  $region3: #{netg_celeba_forward.10} parent=0 // pred_check_branch
    %9 = sbr.rel (0) target = $region5
  $region4: #{netg_celeba_forward.10} parent=0 // pred_region
    _
  $region5: #{netg_celeba_forward.10} parent=0 // pred_fallthru
    _
  // Predicated region
  $region6: #{netg_celeba_forward.10} parent=0 // pred_check
    _
  $region7: #{netg_celeba_forward.10} parent=0 // pred_check_branch
    %11 = sbr.rel (0) target = $region9
  $region8: #{netg_celeba_forward.10} parent=0 // pred_region
    _
  $region9: #{netg_celeba_forward.10} parent=0 // pred_fallthru
    _
  // Predicated region
  $region10: #{netg_celeba_forward.10} parent=0 // pred_check
    _
  $region11: #{netg_celeba_forward.10} parent=0 // pred_check_branch
    %13 = sbr.rel (0) target = $region13
  $region12: #{netg_celeba_forward.10} parent=0 // pred_region
    _
  $region13: #{netg_celeba_forward.10} parent=0 // pred_fallthru
    _
  %v14 = vld [vmem:[%s0] sm:$0xff]
  %v15 = vld [vmem:[%s0 + $0x8] sm:$0xff]
  %v16 = vld [vmem:[%s0 + $0x10] sm:$0xff]
  %v17 = vld [vmem:[%s0 + $0x18] sm:$0xff]
  %v18 = vld [vmem:[%s0 + $0x20] sm:$0xff]
  %v19 = vld [vmem:[%s0 + $0x28] sm:$0xff]
  %v20 = vld [vmem:[%s0 + $0x30] sm:$0xff]
  %v21 = vld [vmem:[%s0 + $0x38] sm:$0xff]
  %v22 = vld [vmem:[%s0 + $0x40] sm:$0xff]
  %v23 = vld [vmem:[%s0 + $0x48] sm:$0xff]
  %v24 = vld [vmem:[%s0 + $0x50] sm:$0xff]
  %v25 = vld [vmem:[%s0 + $0x58] sm:$0xff]
  %v26 = vld [vmem:[%s0 + $0x60] sm:$0xff]
  %v27 = vld [vmem:[%s0 + $0x68] sm:$0xff]
  %v28 = vld [vmem:[%s0 + $0x70] sm:$0xff]
  %v29 = vld [vmem:[%s0 + $0x78] sm:$0xff]
  %v30 = vld [vmem:[%s0 + $0x80] sm:$0xff]
  %v31 = vld [vmem:[%s0 + $0x88] sm:$0xff]
  %v32 = vld [vmem:[%s0 + $0x90] sm:$0xff]
  %v33 = vld [vmem:[%s0 + $0x98] sm:$0xff]
  %v34 = vld [vmem:[%s0 + $0xa0] sm:$0xff]
  %v35 = vld [vmem:[%s0 + $0xa8] sm:$0xff]
  %v36 = vld [vmem:[%s0 + $0xb0] sm:$0xff]
  %v37 = vld [vmem:[%s0 + $0xb8] sm:$0xff]
  %v38 = vld [vmem:[%s0 + $0xc0] sm:$0xff]
  %v39 = vld [vmem:[%s0 + $0xc8] sm:$0xff]
  %v40 = vld [vmem:[%s0 + $0xd0] sm:$0xff]
  %v41 = vld [vmem:[%s0 + $0xd8] sm:$0xff]
  %v42 = vld [vmem:[%s0 + $0xe0] sm:$0xff]
  %v43 = vld [vmem:[%s0 + $0xe8] sm:$0xff]
  %v44 = vld [vmem:[%s0 + $0xf0] sm:$0xff]
  %v45 = vld [vmem:[%s0 + $0xf8] sm:$0xff]
  %v46 = vld [vmem:[%s1] sm:$0x1]
  %v48 = vlaneseq
  %v49 = vshrl.u32 %v48, 7
  %v50 = vsub.s32 0, %v49
  %v51 = vrot.slane %v46, %v50
  %v53 = vmul.f32 %v14, %v51
  %v54 = vmul.f32 %v15, %v51
  %v55 = vmul.f32 %v16, %v51
  %v56 = vmul.f32 %v17, %v51
  %v57 = vmul.f32 %v18, %v51
  %v58 = vmul.f32 %v19, %v51
  %v59 = vmul.f32 %v20, %v51
  %v60 = vmul.f32 %v21, %v51
  %v61 = vmul.f32 %v22, %v51
  %v62 = vmul.f32 %v23, %v51
  %v63 = vmul.f32 %v24, %v51
  %v64 = vmul.f32 %v25, %v51
  %v65 = vmul.f32 %v26, %v51
  %v66 = vmul.f32 %v27, %v51
  %v67 = vmul.f32 %v28, %v51
  %v68 = vmul.f32 %v29, %v51
  %v69 = vmul.f32 %v30, %v51
  %v70 = vmul.f32 %v31, %v51
  %v71 = vmul.f32 %v32, %v51
  %v72 = vmul.f32 %v33, %v51
  %v73 = vmul.f32 %v34, %v51
  %v74 = vmul.f32 %v35, %v51
  %v75 = vmul.f32 %v36, %v51
  %v76 = vmul.f32 %v37, %v51
  %v77 = vmul.f32 %v38, %v51
  %v78 = vmul.f32 %v39, %v51
  %v79 = vmul.f32 %v40, %v51
  %v80 = vmul.f32 %v41, %v51
  %v81 = vmul.f32 %v42, %v51
  %v82 = vmul.f32 %v43, %v51
  %v83 = vmul.f32 %v44, %v51
  %v84 = vmul.f32 %v45, %v51
  %v85 = vld [vmem:[%s2] sm:$0x1]
  %v87 = vlaneseq
  %v88 = vshrl.u32 %v87, 7
  %v89 = vsub.s32 0, %v88
  %v90 = vrot.slane %v85, %v89
  %v92 = vadd.f32 %v53, %v90
  %v93 = vadd.f32 %v54, %v90
  %v94 = vadd.f32 %v55, %v90
  %v95 = vadd.f32 %v56, %v90
  %v96 = vadd.f32 %v57, %v90
  %v97 = vadd.f32 %v58, %v90
  %v98 = vadd.f32 %v59, %v90
  %v99 = vadd.f32 %v60, %v90
  %v100 = vadd.f32 %v61, %v90
  %v101 = vadd.f32 %v62, %v90
  %v102 = vadd.f32 %v63, %v90
  %v103 = vadd.f32 %v64, %v90
  %v104 = vadd.f32 %v65, %v90
  %v105 = vadd.f32 %v66, %v90
  %v106 = vadd.f32 %v67, %v90
  %v107 = vadd.f32 %v68, %v90
  %v108 = vadd.f32 %v69, %v90
  %v109 = vadd.f32 %v70, %v90
  %v110 = vadd.f32 %v71, %v90
  %v111 = vadd.f32 %v72, %v90
  %v112 = vadd.f32 %v73, %v90
  %v113 = vadd.f32 %v74, %v90
  %v114 = vadd.f32 %v75, %v90
  %v115 = vadd.f32 %v76, %v90
  %v116 = vadd.f32 %v77, %v90
  %v117 = vadd.f32 %v78, %v90
  %v118 = vadd.f32 %v79, %v90
  %v119 = vadd.f32 %v80, %v90
  %v120 = vadd.f32 %v81, %v90
  %v121 = vadd.f32 %v82, %v90
  %v122 = vadd.f32 %v83, %v90
  %v123 = vadd.f32 %v84, %v90
  %v124 = vmax.f32 %v92, 0.0
  %v125 = vmax.f32 %v93, 0.0
  %v126 = vmax.f32 %v94, 0.0
  %v127 = vmax.f32 %v95, 0.0
  %v128 = vmax.f32 %v96, 0.0
  %v129 = vmax.f32 %v97, 0.0
  %v130 = vmax.f32 %v98, 0.0
  %v131 = vmax.f32 %v99, 0.0
  %v132 = vmax.f32 %v100, 0.0
  %v133 = vmax.f32 %v101, 0.0
  %v134 = vmax.f32 %v102, 0.0
  %v135 = vmax.f32 %v103, 0.0
  %v136 = vmax.f32 %v104, 0.0
  %v137 = vmax.f32 %v105, 0.0
  %v138 = vmax.f32 %v106, 0.0
  %v139 = vmax.f32 %v107, 0.0
  %v140 = vmax.f32 %v108, 0.0
  %v141 = vmax.f32 %v109, 0.0
  %v142 = vmax.f32 %v110, 0.0
  %v143 = vmax.f32 %v111, 0.0
  %v144 = vmax.f32 %v112, 0.0
  %v145 = vmax.f32 %v113, 0.0
  %v146 = vmax.f32 %v114, 0.0
  %v147 = vmax.f32 %v115, 0.0
  %v148 = vmax.f32 %v116, 0.0
  %v149 = vmax.f32 %v117, 0.0
  %v150 = vmax.f32 %v118, 0.0
  %v151 = vmax.f32 %v119, 0.0
  %v152 = vmax.f32 %v120, 0.0
  %v153 = vmax.f32 %v121, 0.0
  %v154 = vmax.f32 %v122, 0.0
  %v155 = vmax.f32 %v123, 0.0
  %v156 = vpack.c.bf16 %v125, %v124
  %v157 = vpack.c.bf16 %v127, %v126
  %v158 = vpack.c.bf16 %v129, %v128
  %v159 = vpack.c.bf16 %v131, %v130
  %v160 = vpack.c.bf16 %v133, %v132
  %v161 = vpack.c.bf16 %v135, %v134
  %v162 = vpack.c.bf16 %v137, %v136
  %v163 = vpack.c.bf16 %v139, %v138
  %v164 = vpack.c.bf16 %v141, %v140
  %v165 = vpack.c.bf16 %v143, %v142
  %v166 = vpack.c.bf16 %v145, %v144
  %v167 = vpack.c.bf16 %v147, %v146
  %v168 = vpack.c.bf16 %v149, %v148
  %v169 = vpack.c.bf16 %v151, %v150
  %v170 = vpack.c.bf16 %v153, %v152
  %v171 = vpack.c.bf16 %v155, %v154
  %v188 = vunpack.c.l.b16 %v156
  %v189 = vunpack.c.h.b16 %v156
  %v190 = vunpack.c.l.b16 %v157
  %v191 = vunpack.c.h.b16 %v157
  %v192 = vunpack.c.l.b16 %v158
  %v193 = vunpack.c.h.b16 %v158
  %v194 = vunpack.c.l.b16 %v159
  %v195 = vunpack.c.h.b16 %v159
  %v196 = vunpack.c.l.b16 %v160
  %v197 = vunpack.c.h.b16 %v160
  %v198 = vunpack.c.l.b16 %v161
  %v199 = vunpack.c.h.b16 %v161
  %v200 = vunpack.c.l.b16 %v162
  %v201 = vunpack.c.h.b16 %v162
  %v202 = vunpack.c.l.b16 %v163
  %v203 = vunpack.c.h.b16 %v163
  %v204 = vunpack.c.l.b16 %v164
  %v205 = vunpack.c.h.b16 %v164
  %v206 = vunpack.c.l.b16 %v165
  %v207 = vunpack.c.h.b16 %v165
  %v208 = vunpack.c.l.b16 %v166
  %v209 = vunpack.c.h.b16 %v166
  %v210 = vunpack.c.l.b16 %v167
  %v211 = vunpack.c.h.b16 %v167
  %v212 = vunpack.c.l.b16 %v168
  %v213 = vunpack.c.h.b16 %v168
  %v214 = vunpack.c.l.b16 %v169
  %v215 = vunpack.c.h.b16 %v169
  %v216 = vunpack.c.l.b16 %v170
  %v217 = vunpack.c.h.b16 %v170
  %v218 = vunpack.c.l.b16 %v171
  %v219 = vunpack.c.h.b16 %v171
  %v220 = vpack.c.b16 %v188, %v188
  %v221 = vpack.c.b16 %v189, %v189
  %v222 = vpack.c.b16 %v190, %v190
  %v223 = vpack.c.b16 %v191, %v191
  %v224 = vpack.c.b16 %v192, %v192
  %v225 = vpack.c.b16 %v193, %v193
  %v226 = vpack.c.b16 %v194, %v194
  %v227 = vpack.c.b16 %v195, %v195
  %v228 = vpack.c.b16 %v196, %v196
  %v229 = vpack.c.b16 %v197, %v197
  %v230 = vpack.c.b16 %v198, %v198
  %v231 = vpack.c.b16 %v199, %v199
  %v232 = vpack.c.b16 %v200, %v200
  %v233 = vpack.c.b16 %v201, %v201
  %v234 = vpack.c.b16 %v202, %v202
  %v235 = vpack.c.b16 %v203, %v203
  %v236 = vpack.c.b16 %v204, %v204
  %v237 = vpack.c.b16 %v205, %v205
  %v238 = vpack.c.b16 %v206, %v206
  %v239 = vpack.c.b16 %v207, %v207
  %v240 = vpack.c.b16 %v208, %v208
  %v241 = vpack.c.b16 %v209, %v209
  %v242 = vpack.c.b16 %v210, %v210
  %v243 = vpack.c.b16 %v211, %v211
  %v244 = vpack.c.b16 %v212, %v212
  %v245 = vpack.c.b16 %v213, %v213
  %v246 = vpack.c.b16 %v214, %v214
  %v247 = vpack.c.b16 %v215, %v215
  %v248 = vpack.c.b16 %v216, %v216
  %v249 = vpack.c.b16 %v217, %v217
  %v250 = vpack.c.b16 %v218, %v218
  %v251 = vpack.c.b16 %v219, %v219
  %284 = vst [vmem:[%s3] sm:$0xf] %v220
  %285 = vst [vmem:[%s3 + $0x4] sm:$0xf] %v221
  %286 = vst [vmem:[%s3 + $0x8] sm:$0xf] %v222
  %287 = vst [vmem:[%s3 + $0xc] sm:$0xf] %v223
  %288 = vst [vmem:[%s3 + $0x10] sm:$0xf] %v224
  %289 = vst [vmem:[%s3 + $0x14] sm:$0xf] %v225
  %290 = vst [vmem:[%s3 + $0x18] sm:$0xf] %v226
  %291 = vst [vmem:[%s3 + $0x1c] sm:$0xf] %v227
  %292 = vst [vmem:[%s3 + $0x20] sm:$0xf] %v228
  %293 = vst [vmem:[%s3 + $0x24] sm:$0xf] %v229
  %294 = vst [vmem:[%s3 + $0x28] sm:$0xf] %v230
  %295 = vst [vmem:[%s3 + $0x2c] sm:$0xf] %v231
  %296 = vst [vmem:[%s3 + $0x30] sm:$0xf] %v232
  %297 = vst [vmem:[%s3 + $0x34] sm:$0xf] %v233
  %298 = vst [vmem:[%s3 + $0x38] sm:$0xf] %v234
  %299 = vst [vmem:[%s3 + $0x3c] sm:$0xf] %v235
  %300 = vst [vmem:[%s3 + $0x40] sm:$0xf] %v236
  %301 = vst [vmem:[%s3 + $0x44] sm:$0xf] %v237
  %302 = vst [vmem:[%s3 + $0x48] sm:$0xf] %v238
  %303 = vst [vmem:[%s3 + $0x4c] sm:$0xf] %v239
  %304 = vst [vmem:[%s3 + $0x50] sm:$0xf] %v240
  %305 = vst [vmem:[%s3 + $0x54] sm:$0xf] %v241
  %306 = vst [vmem:[%s3 + $0x58] sm:$0xf] %v242
  %307 = vst [vmem:[%s3 + $0x5c] sm:$0xf] %v243
  %308 = vst [vmem:[%s3 + $0x60] sm:$0xf] %v244
  %309 = vst [vmem:[%s3 + $0x64] sm:$0xf] %v245
  %310 = vst [vmem:[%s3 + $0x68] sm:$0xf] %v246
  %311 = vst [vmem:[%s3 + $0x6c] sm:$0xf] %v247
  %312 = vst [vmem:[%s3 + $0x70] sm:$0xf] %v248
  %313 = vst [vmem:[%s3 + $0x74] sm:$0xf] %v249
  %314 = vst [vmem:[%s3 + $0x78] sm:$0xf] %v250
  %315 = vst [vmem:[%s3 + $0x7c] sm:$0xf] %v251
  // Predicated region
  $region14: #{netg_celeba_forward.10} parent=0 // pred_check
    _
  $region15: #{netg_celeba_forward.10} parent=0 // pred_check_branch
    %317 = sbr.rel (0) target = $region17
  $region16: #{netg_celeba_forward.10} parent=0 // pred_region
    _
  $region17: #{netg_celeba_forward.10} parent=0 // pred_fallthru
    _
  // Predicated region
  $region18: #{netg_celeba_forward.10} parent=0 // pred_check
    _
  $region19: #{netg_celeba_forward.10} parent=0 // pred_check_branch
    %319 = sbr.rel (0) target = $region21
  $region20: #{netg_celeba_forward.10} parent=0 // pred_region
    _
  $region21: #{netg_celeba_forward.10} parent=0 // pred_fallthru
    _

// kernel: netg_celeba_forward.11
$region0: #{netg_celeba_forward.11}
  #allocation0 [shape = 'u32[]', space=smem, size = 0x4, offset = 0x4, fixed_abs, tag = 'smem constant byte address 0x4 - core index']
  #allocation1 [shape = 'u32[144,128]{1,0:T(1,128)}', space=vmem, size = 0x12000, scoped, tag = 'internal scratch']
  %s0 = inlined_call_operand.vmem [shape: bf16[4,32,256], index: 0, kind: input, shape index: {}]
  %s1 = inlined_call_operand.vmem [shape: bf16[4,256,128], index: 1, kind: input, shape index: {}]
  %s2 = inlined_call_operand.vmem [shape: f32[4,32,128], index: 2, kind: output, shape index: {}]
  %s3 = sld [smem:[#allocation0]]
  $region41: #{netg_celeba_forward.11} parent=0
    _
  %s5 = ssub.s32 1, %s3
  %s6 = scalar_select 0, %s5, %s3
  loop: start=0, step=1, limit=6
  $region2: #{netg_celeba_forward.11} parent=0 // loop_pre_header
    _
  $region3: #{netg_celeba_forward.11} parent=0 // loop_header
    %s8 = sphi 0, %s12
    %p9 = scmp.ge.s32.totalorder %s8, 6
    %s15 = sphi 0, %s27
    %s16 = sphi 0, %s23
    %s17 = sphi 0, %s15
    %s18 = sphi 0, %s16
    %s19 = sphi 0, %s17
    %s20 = sphi 0, %s18
    %s32 = sphi 0, %s34
    %s35 = sphi 0, %s32
    %s36 = sphi 0, %s35
    %s52 = sphi 0, %s36
    %s58 = sphi 0, %s60
    %s61 = sphi 0, %s58
    %s62 = sphi 0, %s61
    %s78 = sphi 0, %s62
    %s86 = sphi 0, %s88
    %s89 = sphi 0, %s86
    %s90 = sphi 0, %s89
    %s106 = sphi 0, %s90
  $region4: #{netg_celeba_forward.11} parent=0 // loop_header_branch
    %11 = sbr.rel (%p9) target = $region8
  $region5: #{netg_celeba_forward.11} parent=0 // loop_body
    %s13 = ssub.s32 %s8, 1
    %s14 = ssub.s32 %s8, 2
    %s21 = sadd.s32 1, %s16
    %p22 = scmp.ge.s32.totalorder %s21, 1
    %s23 = scalar_select %p22, 0, %s21
    %s24 = sadd.s32 1, %s15
    %s25 = scalar_select %p22, %s24, %s15
    %p26 = scmp.ge.s32.totalorder %s25, 4
    %s27 = scalar_select %p26, 0, %s25
    %s28 = ssub.s32 %s15, %s27
    %s29 = ssub.s32 %s16, %s23
    %s30 = sor.u32 %s28, %s29
    %p31 = scmp.eq.s32.totalorder %s30, 0
    %s33 = sadd.s32 %s32, 1
    %s34 = scalar_select %p31, %s32, %s33
    %p37 = pneg %p31
    %p38 = scmp.eq.s32.totalorder %s8, 3
    %p39 = por %p37, %p38
    %p40 = scmp.ne.s32.totalorder %s32, %s35
    %p41 = scmp.eq.s32.totalorder %s8, 0
    %p42 = por %p40, %p41
    %p43 = scmp.ne.s32.totalorder %s32, %s35
    %p44 = scmp.eq.s32.totalorder %s13, 3
    %p45 = por %p43, %p44
    %p46 = scmp.ne.s32.totalorder %s35, %s36
    %p47 = scmp.eq.s32.totalorder %s13, 0
    %p48 = por %p46, %p47
    %p49 = scmp.ne.s32.totalorder %s35, %s36
    %p50 = scmp.eq.s32.totalorder %s14, 3
    %p51 = por %p49, %p50
    %p53 = scmp.ne.s32.totalorder %s36, %s52
    %p54 = scmp.eq.s32.totalorder %s14, 0
    %p55 = por %p53, %p54
    %s56 = ssub.s32 %s15, %s27
    %p57 = scmp.eq.s32.totalorder %s56, 0
    %s59 = sadd.s32 %s58, 1
    %s60 = scalar_select %p57, %s58, %s59
    %p63 = pneg %p57
    %p64 = scmp.eq.s32.totalorder %s8, 3
    %p65 = por %p63, %p64
    %p66 = scmp.ne.s32.totalorder %s58, %s61
    %p67 = scmp.eq.s32.totalorder %s8, 0
    %p68 = por %p66, %p67
    %p69 = scmp.ne.s32.totalorder %s58, %s61
    %p70 = scmp.eq.s32.totalorder %s13, 3
    %p71 = por %p69, %p70
    %p72 = scmp.ne.s32.totalorder %s61, %s62
    %p73 = scmp.eq.s32.totalorder %s13, 0
    %p74 = por %p72, %p73
    %p75 = scmp.ne.s32.totalorder %s61, %s62
    %p76 = scmp.eq.s32.totalorder %s14, 3
    %p77 = por %p75, %p76
    %p79 = scmp.ne.s32.totalorder %s62, %s78
    %p80 = scmp.eq.s32.totalorder %s14, 0
    %p81 = por %p79, %p80
    %s82 = ssub.s32 %s15, %s27
    %s83 = ssub.s32 %s16, %s23
    %s84 = sor.u32 %s82, %s83
    %p85 = scmp.eq.s32.totalorder %s84, 0
    %s87 = sadd.s32 %s86, 1
    %s88 = scalar_select %p85, %s86, %s87
    %p91 = pneg %p85
    %p92 = scmp.eq.s32.totalorder %s8, 3
    %p93 = por %p91, %p92
    %p94 = scmp.ne.s32.totalorder %s86, %s89
    %p95 = scmp.eq.s32.totalorder %s8, 0
    %p96 = por %p94, %p95
    %p97 = scmp.ne.s32.totalorder %s86, %s89
    %p98 = scmp.eq.s32.totalorder %s13, 3
    %p99 = por %p97, %p98
    %p100 = scmp.ne.s32.totalorder %s89, %s90
    %p101 = scmp.eq.s32.totalorder %s13, 0
    %p102 = por %p100, %p101
    %p103 = scmp.ne.s32.totalorder %s89, %s90
    %p104 = scmp.eq.s32.totalorder %s14, 3
    %p105 = por %p103, %p104
    %p107 = scmp.ne.s32.totalorder %s90, %s106
    %p108 = scmp.eq.s32.totalorder %s14, 0
    %p109 = por %p107, %p108
    %p110 = scmp.le.s32.totalorder 1, %s8
    %p111 = scmp.lt.s32.totalorder %s8, 5
    %p112 = pnand %p110, %p111
    %p113 = pneg %p112
    // Predicated region
    $region9: #{netg_celeba_forward.11} parent=5 // pred_check
      _
    $region10: #{netg_celeba_forward.11} parent=5 // pred_check_branch
      %115 = sbr.rel (%p112) target = $region12
    $region11: #{netg_celeba_forward.11} parent=5 // pred_region
      %s116 = ssub.s32 %s8, 1
    $region12: #{netg_celeba_forward.11} parent=5 // pred_fallthru
      _
    %p117 = scmp.lt.s32.totalorder %s8, 4
    // Predicated region
    $region13: #{netg_celeba_forward.11} parent=5 // pred_check
      %p118 = pneg %p117
    $region14: #{netg_celeba_forward.11} parent=5 // pred_check_branch
      %120 = sbr.rel (%p118) target = $region16
    $region15: #{netg_celeba_forward.11} parent=5 // pred_region
      // Predicated region
      $region17: #{netg_celeba_forward.11} parent=15 // pred_check
        %p121 = pneg %p42
      $region18: #{netg_celeba_forward.11} parent=15 // pred_check_branch
        %123 = sbr.rel (%p121) target = $region20
      $region19: #{netg_celeba_forward.11} parent=15 // pred_region
        %s124 = smul.u32 4, %s16
        %p125 = scmp.lt.s32.totalorder %s15, 3
        %s126 = scalar_select %p125, %s15, 3
        %p127 = scmp.lt.s32.totalorder %s124, 3
        %s128 = scalar_select %p127, %s124, 3
        %s129 = smul.addr %s128, 2
        %s130 = smul.addr %s126, 8
        %s131 = sadd.s32 %s129, %s130
        %s132 = smul.addr %s131, 4
        %s133 = scalar_lea.vmem %s0, %s132
        %s134 = smul.u32 4, %s16
      $region20: #{netg_celeba_forward.11} parent=15 // pred_fallthru
        _
      // Predicated region
      $region21: #{netg_celeba_forward.11} parent=15 // pred_check
        %p135 = pneg %p68
      $region22: #{netg_celeba_forward.11} parent=15 // pred_check_branch
        %137 = sbr.rel (%p135) target = $region24
      $region23: #{netg_celeba_forward.11} parent=15 // pred_region
        %p138 = scmp.lt.s32.totalorder %s15, 3
        %s139 = scalar_select %p138, %s15, 3
        %s140 = smul.addr %s139, 32
        %s141 = smul.addr %s140, 4
        %s142 = scalar_lea.vmem %s1, %s141
      $region24: #{netg_celeba_forward.11} parent=15 // pred_fallthru
        _
    $region16: #{netg_celeba_forward.11} parent=5 // pred_fallthru
      _
    %p143 = scmp.le.s32.totalorder 1, %s8
    %p144 = scmp.lt.s32.totalorder %s8, 5
    %p145 = pnand %p143, %p144
    %p146 = pneg %p145
    // Predicated region
    $region25: #{netg_celeba_forward.11} parent=5 // pred_check
      _
    $region26: #{netg_celeba_forward.11} parent=5 // pred_check_branch
      %148 = sbr.rel (%p145) target = $region28
    $region27: #{netg_celeba_forward.11} parent=5 // pred_region
      %s149 = ssub.s32 %s8, 1
      %s150 = smul.u32 4, %s18
      %p151 = scmp.lt.s32.totalorder %s17, 3
      %s152 = scalar_select %p151, %s17, 3
      %p153 = scmp.lt.s32.totalorder %s150, 3
      %s154 = scalar_select %p153, %s150, 3
      %s155 = smul.addr %s154, 2
      %s156 = smul.addr %s152, 8
      %s157 = sadd.s32 %s155, %s156
      %s158 = smul.addr %s157, 4
      %s159 = scalar_lea.vmem %s0, %s158
      %p160 = pneg %p48
      %p161 = pneg %p45
      %p162 = scmp.lt.s32.totalorder %s17, 3
      %s163 = scalar_select %p162, %s17, 3
      %s164 = smul.addr %s163, 32
      %s165 = smul.addr %s164, 4
      %s166 = scalar_lea.vmem %s1, %s165
      %p167 = pneg %p74
      %p168 = pneg %p71
      %p169 = pneg %p102
      %p170 = pneg %p99
      %s171 = smul.u32 4, %s18
      %p172 = scmp.lt.s32.totalorder %s17, 3
      %s173 = scalar_select %p172, %s17, 3
      %p174 = scmp.lt.s32.totalorder %s171, 3
      %s175 = scalar_select %p174, %s171, 3
      %s176 = smul.addr %s173, 4
      %s177 = sadd.s32 %s175, %s176
      %s178 = smul.addr %s177, 8
      %s179 = scalar_lea.vmem %s2, %s178
      %s180 = smul.u32 4, %s18
      %p181 = scmp.lt.s32.totalorder %s17, 3
      %s182 = scalar_select %p181, %s17, 3
      %p183 = scmp.lt.s32.totalorder %s180, 3
      %s184 = scalar_select %p183, %s180, 3
      %s185 = smul.addr %s184, 2
      %s186 = smul.addr %s182, 8
      %s187 = sadd.s32 %s185, %s186
      %s188 = smul.addr %s187, 4
      %s189 = scalar_lea.vmem %s0, %s188
      %s190 = smul.u32 4, %s18
      %p191 = scmp.lt.s32.totalorder %s17, 3
      %s192 = scalar_select %p191, %s17, 3
      %s193 = smul.addr %s192, 32
      %s194 = smul.addr %s193, 4
      %s195 = scalar_lea.vmem %s1, %s194
      %s196 = smul.u32 4, %s18
      %p197 = scmp.lt.s32.totalorder %s17, 3
      %s198 = scalar_select %p197, %s17, 3
      %p199 = scmp.lt.s32.totalorder %s196, 3
      %s200 = scalar_select %p199, %s196, 3
      %s201 = smul.addr %s198, 4
      %s202 = sadd.s32 %s200, %s201
      %s203 = smul.addr %s202, 8
      %s204 = scalar_lea.vmem %s2, %s203
      %s205 = smul.u32 4, %s18
      %v207 = vld [vmem:[%s189] sm:$0xff]
      %v208 = vld [vmem:[%s189 + $0x8] sm:$0xff]
      %v209 = vld [vmem:[%s189 + $0x10] sm:$0xff]
      %v210 = vld [vmem:[%s189 + $0x18] sm:$0xff]
      %v211 = vld [vmem:[%s195] sm:$0xf]
      %v212 = vld [vmem:[%s195 + $0x4] sm:$0xf]
      %v213 = vld [vmem:[%s195 + $0x8] sm:$0xf]
      %v214 = vld [vmem:[%s195 + $0xc] sm:$0xf]
      %v215 = vld [vmem:[%s195 + $0x10] sm:$0xf]
      %v216 = vld [vmem:[%s195 + $0x14] sm:$0xf]
      %v217 = vld [vmem:[%s195 + $0x18] sm:$0xf]
      %v218 = vld [vmem:[%s195 + $0x1c] sm:$0xf]
      %v219 = vld [vmem:[%s195 + $0x20] sm:$0xf]
      %v220 = vld [vmem:[%s195 + $0x24] sm:$0xf]
      %v221 = vld [vmem:[%s195 + $0x28] sm:$0xf]
      %v222 = vld [vmem:[%s195 + $0x2c] sm:$0xf]
      %v223 = vld [vmem:[%s195 + $0x30] sm:$0xf]
      %v224 = vld [vmem:[%s195 + $0x34] sm:$0xf]
      %v225 = vld [vmem:[%s195 + $0x38] sm:$0xf]
      %v226 = vld [vmem:[%s195 + $0x3c] sm:$0xf]
      %v227 = vld [vmem:[%s195 + $0x40] sm:$0xf]
      %v228 = vld [vmem:[%s195 + $0x44] sm:$0xf]
      %v229 = vld [vmem:[%s195 + $0x48] sm:$0xf]
      %v230 = vld [vmem:[%s195 + $0x4c] sm:$0xf]
      %v231 = vld [vmem:[%s195 + $0x50] sm:$0xf]
      %v232 = vld [vmem:[%s195 + $0x54] sm:$0xf]
      %v233 = vld [vmem:[%s195 + $0x58] sm:$0xf]
      %v234 = vld [vmem:[%s195 + $0x5c] sm:$0xf]
      %v235 = vld [vmem:[%s195 + $0x60] sm:$0xf]
      %v236 = vld [vmem:[%s195 + $0x64] sm:$0xf]
      %v237 = vld [vmem:[%s195 + $0x68] sm:$0xf]
      %v238 = vld [vmem:[%s195 + $0x6c] sm:$0xf]
      %v239 = vld [vmem:[%s195 + $0x70] sm:$0xf]
      %v240 = vld [vmem:[%s195 + $0x74] sm:$0xf]
      %v241 = vld [vmem:[%s195 + $0x78] sm:$0xf]
      %v242 = vld [vmem:[%s195 + $0x7c] sm:$0xf]
      %v247 = vunpack.c.l.b16 %v207
      %v248 = vunpack.c.h.b16 %v207
      %v249 = vunpack.c.l.b16 %v208
      %v250 = vunpack.c.h.b16 %v208
      %v251 = vunpack.c.l.b16 %v209
      %v252 = vunpack.c.h.b16 %v209
      %v253 = vunpack.c.l.b16 %v210
      %v254 = vunpack.c.h.b16 %v210
      %v255 = vpack.c.b16 %v249, %v247
      %v256 = vpack.c.b16 %v250, %v248
      %v257 = vpack.c.b16 %v253, %v251
      %v258 = vpack.c.b16 %v254, %v252
      %v295 = vunpack.c.l.b16 %v211
      %v296 = vunpack.c.l.b16 %v212
      %v297 = vunpack.c.l.b16 %v213
      %v298 = vunpack.c.l.b16 %v214
      %v299 = vunpack.c.l.b16 %v215
      %v300 = vunpack.c.l.b16 %v216
      %v301 = vunpack.c.l.b16 %v217
      %v302 = vunpack.c.l.b16 %v218
      %v303 = vunpack.c.l.b16 %v219
      %v304 = vunpack.c.l.b16 %v220
      %v305 = vunpack.c.l.b16 %v221
      %v306 = vunpack.c.l.b16 %v222
      %v307 = vunpack.c.l.b16 %v223
      %v308 = vunpack.c.l.b16 %v224
      %v309 = vunpack.c.l.b16 %v225
      %v310 = vunpack.c.l.b16 %v226
      %v311 = vunpack.c.l.b16 %v227
      %v312 = vunpack.c.l.b16 %v228
      %v313 = vunpack.c.l.b16 %v229
      %v314 = vunpack.c.l.b16 %v230
      %v315 = vunpack.c.l.b16 %v231
      %v316 = vunpack.c.l.b16 %v232
      %v317 = vunpack.c.l.b16 %v233
      %v318 = vunpack.c.l.b16 %v234
      %v319 = vunpack.c.l.b16 %v235
      %v320 = vunpack.c.l.b16 %v236
      %v321 = vunpack.c.l.b16 %v237
      %v322 = vunpack.c.l.b16 %v238
      %v323 = vunpack.c.l.b16 %v239
      %v324 = vunpack.c.l.b16 %v240
      %v325 = vunpack.c.l.b16 %v241
      %v326 = vunpack.c.l.b16 %v242
      %v327 = vpack.c.b16 %v296, %v295
      %v328 = vpack.c.b16 %v298, %v297
      %v329 = vpack.c.b16 %v300, %v299
      %v330 = vpack.c.b16 %v302, %v301
      %v331 = vpack.c.b16 %v304, %v303
      %v332 = vpack.c.b16 %v306, %v305
      %v333 = vpack.c.b16 %v308, %v307
      %v334 = vpack.c.b16 %v310, %v309
      %v335 = vpack.c.b16 %v312, %v311
      %v336 = vpack.c.b16 %v314, %v313
      %v337 = vpack.c.b16 %v316, %v315
      %v338 = vpack.c.b16 %v318, %v317
      %v339 = vpack.c.b16 %v320, %v319
      %v340 = vpack.c.b16 %v322, %v321
      %v341 = vpack.c.b16 %v324, %v323
      %v342 = vpack.c.b16 %v326, %v325
      %359 = vmatprep.subr.bf16.mxu0 0
      %360 = vmatpush1.bf16.msra.mxu0 %v327
      %361 = vmatprep.subr.bf16.mxu0 0
      %362 = vmatpush1.bf16.msra.mxu0 %v328
      %363 = vmatprep.subr.bf16.mxu0 0
      %364 = vmatpush1.bf16.msra.mxu0 %v329
      %365 = vmatprep.subr.bf16.mxu0 0
      %366 = vmatpush1.bf16.msra.mxu0 %v330
      %367 = vmatprep.subr.bf16.mxu0 0
      %368 = vmatpush1.bf16.msra.mxu0 %v331
      %369 = vmatprep.subr.bf16.mxu0 0
      %370 = vmatpush1.bf16.msra.mxu0 %v332
      %371 = vmatprep.subr.bf16.mxu0 0
      %372 = vmatpush1.bf16.msra.mxu0 %v333
      %373 = vmatprep.subr.bf16.mxu0 0
      %374 = vmatpush1.bf16.msra.mxu0 %v334
      %375 = vmatprep.subr.bf16.mxu0 0
      %376 = vmatpush1.bf16.msra.mxu0 %v335
      %377 = vmatprep.subr.bf16.mxu0 0
      %378 = vmatpush1.bf16.msra.mxu0 %v336
      %379 = vmatprep.subr.bf16.mxu0 0
      %380 = vmatpush1.bf16.msra.mxu0 %v337
      %381 = vmatprep.subr.bf16.mxu0 0
      %382 = vmatpush1.bf16.msra.mxu0 %v338
      %383 = vmatprep.subr.bf16.mxu0 0
      %384 = vmatpush1.bf16.msra.mxu0 %v339
      %385 = vmatprep.subr.bf16.mxu0 0
      %386 = vmatpush1.bf16.msra.mxu0 %v340
      %387 = vmatprep.subr.bf16.mxu0 0
      %388 = vmatpush1.bf16.msra.mxu0 %v341
      %389 = vmatprep.subr.bf16.mxu0 0
      %390 = vmatpush1.bf16.msra.mxu0 %v342
      %391 = vmatprep.mubr.bf16.mxu0 %v256
      %392 = vmatmul.mubr.bf16.gmra.mrb[0].mxu0 %v255
      %v393 = vpop.f32.mrb[0].mxu0
      %v394 = vadd.f32 0.0, %v393
      %v395 = vpop.f32.mrb[0].mxu0
      %v396 = vpop.f32.mrb[0].mxu0
      %v397 = vadd.f32 0.0, %v396
      %v398 = vpop.f32.mrb[0].mxu0
      %399 = vmatprep.mubr.bf16.mxu0 %v258
      %400 = vmatmul.mubr.bf16.gmra.mrb[0].mxu0 %v257
      %v401 = vpop.f32.mrb[0].mxu0
      %v402 = vadd.f32 0.0, %v401
      %v403 = vpop.f32.mrb[0].mxu0
      %v404 = vpop.f32.mrb[0].mxu0
      %v405 = vadd.f32 0.0, %v404
      %v406 = vpop.f32.mrb[0].mxu0
      %407 = vdwg.mxu0
      %408 = vst [vmem:[%s204] sm:$0xff] %v394
      %409 = vst [vmem:[%s204 + $0x8] sm:$0xff] %v397
      %410 = vst [vmem:[%s204 + $0x10] sm:$0xff] %v402
      %411 = vst [vmem:[%s204 + $0x18] sm:$0xff] %v405
      %s412 = smul.u32 4, %s18
      %p413 = scmp.lt.s32.totalorder %s17, 3
      %s414 = scalar_select %p413, %s17, 3
      %p415 = scmp.lt.s32.totalorder %s412, 3
      %s416 = scalar_select %p415, %s412, 3
      %s417 = smul.addr %s414, 4
      %s418 = sadd.s32 %s416, %s417
      %s419 = smul.addr %s418, 8
      %s420 = scalar_lea.vmem %s2, %s419
      // Predicated region
      $region29: #{netg_celeba_forward.11} parent=27 // pred_check
        %p421 = pneg %p99
      $region30: #{netg_celeba_forward.11} parent=27 // pred_check_branch
        %423 = sbr.rel (%p421) target = $region32
      $region31: #{netg_celeba_forward.11} parent=27 // pred_region
        %s424 = smul.u32 4, %s18
      $region32: #{netg_celeba_forward.11} parent=27 // pred_fallthru
        _
    $region28: #{netg_celeba_forward.11} parent=5 // pred_fallthru
      _
    %p425 = scmp.le.s32.totalorder 2, %s8
    // Predicated region
    $region33: #{netg_celeba_forward.11} parent=5 // pred_check
      %p426 = pneg %p425
    $region34: #{netg_celeba_forward.11} parent=5 // pred_check_branch
      %428 = sbr.rel (%p426) target = $region36
    $region35: #{netg_celeba_forward.11} parent=5 // pred_region
      %s429 = ssub.s32 %s8, 2
      // Predicated region
      $region37: #{netg_celeba_forward.11} parent=35 // pred_check
        %p430 = pneg %p105
      $region38: #{netg_celeba_forward.11} parent=35 // pred_check_branch
        %432 = sbr.rel (%p430) target = $region40
      $region39: #{netg_celeba_forward.11} parent=35 // pred_region
        %s433 = smul.u32 4, %s20
        %p434 = scmp.lt.s32.totalorder %s19, 3
        %s435 = scalar_select %p434, %s19, 3
        %p436 = scmp.lt.s32.totalorder %s433, 3
        %s437 = scalar_select %p436, %s433, 3
        %s438 = smul.addr %s435, 4
        %s439 = sadd.s32 %s437, %s438
        %s440 = smul.addr %s439, 8
        %s441 = scalar_lea.vmem %s2, %s440
      $region40: #{netg_celeba_forward.11} parent=35 // pred_fallthru
        _
    $region36: #{netg_celeba_forward.11} parent=5 // pred_fallthru
      _
  $region6: #{netg_celeba_forward.11} parent=0 // loop_footer
    %s12 = sadd.s32 1, %s8
  $region7: #{netg_celeba_forward.11} parent=0 // loop_footer_branch
    %7 = sbr.rel target = $region3
  $region8: #{netg_celeba_forward.11} parent=0 // loop_exit
    _

// kernel: netg_celeba_forward.12
$region0: #{netg_celeba_forward.12}
  #allocation0 [shape = 'u32[]', space=smem, size = 0x4, offset = 0x4, fixed_abs, tag = 'smem constant byte address 0x4 - core index']
  #allocation1 [shape = 'u32[144,128]{1,0:T(1,128)}', space=vmem, size = 0x12000, scoped, tag = 'internal scratch']
  %s0 = inlined_call_operand.vmem [shape: f32[128,128], index: 0, kind: input, shape index: {}]
  %s1 = inlined_call_operand.vmem [shape: f32[1,128], index: 1, kind: input, shape index: {}]
  %s2 = inlined_call_operand.vmem [shape: f32[1,128], index: 2, kind: input, shape index: {}]
  %s3 = inlined_call_operand.vmem [shape: bf16[128,128], index: 3, kind: output, shape index: {}]
  %s4 = sld [smem:[#allocation0]]
  $region22: #{netg_celeba_forward.12} parent=0
    _
  %s6 = ssub.s32 1, %s4
  %s7 = scalar_select 0, %s6, %s4
  // Predicated region
  $region2: #{netg_celeba_forward.12} parent=0 // pred_check
    _
  $region3: #{netg_celeba_forward.12} parent=0 // pred_check_branch
    %9 = sbr.rel (0) target = $region5
  $region4: #{netg_celeba_forward.12} parent=0 // pred_region
    _
  $region5: #{netg_celeba_forward.12} parent=0 // pred_fallthru
    _
  // Predicated region
  $region6: #{netg_celeba_forward.12} parent=0 // pred_check
    _
  $region7: #{netg_celeba_forward.12} parent=0 // pred_check_branch
    %11 = sbr.rel (0) target = $region9
  $region8: #{netg_celeba_forward.12} parent=0 // pred_region
    _
  $region9: #{netg_celeba_forward.12} parent=0 // pred_fallthru
    _
  // Predicated region
  $region10: #{netg_celeba_forward.12} parent=0 // pred_check
    _
  $region11: #{netg_celeba_forward.12} parent=0 // pred_check_branch
    %13 = sbr.rel (0) target = $region13
  $region12: #{netg_celeba_forward.12} parent=0 // pred_region
    _
  $region13: #{netg_celeba_forward.12} parent=0 // pred_fallthru
    _
  %v14 = vld [vmem:[%s0] sm:$0xff]
  %v15 = vld [vmem:[%s0 + $0x8] sm:$0xff]
  %v16 = vld [vmem:[%s0 + $0x10] sm:$0xff]
  %v17 = vld [vmem:[%s0 + $0x18] sm:$0xff]
  %v18 = vld [vmem:[%s0 + $0x20] sm:$0xff]
  %v19 = vld [vmem:[%s0 + $0x28] sm:$0xff]
  %v20 = vld [vmem:[%s0 + $0x30] sm:$0xff]
  %v21 = vld [vmem:[%s0 + $0x38] sm:$0xff]
  %v22 = vld [vmem:[%s0 + $0x40] sm:$0xff]
  %v23 = vld [vmem:[%s0 + $0x48] sm:$0xff]
  %v24 = vld [vmem:[%s0 + $0x50] sm:$0xff]
  %v25 = vld [vmem:[%s0 + $0x58] sm:$0xff]
  %v26 = vld [vmem:[%s0 + $0x60] sm:$0xff]
  %v27 = vld [vmem:[%s0 + $0x68] sm:$0xff]
  %v28 = vld [vmem:[%s0 + $0x70] sm:$0xff]
  %v29 = vld [vmem:[%s0 + $0x78] sm:$0xff]
  %v30 = vld [vmem:[%s1] sm:$0x1]
  %v32 = vlaneseq
  %v33 = vshrl.u32 %v32, 7
  %v34 = vsub.s32 0, %v33
  %v35 = vrot.slane %v30, %v34
  %v37 = vmul.f32 %v14, %v35
  %v38 = vmul.f32 %v15, %v35
  %v39 = vmul.f32 %v16, %v35
  %v40 = vmul.f32 %v17, %v35
  %v41 = vmul.f32 %v18, %v35
  %v42 = vmul.f32 %v19, %v35
  %v43 = vmul.f32 %v20, %v35
  %v44 = vmul.f32 %v21, %v35
  %v45 = vmul.f32 %v22, %v35
  %v46 = vmul.f32 %v23, %v35
  %v47 = vmul.f32 %v24, %v35
  %v48 = vmul.f32 %v25, %v35
  %v49 = vmul.f32 %v26, %v35
  %v50 = vmul.f32 %v27, %v35
  %v51 = vmul.f32 %v28, %v35
  %v52 = vmul.f32 %v29, %v35
  %v53 = vld [vmem:[%s2] sm:$0x1]
  %v55 = vlaneseq
  %v56 = vshrl.u32 %v55, 7
  %v57 = vsub.s32 0, %v56
  %v58 = vrot.slane %v53, %v57
  %v60 = vadd.f32 %v37, %v58
  %v61 = vadd.f32 %v38, %v58
  %v62 = vadd.f32 %v39, %v58
  %v63 = vadd.f32 %v40, %v58
  %v64 = vadd.f32 %v41, %v58
  %v65 = vadd.f32 %v42, %v58
  %v66 = vadd.f32 %v43, %v58
  %v67 = vadd.f32 %v44, %v58
  %v68 = vadd.f32 %v45, %v58
  %v69 = vadd.f32 %v46, %v58
  %v70 = vadd.f32 %v47, %v58
  %v71 = vadd.f32 %v48, %v58
  %v72 = vadd.f32 %v49, %v58
  %v73 = vadd.f32 %v50, %v58
  %v74 = vadd.f32 %v51, %v58
  %v75 = vadd.f32 %v52, %v58
  %v76 = vmax.f32 %v60, 0.0
  %v77 = vmax.f32 %v61, 0.0
  %v78 = vmax.f32 %v62, 0.0
  %v79 = vmax.f32 %v63, 0.0
  %v80 = vmax.f32 %v64, 0.0
  %v81 = vmax.f32 %v65, 0.0
  %v82 = vmax.f32 %v66, 0.0
  %v83 = vmax.f32 %v67, 0.0
  %v84 = vmax.f32 %v68, 0.0
  %v85 = vmax.f32 %v69, 0.0
  %v86 = vmax.f32 %v70, 0.0
  %v87 = vmax.f32 %v71, 0.0
  %v88 = vmax.f32 %v72, 0.0
  %v89 = vmax.f32 %v73, 0.0
  %v90 = vmax.f32 %v74, 0.0
  %v91 = vmax.f32 %v75, 0.0
  %v92 = vpack.c.bf16 %v77, %v76
  %v93 = vpack.c.bf16 %v79, %v78
  %v94 = vpack.c.bf16 %v81, %v80
  %v95 = vpack.c.bf16 %v83, %v82
  %v96 = vpack.c.bf16 %v85, %v84
  %v97 = vpack.c.bf16 %v87, %v86
  %v98 = vpack.c.bf16 %v89, %v88
  %v99 = vpack.c.bf16 %v91, %v90
  %v108 = vunpack.c.l.b16 %v92
  %v109 = vunpack.c.h.b16 %v92
  %v110 = vunpack.c.l.b16 %v93
  %v111 = vunpack.c.h.b16 %v93
  %v112 = vunpack.c.l.b16 %v94
  %v113 = vunpack.c.h.b16 %v94
  %v114 = vunpack.c.l.b16 %v95
  %v115 = vunpack.c.h.b16 %v95
  %v116 = vunpack.c.l.b16 %v96
  %v117 = vunpack.c.h.b16 %v96
  %v118 = vunpack.c.l.b16 %v97
  %v119 = vunpack.c.h.b16 %v97
  %v120 = vunpack.c.l.b16 %v98
  %v121 = vunpack.c.h.b16 %v98
  %v122 = vunpack.c.l.b16 %v99
  %v123 = vunpack.c.h.b16 %v99
  %v124 = vpack.c.b16 %v108, %v108
  %v125 = vpack.c.b16 %v109, %v109
  %v126 = vpack.c.b16 %v110, %v110
  %v127 = vpack.c.b16 %v111, %v111
  %v128 = vpack.c.b16 %v112, %v112
  %v129 = vpack.c.b16 %v113, %v113
  %v130 = vpack.c.b16 %v114, %v114
  %v131 = vpack.c.b16 %v115, %v115
  %v132 = vpack.c.b16 %v116, %v116
  %v133 = vpack.c.b16 %v117, %v117
  %v134 = vpack.c.b16 %v118, %v118
  %v135 = vpack.c.b16 %v119, %v119
  %v136 = vpack.c.b16 %v120, %v120
  %v137 = vpack.c.b16 %v121, %v121
  %v138 = vpack.c.b16 %v122, %v122
  %v139 = vpack.c.b16 %v123, %v123
  %156 = vst [vmem:[%s3] sm:$0xf] %v124
  %157 = vst [vmem:[%s3 + $0x4] sm:$0xf] %v125
  %158 = vst [vmem:[%s3 + $0x8] sm:$0xf] %v126
  %159 = vst [vmem:[%s3 + $0xc] sm:$0xf] %v127
  %160 = vst [vmem:[%s3 + $0x10] sm:$0xf] %v128
  %161 = vst [vmem:[%s3 + $0x14] sm:$0xf] %v129
  %162 = vst [vmem:[%s3 + $0x18] sm:$0xf] %v130
  %163 = vst [vmem:[%s3 + $0x1c] sm:$0xf] %v131
  %164 = vst [vmem:[%s3 + $0x20] sm:$0xf] %v132
  %165 = vst [vmem:[%s3 + $0x24] sm:$0xf] %v133
  %166 = vst [vmem:[%s3 + $0x28] sm:$0xf] %v134
  %167 = vst [vmem:[%s3 + $0x2c] sm:$0xf] %v135
  %168 = vst [vmem:[%s3 + $0x30] sm:$0xf] %v136
  %169 = vst [vmem:[%s3 + $0x34] sm:$0xf] %v137
  %170 = vst [vmem:[%s3 + $0x38] sm:$0xf] %v138
  %171 = vst [vmem:[%s3 + $0x3c] sm:$0xf] %v139
  // Predicated region
  $region14: #{netg_celeba_forward.12} parent=0 // pred_check
    _
  $region15: #{netg_celeba_forward.12} parent=0 // pred_check_branch
    %173 = sbr.rel (0) target = $region17
  $region16: #{netg_celeba_forward.12} parent=0 // pred_region
    _
  $region17: #{netg_celeba_forward.12} parent=0 // pred_fallthru
    _
  // Predicated region
  $region18: #{netg_celeba_forward.12} parent=0 // pred_check
    _
  $region19: #{netg_celeba_forward.12} parent=0 // pred_check_branch
    %175 = sbr.rel (0) target = $region21
  $region20: #{netg_celeba_forward.12} parent=0 // pred_region
    _
  $region21: #{netg_celeba_forward.12} parent=0 // pred_fallthru
    _

// kernel: netg_celeba_forward.13
$region0: #{netg_celeba_forward.13}
  #allocation0 [shape = 'u32[]', space=smem, size = 0x4, offset = 0x4, fixed_abs, tag = 'smem constant byte address 0x4 - core index']
  #allocation1 [shape = 'u32[144,128]{1,0:T(1,128)}', space=vmem, size = 0x12000, scoped, tag = 'internal scratch']
  %s0 = inlined_call_operand.vmem [shape: bf16[4,128,128], index: 0, kind: input, shape index: {}]
  %s1 = inlined_call_operand.vmem [shape: bf16[4,128,128], index: 1, kind: input, shape index: {}]
  %s2 = inlined_call_operand.vmem [shape: f32[4,128,128], index: 2, kind: output, shape index: {}]
  %s3 = sld [smem:[#allocation0]]
  $region41: #{netg_celeba_forward.13} parent=0
    _
  %s5 = ssub.s32 1, %s3
  %s6 = scalar_select 0, %s5, %s3
  loop: start=0, step=1, limit=6
  $region2: #{netg_celeba_forward.13} parent=0 // loop_pre_header
    _
  $region3: #{netg_celeba_forward.13} parent=0 // loop_header
    %s8 = sphi 0, %s12
    %p9 = scmp.ge.s32.totalorder %s8, 6
    %s15 = sphi 0, %s27
    %s16 = sphi 0, %s23
    %s17 = sphi 0, %s15
    %s18 = sphi 0, %s16
    %s19 = sphi 0, %s17
    %s20 = sphi 0, %s18
    %s32 = sphi 0, %s34
    %s35 = sphi 0, %s32
    %s36 = sphi 0, %s35
    %s52 = sphi 0, %s36
    %s58 = sphi 0, %s60
    %s61 = sphi 0, %s58
    %s62 = sphi 0, %s61
    %s78 = sphi 0, %s62
    %s86 = sphi 0, %s88
    %s89 = sphi 0, %s86
    %s90 = sphi 0, %s89
    %s106 = sphi 0, %s90
  $region4: #{netg_celeba_forward.13} parent=0 // loop_header_branch
    %11 = sbr.rel (%p9) target = $region8
  $region5: #{netg_celeba_forward.13} parent=0 // loop_body
    %s13 = ssub.s32 %s8, 1
    %s14 = ssub.s32 %s8, 2
    %s21 = sadd.s32 1, %s16
    %p22 = scmp.ge.s32.totalorder %s21, 1
    %s23 = scalar_select %p22, 0, %s21
    %s24 = sadd.s32 1, %s15
    %s25 = scalar_select %p22, %s24, %s15
    %p26 = scmp.ge.s32.totalorder %s25, 4
    %s27 = scalar_select %p26, 0, %s25
    %s28 = ssub.s32 %s15, %s27
    %s29 = ssub.s32 %s16, %s23
    %s30 = sor.u32 %s28, %s29
    %p31 = scmp.eq.s32.totalorder %s30, 0
    %s33 = sadd.s32 %s32, 1
    %s34 = scalar_select %p31, %s32, %s33
    %p37 = pneg %p31
    %p38 = scmp.eq.s32.totalorder %s8, 3
    %p39 = por %p37, %p38
    %p40 = scmp.ne.s32.totalorder %s32, %s35
    %p41 = scmp.eq.s32.totalorder %s8, 0
    %p42 = por %p40, %p41
    %p43 = scmp.ne.s32.totalorder %s32, %s35
    %p44 = scmp.eq.s32.totalorder %s13, 3
    %p45 = por %p43, %p44
    %p46 = scmp.ne.s32.totalorder %s35, %s36
    %p47 = scmp.eq.s32.totalorder %s13, 0
    %p48 = por %p46, %p47
    %p49 = scmp.ne.s32.totalorder %s35, %s36
    %p50 = scmp.eq.s32.totalorder %s14, 3
    %p51 = por %p49, %p50
    %p53 = scmp.ne.s32.totalorder %s36, %s52
    %p54 = scmp.eq.s32.totalorder %s14, 0
    %p55 = por %p53, %p54
    %s56 = ssub.s32 %s15, %s27
    %p57 = scmp.eq.s32.totalorder %s56, 0
    %s59 = sadd.s32 %s58, 1
    %s60 = scalar_select %p57, %s58, %s59
    %p63 = pneg %p57
    %p64 = scmp.eq.s32.totalorder %s8, 3
    %p65 = por %p63, %p64
    %p66 = scmp.ne.s32.totalorder %s58, %s61
    %p67 = scmp.eq.s32.totalorder %s8, 0
    %p68 = por %p66, %p67
    %p69 = scmp.ne.s32.totalorder %s58, %s61
    %p70 = scmp.eq.s32.totalorder %s13, 3
    %p71 = por %p69, %p70
    %p72 = scmp.ne.s32.totalorder %s61, %s62
    %p73 = scmp.eq.s32.totalorder %s13, 0
    %p74 = por %p72, %p73
    %p75 = scmp.ne.s32.totalorder %s61, %s62
    %p76 = scmp.eq.s32.totalorder %s14, 3
    %p77 = por %p75, %p76
    %p79 = scmp.ne.s32.totalorder %s62, %s78
    %p80 = scmp.eq.s32.totalorder %s14, 0
    %p81 = por %p79, %p80
    %s82 = ssub.s32 %s15, %s27
    %s83 = ssub.s32 %s16, %s23
    %s84 = sor.u32 %s82, %s83
    %p85 = scmp.eq.s32.totalorder %s84, 0
    %s87 = sadd.s32 %s86, 1
    %s88 = scalar_select %p85, %s86, %s87
    %p91 = pneg %p85
    %p92 = scmp.eq.s32.totalorder %s8, 3
    %p93 = por %p91, %p92
    %p94 = scmp.ne.s32.totalorder %s86, %s89
    %p95 = scmp.eq.s32.totalorder %s8, 0
    %p96 = por %p94, %p95
    %p97 = scmp.ne.s32.totalorder %s86, %s89
    %p98 = scmp.eq.s32.totalorder %s13, 3
    %p99 = por %p97, %p98
    %p100 = scmp.ne.s32.totalorder %s89, %s90
    %p101 = scmp.eq.s32.totalorder %s13, 0
    %p102 = por %p100, %p101
    %p103 = scmp.ne.s32.totalorder %s89, %s90
    %p104 = scmp.eq.s32.totalorder %s14, 3
    %p105 = por %p103, %p104
    %p107 = scmp.ne.s32.totalorder %s90, %s106
    %p108 = scmp.eq.s32.totalorder %s14, 0
    %p109 = por %p107, %p108
    %p110 = scmp.le.s32.totalorder 1, %s8
    %p111 = scmp.lt.s32.totalorder %s8, 5
    %p112 = pnand %p110, %p111
    %p113 = pneg %p112
    // Predicated region
    $region9: #{netg_celeba_forward.13} parent=5 // pred_check
      _
    $region10: #{netg_celeba_forward.13} parent=5 // pred_check_branch
      %115 = sbr.rel (%p112) target = $region12
    $region11: #{netg_celeba_forward.13} parent=5 // pred_region
      %s116 = ssub.s32 %s8, 1
    $region12: #{netg_celeba_forward.13} parent=5 // pred_fallthru
      _
    %p117 = scmp.lt.s32.totalorder %s8, 4
    // Predicated region
    $region13: #{netg_celeba_forward.13} parent=5 // pred_check
      %p118 = pneg %p117
    $region14: #{netg_celeba_forward.13} parent=5 // pred_check_branch
      %120 = sbr.rel (%p118) target = $region16
    $region15: #{netg_celeba_forward.13} parent=5 // pred_region
      // Predicated region
      $region17: #{netg_celeba_forward.13} parent=15 // pred_check
        %p121 = pneg %p42
      $region18: #{netg_celeba_forward.13} parent=15 // pred_check_branch
        %123 = sbr.rel (%p121) target = $region20
      $region19: #{netg_celeba_forward.13} parent=15 // pred_region
        %s124 = smul.u32 16, %s16
        %p125 = scmp.lt.s32.totalorder %s15, 3
        %s126 = scalar_select %p125, %s15, 3
        %p127 = scmp.lt.s32.totalorder %s124, 15
        %s128 = scalar_select %p127, %s124, 15
        %s129 = smul.addr %s126, 16
        %s130 = sadd.s32 %s128, %s129
        %s131 = smul.addr %s130, 4
        %s132 = scalar_lea.vmem %s0, %s131
        %s133 = smul.u32 16, %s16
      $region20: #{netg_celeba_forward.13} parent=15 // pred_fallthru
        _
      // Predicated region
      $region21: #{netg_celeba_forward.13} parent=15 // pred_check
        %p134 = pneg %p68
      $region22: #{netg_celeba_forward.13} parent=15 // pred_check_branch
        %136 = sbr.rel (%p134) target = $region24
      $region23: #{netg_celeba_forward.13} parent=15 // pred_region
        %p137 = scmp.lt.s32.totalorder %s15, 3
        %s138 = scalar_select %p137, %s15, 3
        %s139 = smul.addr %s138, 16
        %s140 = smul.addr %s139, 4
        %s141 = scalar_lea.vmem %s1, %s140
      $region24: #{netg_celeba_forward.13} parent=15 // pred_fallthru
        _
    $region16: #{netg_celeba_forward.13} parent=5 // pred_fallthru
      _
    %p142 = scmp.le.s32.totalorder 1, %s8
    %p143 = scmp.lt.s32.totalorder %s8, 5
    %p144 = pnand %p142, %p143
    %p145 = pneg %p144
    // Predicated region
    $region25: #{netg_celeba_forward.13} parent=5 // pred_check
      _
    $region26: #{netg_celeba_forward.13} parent=5 // pred_check_branch
      %147 = sbr.rel (%p144) target = $region28
    $region27: #{netg_celeba_forward.13} parent=5 // pred_region
      %s148 = ssub.s32 %s8, 1
      %s149 = smul.u32 16, %s18
      %p150 = scmp.lt.s32.totalorder %s17, 3
      %s151 = scalar_select %p150, %s17, 3
      %p152 = scmp.lt.s32.totalorder %s149, 15
      %s153 = scalar_select %p152, %s149, 15
      %s154 = smul.addr %s151, 16
      %s155 = sadd.s32 %s153, %s154
      %s156 = smul.addr %s155, 4
      %s157 = scalar_lea.vmem %s0, %s156
      %p158 = pneg %p48
      %p159 = pneg %p45
      %p160 = scmp.lt.s32.totalorder %s17, 3
      %s161 = scalar_select %p160, %s17, 3
      %s162 = smul.addr %s161, 16
      %s163 = smul.addr %s162, 4
      %s164 = scalar_lea.vmem %s1, %s163
      %p165 = pneg %p74
      %p166 = pneg %p71
      %p167 = pneg %p102
      %p168 = pneg %p99
      %s169 = smul.u32 16, %s18
      %p170 = scmp.lt.s32.totalorder %s17, 3
      %s171 = scalar_select %p170, %s17, 3
      %p172 = scmp.lt.s32.totalorder %s169, 15
      %s173 = scalar_select %p172, %s169, 15
      %s174 = smul.addr %s171, 16
      %s175 = sadd.s32 %s173, %s174
      %s176 = smul.addr %s175, 8
      %s177 = scalar_lea.vmem %s2, %s176
      %s178 = smul.u32 16, %s18
      %p179 = scmp.lt.s32.totalorder %s17, 3
      %s180 = scalar_select %p179, %s17, 3
      %p181 = scmp.lt.s32.totalorder %s178, 15
      %s182 = scalar_select %p181, %s178, 15
      %s183 = smul.addr %s180, 16
      %s184 = sadd.s32 %s182, %s183
      %s185 = smul.addr %s184, 4
      %s186 = scalar_lea.vmem %s0, %s185
      %s187 = smul.u32 16, %s18
      %p188 = scmp.lt.s32.totalorder %s17, 3
      %s189 = scalar_select %p188, %s17, 3
      %s190 = smul.addr %s189, 16
      %s191 = smul.addr %s190, 4
      %s192 = scalar_lea.vmem %s1, %s191
      %s193 = smul.u32 16, %s18
      %p194 = scmp.lt.s32.totalorder %s17, 3
      %s195 = scalar_select %p194, %s17, 3
      %p196 = scmp.lt.s32.totalorder %s193, 15
      %s197 = scalar_select %p196, %s193, 15
      %s198 = smul.addr %s195, 16
      %s199 = sadd.s32 %s197, %s198
      %s200 = smul.addr %s199, 8
      %s201 = scalar_lea.vmem %s2, %s200
      %s202 = smul.u32 16, %s18
      %v204 = vld [vmem:[%s186] sm:$0xf]
      %v205 = vld [vmem:[%s186 + $0x4] sm:$0xf]
      %v206 = vld [vmem:[%s186 + $0x8] sm:$0xf]
      %v207 = vld [vmem:[%s186 + $0xc] sm:$0xf]
      %v208 = vld [vmem:[%s186 + $0x10] sm:$0xf]
      %v209 = vld [vmem:[%s186 + $0x14] sm:$0xf]
      %v210 = vld [vmem:[%s186 + $0x18] sm:$0xf]
      %v211 = vld [vmem:[%s186 + $0x1c] sm:$0xf]
      %v212 = vld [vmem:[%s186 + $0x20] sm:$0xf]
      %v213 = vld [vmem:[%s186 + $0x24] sm:$0xf]
      %v214 = vld [vmem:[%s186 + $0x28] sm:$0xf]
      %v215 = vld [vmem:[%s186 + $0x2c] sm:$0xf]
      %v216 = vld [vmem:[%s186 + $0x30] sm:$0xf]
      %v217 = vld [vmem:[%s186 + $0x34] sm:$0xf]
      %v218 = vld [vmem:[%s186 + $0x38] sm:$0xf]
      %v219 = vld [vmem:[%s186 + $0x3c] sm:$0xf]
      %v220 = vld [vmem:[%s192] sm:$0xf]
      %v221 = vld [vmem:[%s192 + $0x4] sm:$0xf]
      %v222 = vld [vmem:[%s192 + $0x8] sm:$0xf]
      %v223 = vld [vmem:[%s192 + $0xc] sm:$0xf]
      %v224 = vld [vmem:[%s192 + $0x10] sm:$0xf]
      %v225 = vld [vmem:[%s192 + $0x14] sm:$0xf]
      %v226 = vld [vmem:[%s192 + $0x18] sm:$0xf]
      %v227 = vld [vmem:[%s192 + $0x1c] sm:$0xf]
      %v228 = vld [vmem:[%s192 + $0x20] sm:$0xf]
      %v229 = vld [vmem:[%s192 + $0x24] sm:$0xf]
      %v230 = vld [vmem:[%s192 + $0x28] sm:$0xf]
      %v231 = vld [vmem:[%s192 + $0x2c] sm:$0xf]
      %v232 = vld [vmem:[%s192 + $0x30] sm:$0xf]
      %v233 = vld [vmem:[%s192 + $0x34] sm:$0xf]
      %v234 = vld [vmem:[%s192 + $0x38] sm:$0xf]
      %v235 = vld [vmem:[%s192 + $0x3c] sm:$0xf]
      %v252 = vunpack.c.l.b16 %v204
      %v253 = vunpack.c.l.b16 %v205
      %v254 = vunpack.c.l.b16 %v206
      %v255 = vunpack.c.l.b16 %v207
      %v256 = vunpack.c.l.b16 %v208
      %v257 = vunpack.c.l.b16 %v209
      %v258 = vunpack.c.l.b16 %v210
      %v259 = vunpack.c.l.b16 %v211
      %v260 = vunpack.c.l.b16 %v212
      %v261 = vunpack.c.l.b16 %v213
      %v262 = vunpack.c.l.b16 %v214
      %v263 = vunpack.c.l.b16 %v215
      %v264 = vunpack.c.l.b16 %v216
      %v265 = vunpack.c.l.b16 %v217
      %v266 = vunpack.c.l.b16 %v218
      %v267 = vunpack.c.l.b16 %v219
      %v268 = vpack.c.b16 %v253, %v252
      %v269 = vpack.c.b16 %v255, %v254
      %v270 = vpack.c.b16 %v257, %v256
      %v271 = vpack.c.b16 %v259, %v258
      %v272 = vpack.c.b16 %v261, %v260
      %v273 = vpack.c.b16 %v263, %v262
      %v274 = vpack.c.b16 %v265, %v264
      %v275 = vpack.c.b16 %v267, %v266
      %v300 = vunpack.c.l.b16 %v220
      %v301 = vunpack.c.l.b16 %v221
      %v302 = vunpack.c.l.b16 %v222
      %v303 = vunpack.c.l.b16 %v223
      %v304 = vunpack.c.l.b16 %v224
      %v305 = vunpack.c.l.b16 %v225
      %v306 = vunpack.c.l.b16 %v226
      %v307 = vunpack.c.l.b16 %v227
      %v308 = vunpack.c.l.b16 %v228
      %v309 = vunpack.c.l.b16 %v229
      %v310 = vunpack.c.l.b16 %v230
      %v311 = vunpack.c.l.b16 %v231
      %v312 = vunpack.c.l.b16 %v232
      %v313 = vunpack.c.l.b16 %v233
      %v314 = vunpack.c.l.b16 %v234
      %v315 = vunpack.c.l.b16 %v235
      %v316 = vpack.c.b16 %v301, %v300
      %v317 = vpack.c.b16 %v303, %v302
      %v318 = vpack.c.b16 %v305, %v304
      %v319 = vpack.c.b16 %v307, %v306
      %v320 = vpack.c.b16 %v309, %v308
      %v321 = vpack.c.b16 %v311, %v310
      %v322 = vpack.c.b16 %v313, %v312
      %v323 = vpack.c.b16 %v315, %v314
      %332 = vmatprep.subr.bf16.mxu0 0
      %333 = vmatpush1.bf16.msra.mxu0 %v316
      %334 = vmatprep.subr.bf16.mxu0 0
      %335 = vmatpush1.bf16.msra.mxu0 %v317
      %336 = vmatprep.subr.bf16.mxu0 0
      %337 = vmatpush1.bf16.msra.mxu0 %v318
      %338 = vmatprep.subr.bf16.mxu0 0
      %339 = vmatpush1.bf16.msra.mxu0 %v319
      %340 = vmatprep.subr.bf16.mxu0 0
      %341 = vmatpush1.bf16.msra.mxu0 %v320
      %342 = vmatprep.subr.bf16.mxu0 0
      %343 = vmatpush1.bf16.msra.mxu0 %v321
      %344 = vmatprep.subr.bf16.mxu0 0
      %345 = vmatpush1.bf16.msra.mxu0 %v322
      %346 = vmatprep.subr.bf16.mxu0 0
      %347 = vmatpush1.bf16.msra.mxu0 %v323
      %348 = vmatprep.subr.bf16.mxu0 0
      %349 = vmatpush1.bf16.msra.mxu0 0
      %350 = vmatprep.subr.bf16.mxu0 0
      %351 = vmatpush1.bf16.msra.mxu0 0
      %352 = vmatprep.subr.bf16.mxu0 0
      %353 = vmatpush1.bf16.msra.mxu0 0
      %354 = vmatprep.subr.bf16.mxu0 0
      %355 = vmatpush1.bf16.msra.mxu0 0
      %356 = vmatprep.subr.bf16.mxu0 0
      %357 = vmatpush1.bf16.msra.mxu0 0
      %358 = vmatprep.subr.bf16.mxu0 0
      %359 = vmatpush1.bf16.msra.mxu0 0
      %360 = vmatprep.subr.bf16.mxu0 0
      %361 = vmatpush1.bf16.msra.mxu0 0
      %362 = vmatprep.subr.bf16.mxu0 0
      %363 = vmatpush1.bf16.msra.mxu0 0
      %364 = vmatprep.mubr.bf16.mxu0 0
      %365 = vmatmul.mubr.bf16.gmra.mrb[0].mxu0 %v268
      %v366 = vpop.f32.mrb[0].mxu0
      %v367 = vadd.f32 0.0, %v366
      %v368 = vpop.f32.mrb[0].mxu0
      %v369 = vpop.f32.mrb[0].mxu0
      %v370 = vadd.f32 0.0, %v369
      %v371 = vpop.f32.mrb[0].mxu0
      %372 = vmatprep.mubr.bf16.mxu0 0
      %373 = vmatmul.mubr.bf16.gmra.mrb[0].mxu0 %v269
      %v374 = vpop.f32.mrb[0].mxu0
      %v375 = vadd.f32 0.0, %v374
      %v376 = vpop.f32.mrb[0].mxu0
      %v377 = vpop.f32.mrb[0].mxu0
      %v378 = vadd.f32 0.0, %v377
      %v379 = vpop.f32.mrb[0].mxu0
      %380 = vmatprep.mubr.bf16.mxu0 0
      %381 = vmatmul.mubr.bf16.gmra.mrb[0].mxu0 %v270
      %v382 = vpop.f32.mrb[0].mxu0
      %v383 = vadd.f32 0.0, %v382
      %v384 = vpop.f32.mrb[0].mxu0
      %v385 = vpop.f32.mrb[0].mxu0
      %v386 = vadd.f32 0.0, %v385
      %v387 = vpop.f32.mrb[0].mxu0
      %388 = vmatprep.mubr.bf16.mxu0 0
      %389 = vmatmul.mubr.bf16.gmra.mrb[0].mxu0 %v271
      %v390 = vpop.f32.mrb[0].mxu0
      %v391 = vadd.f32 0.0, %v390
      %v392 = vpop.f32.mrb[0].mxu0
      %v393 = vpop.f32.mrb[0].mxu0
      %v394 = vadd.f32 0.0, %v393
      %v395 = vpop.f32.mrb[0].mxu0
      %396 = vmatprep.mubr.bf16.mxu0 0
      %397 = vmatmul.mubr.bf16.gmra.mrb[0].mxu0 %v272
      %v398 = vpop.f32.mrb[0].mxu0
      %v399 = vadd.f32 0.0, %v398
      %v400 = vpop.f32.mrb[0].mxu0
      %v401 = vpop.f32.mrb[0].mxu0
      %v402 = vadd.f32 0.0, %v401
      %v403 = vpop.f32.mrb[0].mxu0
      %404 = vmatprep.mubr.bf16.mxu0 0
      %405 = vmatmul.mubr.bf16.gmra.mrb[0].mxu0 %v273
      %v406 = vpop.f32.mrb[0].mxu0
      %v407 = vadd.f32 0.0, %v406
      %v408 = vpop.f32.mrb[0].mxu0
      %v409 = vpop.f32.mrb[0].mxu0
      %v410 = vadd.f32 0.0, %v409
      %v411 = vpop.f32.mrb[0].mxu0
      %412 = vmatprep.mubr.bf16.mxu0 0
      %413 = vmatmul.mubr.bf16.gmra.mrb[0].mxu0 %v274
      %v414 = vpop.f32.mrb[0].mxu0
      %v415 = vadd.f32 0.0, %v414
      %v416 = vpop.f32.mrb[0].mxu0
      %v417 = vpop.f32.mrb[0].mxu0
      %v418 = vadd.f32 0.0, %v417
      %v419 = vpop.f32.mrb[0].mxu0
      %420 = vmatprep.mubr.bf16.mxu0 0
      %421 = vmatmul.mubr.bf16.gmra.mrb[0].mxu0 %v275
      %v422 = vpop.f32.mrb[0].mxu0
      %v423 = vadd.f32 0.0, %v422
      %v424 = vpop.f32.mrb[0].mxu0
      %v425 = vpop.f32.mrb[0].mxu0
      %v426 = vadd.f32 0.0, %v425
      %v427 = vpop.f32.mrb[0].mxu0
      %428 = vdwg.mxu0
      %429 = vst [vmem:[%s201] sm:$0xff] %v367
      %430 = vst [vmem:[%s201 + $0x8] sm:$0xff] %v370
      %431 = vst [vmem:[%s201 + $0x10] sm:$0xff] %v375
      %432 = vst [vmem:[%s201 + $0x18] sm:$0xff] %v378
      %433 = vst [vmem:[%s201 + $0x20] sm:$0xff] %v383
      %434 = vst [vmem:[%s201 + $0x28] sm:$0xff] %v386
      %435 = vst [vmem:[%s201 + $0x30] sm:$0xff] %v391
      %436 = vst [vmem:[%s201 + $0x38] sm:$0xff] %v394
      %437 = vst [vmem:[%s201 + $0x40] sm:$0xff] %v399
      %438 = vst [vmem:[%s201 + $0x48] sm:$0xff] %v402
      %439 = vst [vmem:[%s201 + $0x50] sm:$0xff] %v407
      %440 = vst [vmem:[%s201 + $0x58] sm:$0xff] %v410
      %441 = vst [vmem:[%s201 + $0x60] sm:$0xff] %v415
      %442 = vst [vmem:[%s201 + $0x68] sm:$0xff] %v418
      %443 = vst [vmem:[%s201 + $0x70] sm:$0xff] %v423
      %444 = vst [vmem:[%s201 + $0x78] sm:$0xff] %v426
      %s445 = smul.u32 16, %s18
      %p446 = scmp.lt.s32.totalorder %s17, 3
      %s447 = scalar_select %p446, %s17, 3
      %p448 = scmp.lt.s32.totalorder %s445, 15
      %s449 = scalar_select %p448, %s445, 15
      %s450 = smul.addr %s447, 16
      %s451 = sadd.s32 %s449, %s450
      %s452 = smul.addr %s451, 8
      %s453 = scalar_lea.vmem %s2, %s452
      // Predicated region
      $region29: #{netg_celeba_forward.13} parent=27 // pred_check
        %p454 = pneg %p99
      $region30: #{netg_celeba_forward.13} parent=27 // pred_check_branch
        %456 = sbr.rel (%p454) target = $region32
      $region31: #{netg_celeba_forward.13} parent=27 // pred_region
        %s457 = smul.u32 16, %s18
      $region32: #{netg_celeba_forward.13} parent=27 // pred_fallthru
        _
    $region28: #{netg_celeba_forward.13} parent=5 // pred_fallthru
      _
    %p458 = scmp.le.s32.totalorder 2, %s8
    // Predicated region
    $region33: #{netg_celeba_forward.13} parent=5 // pred_check
      %p459 = pneg %p458
    $region34: #{netg_celeba_forward.13} parent=5 // pred_check_branch
      %461 = sbr.rel (%p459) target = $region36
    $region35: #{netg_celeba_forward.13} parent=5 // pred_region
      %s462 = ssub.s32 %s8, 2
      // Predicated region
      $region37: #{netg_celeba_forward.13} parent=35 // pred_check
        %p463 = pneg %p105
      $region38: #{netg_celeba_forward.13} parent=35 // pred_check_branch
        %465 = sbr.rel (%p463) target = $region40
      $region39: #{netg_celeba_forward.13} parent=35 // pred_region
        %s466 = smul.u32 16, %s20
        %p467 = scmp.lt.s32.totalorder %s19, 3
        %s468 = scalar_select %p467, %s19, 3
        %p469 = scmp.lt.s32.totalorder %s466, 15
        %s470 = scalar_select %p469, %s466, 15
        %s471 = smul.addr %s468, 16
        %s472 = sadd.s32 %s470, %s471
        %s473 = smul.addr %s472, 8
        %s474 = scalar_lea.vmem %s2, %s473
      $region40: #{netg_celeba_forward.13} parent=35 // pred_fallthru
        _
    $region36: #{netg_celeba_forward.13} parent=5 // pred_fallthru
      _
  $region6: #{netg_celeba_forward.13} parent=0 // loop_footer
    %s12 = sadd.s32 1, %s8
  $region7: #{netg_celeba_forward.13} parent=0 // loop_footer_branch
    %7 = sbr.rel target = $region3
  $region8: #{netg_celeba_forward.13} parent=0 // loop_exit
    _

// kernel: netg_celeba_forward.14
$region0: #{netg_celeba_forward.14}
  #allocation0 [shape = 'u32[]', space=smem, size = 0x4, offset = 0x4, fixed_abs, tag = 'smem constant byte address 0x4 - core index']
  #allocation1 [shape = 'u32[144,128]{1,0:T(1,128)}', space=vmem, size = 0x12000, scoped, tag = 'internal scratch']
  %s0 = inlined_call_operand.vmem [shape: f32[512,128], index: 0, kind: input, shape index: {}]
  %s1 = inlined_call_operand.vmem [shape: f32[1,128], index: 1, kind: input, shape index: {}]
  %s2 = inlined_call_operand.vmem [shape: f32[1,128], index: 2, kind: input, shape index: {}]
  %s3 = inlined_call_operand.vmem [shape: bf16[512,128], index: 3, kind: output, shape index: {}]
  %s4 = sld [smem:[#allocation0]]
  $region22: #{netg_celeba_forward.14} parent=0
    _
  %s6 = ssub.s32 1, %s4
  %s7 = scalar_select 0, %s6, %s4
  // Predicated region
  $region2: #{netg_celeba_forward.14} parent=0 // pred_check
    _
  $region3: #{netg_celeba_forward.14} parent=0 // pred_check_branch
    %9 = sbr.rel (0) target = $region5
  $region4: #{netg_celeba_forward.14} parent=0 // pred_region
    _
  $region5: #{netg_celeba_forward.14} parent=0 // pred_fallthru
    _
  // Predicated region
  $region6: #{netg_celeba_forward.14} parent=0 // pred_check
    _
  $region7: #{netg_celeba_forward.14} parent=0 // pred_check_branch
    %11 = sbr.rel (0) target = $region9
  $region8: #{netg_celeba_forward.14} parent=0 // pred_region
    _
  $region9: #{netg_celeba_forward.14} parent=0 // pred_fallthru
    _
  // Predicated region
  $region10: #{netg_celeba_forward.14} parent=0 // pred_check
    _
  $region11: #{netg_celeba_forward.14} parent=0 // pred_check_branch
    %13 = sbr.rel (0) target = $region13
  $region12: #{netg_celeba_forward.14} parent=0 // pred_region
    _
  $region13: #{netg_celeba_forward.14} parent=0 // pred_fallthru
    _
  %v14 = vld [vmem:[%s0] sm:$0xff]
  %v15 = vld [vmem:[%s0 + $0x8] sm:$0xff]
  %v16 = vld [vmem:[%s0 + $0x10] sm:$0xff]
  %v17 = vld [vmem:[%s0 + $0x18] sm:$0xff]
  %v18 = vld [vmem:[%s0 + $0x20] sm:$0xff]
  %v19 = vld [vmem:[%s0 + $0x28] sm:$0xff]
  %v20 = vld [vmem:[%s0 + $0x30] sm:$0xff]
  %v21 = vld [vmem:[%s0 + $0x38] sm:$0xff]
  %v22 = vld [vmem:[%s0 + $0x40] sm:$0xff]
  %v23 = vld [vmem:[%s0 + $0x48] sm:$0xff]
  %v24 = vld [vmem:[%s0 + $0x50] sm:$0xff]
  %v25 = vld [vmem:[%s0 + $0x58] sm:$0xff]
  %v26 = vld [vmem:[%s0 + $0x60] sm:$0xff]
  %v27 = vld [vmem:[%s0 + $0x68] sm:$0xff]
  %v28 = vld [vmem:[%s0 + $0x70] sm:$0xff]
  %v29 = vld [vmem:[%s0 + $0x78] sm:$0xff]
  %v30 = vld [vmem:[%s0 + $0x80] sm:$0xff]
  %v31 = vld [vmem:[%s0 + $0x88] sm:$0xff]
  %v32 = vld [vmem:[%s0 + $0x90] sm:$0xff]
  %v33 = vld [vmem:[%s0 + $0x98] sm:$0xff]
  %v34 = vld [vmem:[%s0 + $0xa0] sm:$0xff]
  %v35 = vld [vmem:[%s0 + $0xa8] sm:$0xff]
  %v36 = vld [vmem:[%s0 + $0xb0] sm:$0xff]
  %v37 = vld [vmem:[%s0 + $0xb8] sm:$0xff]
  %v38 = vld [vmem:[%s0 + $0xc0] sm:$0xff]
  %v39 = vld [vmem:[%s0 + $0xc8] sm:$0xff]
  %v40 = vld [vmem:[%s0 + $0xd0] sm:$0xff]
  %v41 = vld [vmem:[%s0 + $0xd8] sm:$0xff]
  %v42 = vld [vmem:[%s0 + $0xe0] sm:$0xff]
  %v43 = vld [vmem:[%s0 + $0xe8] sm:$0xff]
  %v44 = vld [vmem:[%s0 + $0xf0] sm:$0xff]
  %v45 = vld [vmem:[%s0 + $0xf8] sm:$0xff]
  %v46 = vld [vmem:[%s0 + $0x100] sm:$0xff]
  %v47 = vld [vmem:[%s0 + $0x108] sm:$0xff]
  %v48 = vld [vmem:[%s0 + $0x110] sm:$0xff]
  %v49 = vld [vmem:[%s0 + $0x118] sm:$0xff]
  %v50 = vld [vmem:[%s0 + $0x120] sm:$0xff]
  %v51 = vld [vmem:[%s0 + $0x128] sm:$0xff]
  %v52 = vld [vmem:[%s0 + $0x130] sm:$0xff]
  %v53 = vld [vmem:[%s0 + $0x138] sm:$0xff]
  %v54 = vld [vmem:[%s0 + $0x140] sm:$0xff]
  %v55 = vld [vmem:[%s0 + $0x148] sm:$0xff]
  %v56 = vld [vmem:[%s0 + $0x150] sm:$0xff]
  %v57 = vld [vmem:[%s0 + $0x158] sm:$0xff]
  %v58 = vld [vmem:[%s0 + $0x160] sm:$0xff]
  %v59 = vld [vmem:[%s0 + $0x168] sm:$0xff]
  %v60 = vld [vmem:[%s0 + $0x170] sm:$0xff]
  %v61 = vld [vmem:[%s0 + $0x178] sm:$0xff]
  %v62 = vld [vmem:[%s0 + $0x180] sm:$0xff]
  %v63 = vld [vmem:[%s0 + $0x188] sm:$0xff]
  %v64 = vld [vmem:[%s0 + $0x190] sm:$0xff]
  %v65 = vld [vmem:[%s0 + $0x198] sm:$0xff]
  %v66 = vld [vmem:[%s0 + $0x1a0] sm:$0xff]
  %v67 = vld [vmem:[%s0 + $0x1a8] sm:$0xff]
  %v68 = vld [vmem:[%s0 + $0x1b0] sm:$0xff]
  %v69 = vld [vmem:[%s0 + $0x1b8] sm:$0xff]
  %v70 = vld [vmem:[%s0 + $0x1c0] sm:$0xff]
  %v71 = vld [vmem:[%s0 + $0x1c8] sm:$0xff]
  %v72 = vld [vmem:[%s0 + $0x1d0] sm:$0xff]
  %v73 = vld [vmem:[%s0 + $0x1d8] sm:$0xff]
  %v74 = vld [vmem:[%s0 + $0x1e0] sm:$0xff]
  %v75 = vld [vmem:[%s0 + $0x1e8] sm:$0xff]
  %v76 = vld [vmem:[%s0 + $0x1f0] sm:$0xff]
  %v77 = vld [vmem:[%s0 + $0x1f8] sm:$0xff]
  %v78 = vld [vmem:[%s1] sm:$0x1]
  %v80 = vlaneseq
  %v81 = vshrl.u32 %v80, 7
  %v82 = vsub.s32 0, %v81
  %v83 = vrot.slane %v78, %v82
  %v85 = vmul.f32 %v14, %v83
  %v86 = vmul.f32 %v15, %v83
  %v87 = vmul.f32 %v16, %v83
  %v88 = vmul.f32 %v17, %v83
  %v89 = vmul.f32 %v18, %v83
  %v90 = vmul.f32 %v19, %v83
  %v91 = vmul.f32 %v20, %v83
  %v92 = vmul.f32 %v21, %v83
  %v93 = vmul.f32 %v22, %v83
  %v94 = vmul.f32 %v23, %v83
  %v95 = vmul.f32 %v24, %v83
  %v96 = vmul.f32 %v25, %v83
  %v97 = vmul.f32 %v26, %v83
  %v98 = vmul.f32 %v27, %v83
  %v99 = vmul.f32 %v28, %v83
  %v100 = vmul.f32 %v29, %v83
  %v101 = vmul.f32 %v30, %v83
  %v102 = vmul.f32 %v31, %v83
  %v103 = vmul.f32 %v32, %v83
  %v104 = vmul.f32 %v33, %v83
  %v105 = vmul.f32 %v34, %v83
  %v106 = vmul.f32 %v35, %v83
  %v107 = vmul.f32 %v36, %v83
  %v108 = vmul.f32 %v37, %v83
  %v109 = vmul.f32 %v38, %v83
  %v110 = vmul.f32 %v39, %v83
  %v111 = vmul.f32 %v40, %v83
  %v112 = vmul.f32 %v41, %v83
  %v113 = vmul.f32 %v42, %v83
  %v114 = vmul.f32 %v43, %v83
  %v115 = vmul.f32 %v44, %v83
  %v116 = vmul.f32 %v45, %v83
  %v117 = vmul.f32 %v46, %v83
  %v118 = vmul.f32 %v47, %v83
  %v119 = vmul.f32 %v48, %v83
  %v120 = vmul.f32 %v49, %v83
  %v121 = vmul.f32 %v50, %v83
  %v122 = vmul.f32 %v51, %v83
  %v123 = vmul.f32 %v52, %v83
  %v124 = vmul.f32 %v53, %v83
  %v125 = vmul.f32 %v54, %v83
  %v126 = vmul.f32 %v55, %v83
  %v127 = vmul.f32 %v56, %v83
  %v128 = vmul.f32 %v57, %v83
  %v129 = vmul.f32 %v58, %v83
  %v130 = vmul.f32 %v59, %v83
  %v131 = vmul.f32 %v60, %v83
  %v132 = vmul.f32 %v61, %v83
  %v133 = vmul.f32 %v62, %v83
  %v134 = vmul.f32 %v63, %v83
  %v135 = vmul.f32 %v64, %v83
  %v136 = vmul.f32 %v65, %v83
  %v137 = vmul.f32 %v66, %v83
  %v138 = vmul.f32 %v67, %v83
  %v139 = vmul.f32 %v68, %v83
  %v140 = vmul.f32 %v69, %v83
  %v141 = vmul.f32 %v70, %v83
  %v142 = vmul.f32 %v71, %v83
  %v143 = vmul.f32 %v72, %v83
  %v144 = vmul.f32 %v73, %v83
  %v145 = vmul.f32 %v74, %v83
  %v146 = vmul.f32 %v75, %v83
  %v147 = vmul.f32 %v76, %v83
  %v148 = vmul.f32 %v77, %v83
  %v149 = vld [vmem:[%s2] sm:$0x1]
  %v151 = vlaneseq
  %v152 = vshrl.u32 %v151, 7
  %v153 = vsub.s32 0, %v152
  %v154 = vrot.slane %v149, %v153
  %v156 = vadd.f32 %v85, %v154
  %v157 = vadd.f32 %v86, %v154
  %v158 = vadd.f32 %v87, %v154
  %v159 = vadd.f32 %v88, %v154
  %v160 = vadd.f32 %v89, %v154
  %v161 = vadd.f32 %v90, %v154
  %v162 = vadd.f32 %v91, %v154
  %v163 = vadd.f32 %v92, %v154
  %v164 = vadd.f32 %v93, %v154
  %v165 = vadd.f32 %v94, %v154
  %v166 = vadd.f32 %v95, %v154
  %v167 = vadd.f32 %v96, %v154
  %v168 = vadd.f32 %v97, %v154
  %v169 = vadd.f32 %v98, %v154
  %v170 = vadd.f32 %v99, %v154
  %v171 = vadd.f32 %v100, %v154
  %v172 = vadd.f32 %v101, %v154
  %v173 = vadd.f32 %v102, %v154
  %v174 = vadd.f32 %v103, %v154
  %v175 = vadd.f32 %v104, %v154
  %v176 = vadd.f32 %v105, %v154
  %v177 = vadd.f32 %v106, %v154
  %v178 = vadd.f32 %v107, %v154
  %v179 = vadd.f32 %v108, %v154
  %v180 = vadd.f32 %v109, %v154
  %v181 = vadd.f32 %v110, %v154
  %v182 = vadd.f32 %v111, %v154
  %v183 = vadd.f32 %v112, %v154
  %v184 = vadd.f32 %v113, %v154
  %v185 = vadd.f32 %v114, %v154
  %v186 = vadd.f32 %v115, %v154
  %v187 = vadd.f32 %v116, %v154
  %v188 = vadd.f32 %v117, %v154
  %v189 = vadd.f32 %v118, %v154
  %v190 = vadd.f32 %v119, %v154
  %v191 = vadd.f32 %v120, %v154
  %v192 = vadd.f32 %v121, %v154
  %v193 = vadd.f32 %v122, %v154
  %v194 = vadd.f32 %v123, %v154
  %v195 = vadd.f32 %v124, %v154
  %v196 = vadd.f32 %v125, %v154
  %v197 = vadd.f32 %v126, %v154
  %v198 = vadd.f32 %v127, %v154
  %v199 = vadd.f32 %v128, %v154
  %v200 = vadd.f32 %v129, %v154
  %v201 = vadd.f32 %v130, %v154
  %v202 = vadd.f32 %v131, %v154
  %v203 = vadd.f32 %v132, %v154
  %v204 = vadd.f32 %v133, %v154
  %v205 = vadd.f32 %v134, %v154
  %v206 = vadd.f32 %v135, %v154
  %v207 = vadd.f32 %v136, %v154
  %v208 = vadd.f32 %v137, %v154
  %v209 = vadd.f32 %v138, %v154
  %v210 = vadd.f32 %v139, %v154
  %v211 = vadd.f32 %v140, %v154
  %v212 = vadd.f32 %v141, %v154
  %v213 = vadd.f32 %v142, %v154
  %v214 = vadd.f32 %v143, %v154
  %v215 = vadd.f32 %v144, %v154
  %v216 = vadd.f32 %v145, %v154
  %v217 = vadd.f32 %v146, %v154
  %v218 = vadd.f32 %v147, %v154
  %v219 = vadd.f32 %v148, %v154
  %v220 = vmax.f32 %v156, 0.0
  %v221 = vmax.f32 %v157, 0.0
  %v222 = vmax.f32 %v158, 0.0
  %v223 = vmax.f32 %v159, 0.0
  %v224 = vmax.f32 %v160, 0.0
  %v225 = vmax.f32 %v161, 0.0
  %v226 = vmax.f32 %v162, 0.0
  %v227 = vmax.f32 %v163, 0.0
  %v228 = vmax.f32 %v164, 0.0
  %v229 = vmax.f32 %v165, 0.0
  %v230 = vmax.f32 %v166, 0.0
  %v231 = vmax.f32 %v167, 0.0
  %v232 = vmax.f32 %v168, 0.0
  %v233 = vmax.f32 %v169, 0.0
  %v234 = vmax.f32 %v170, 0.0
  %v235 = vmax.f32 %v171, 0.0
  %v236 = vmax.f32 %v172, 0.0
  %v237 = vmax.f32 %v173, 0.0
  %v238 = vmax.f32 %v174, 0.0
  %v239 = vmax.f32 %v175, 0.0
  %v240 = vmax.f32 %v176, 0.0
  %v241 = vmax.f32 %v177, 0.0
  %v242 = vmax.f32 %v178, 0.0
  %v243 = vmax.f32 %v179, 0.0
  %v244 = vmax.f32 %v180, 0.0
  %v245 = vmax.f32 %v181, 0.0
  %v246 = vmax.f32 %v182, 0.0
  %v247 = vmax.f32 %v183, 0.0
  %v248 = vmax.f32 %v184, 0.0
  %v249 = vmax.f32 %v185, 0.0
  %v250 = vmax.f32 %v186, 0.0
  %v251 = vmax.f32 %v187, 0.0
  %v252 = vmax.f32 %v188, 0.0
  %v253 = vmax.f32 %v189, 0.0
  %v254 = vmax.f32 %v190, 0.0
  %v255 = vmax.f32 %v191, 0.0
  %v256 = vmax.f32 %v192, 0.0
  %v257 = vmax.f32 %v193, 0.0
  %v258 = vmax.f32 %v194, 0.0
  %v259 = vmax.f32 %v195, 0.0
  %v260 = vmax.f32 %v196, 0.0
  %v261 = vmax.f32 %v197, 0.0
  %v262 = vmax.f32 %v198, 0.0
  %v263 = vmax.f32 %v199, 0.0
  %v264 = vmax.f32 %v200, 0.0
  %v265 = vmax.f32 %v201, 0.0
  %v266 = vmax.f32 %v202, 0.0
  %v267 = vmax.f32 %v203, 0.0
  %v268 = vmax.f32 %v204, 0.0
  %v269 = vmax.f32 %v205, 0.0
  %v270 = vmax.f32 %v206, 0.0
  %v271 = vmax.f32 %v207, 0.0
  %v272 = vmax.f32 %v208, 0.0
  %v273 = vmax.f32 %v209, 0.0
  %v274 = vmax.f32 %v210, 0.0
  %v275 = vmax.f32 %v211, 0.0
  %v276 = vmax.f32 %v212, 0.0
  %v277 = vmax.f32 %v213, 0.0
  %v278 = vmax.f32 %v214, 0.0
  %v279 = vmax.f32 %v215, 0.0
  %v280 = vmax.f32 %v216, 0.0
  %v281 = vmax.f32 %v217, 0.0
  %v282 = vmax.f32 %v218, 0.0
  %v283 = vmax.f32 %v219, 0.0
  %v284 = vpack.c.bf16 %v221, %v220
  %v285 = vpack.c.bf16 %v223, %v222
  %v286 = vpack.c.bf16 %v225, %v224
  %v287 = vpack.c.bf16 %v227, %v226
  %v288 = vpack.c.bf16 %v229, %v228
  %v289 = vpack.c.bf16 %v231, %v230
  %v290 = vpack.c.bf16 %v233, %v232
  %v291 = vpack.c.bf16 %v235, %v234
  %v292 = vpack.c.bf16 %v237, %v236
  %v293 = vpack.c.bf16 %v239, %v238
  %v294 = vpack.c.bf16 %v241, %v240
  %v295 = vpack.c.bf16 %v243, %v242
  %v296 = vpack.c.bf16 %v245, %v244
  %v297 = vpack.c.bf16 %v247, %v246
  %v298 = vpack.c.bf16 %v249, %v248
  %v299 = vpack.c.bf16 %v251, %v250
  %v300 = vpack.c.bf16 %v253, %v252
  %v301 = vpack.c.bf16 %v255, %v254
  %v302 = vpack.c.bf16 %v257, %v256
  %v303 = vpack.c.bf16 %v259, %v258
  %v304 = vpack.c.bf16 %v261, %v260
  %v305 = vpack.c.bf16 %v263, %v262
  %v306 = vpack.c.bf16 %v265, %v264
  %v307 = vpack.c.bf16 %v267, %v266
  %v308 = vpack.c.bf16 %v269, %v268
  %v309 = vpack.c.bf16 %v271, %v270
  %v310 = vpack.c.bf16 %v273, %v272
  %v311 = vpack.c.bf16 %v275, %v274
  %v312 = vpack.c.bf16 %v277, %v276
  %v313 = vpack.c.bf16 %v279, %v278
  %v314 = vpack.c.bf16 %v281, %v280
  %v315 = vpack.c.bf16 %v283, %v282
  %v348 = vunpack.c.l.b16 %v284
  %v349 = vunpack.c.h.b16 %v284
  %v350 = vunpack.c.l.b16 %v285
  %v351 = vunpack.c.h.b16 %v285
  %v352 = vunpack.c.l.b16 %v286
  %v353 = vunpack.c.h.b16 %v286
  %v354 = vunpack.c.l.b16 %v287
  %v355 = vunpack.c.h.b16 %v287
  %v356 = vunpack.c.l.b16 %v288
  %v357 = vunpack.c.h.b16 %v288
  %v358 = vunpack.c.l.b16 %v289
  %v359 = vunpack.c.h.b16 %v289
  %v360 = vunpack.c.l.b16 %v290
  %v361 = vunpack.c.h.b16 %v290
  %v362 = vunpack.c.l.b16 %v291
  %v363 = vunpack.c.h.b16 %v291
  %v364 = vunpack.c.l.b16 %v292
  %v365 = vunpack.c.h.b16 %v292
  %v366 = vunpack.c.l.b16 %v293
  %v367 = vunpack.c.h.b16 %v293
  %v368 = vunpack.c.l.b16 %v294
  %v369 = vunpack.c.h.b16 %v294
  %v370 = vunpack.c.l.b16 %v295
  %v371 = vunpack.c.h.b16 %v295
  %v372 = vunpack.c.l.b16 %v296
  %v373 = vunpack.c.h.b16 %v296
  %v374 = vunpack.c.l.b16 %v297
  %v375 = vunpack.c.h.b16 %v297
  %v376 = vunpack.c.l.b16 %v298
  %v377 = vunpack.c.h.b16 %v298
  %v378 = vunpack.c.l.b16 %v299
  %v379 = vunpack.c.h.b16 %v299
  %v380 = vunpack.c.l.b16 %v300
  %v381 = vunpack.c.h.b16 %v300
  %v382 = vunpack.c.l.b16 %v301
  %v383 = vunpack.c.h.b16 %v301
  %v384 = vunpack.c.l.b16 %v302
  %v385 = vunpack.c.h.b16 %v302
  %v386 = vunpack.c.l.b16 %v303
  %v387 = vunpack.c.h.b16 %v303
  %v388 = vunpack.c.l.b16 %v304
  %v389 = vunpack.c.h.b16 %v304
  %v390 = vunpack.c.l.b16 %v305
  %v391 = vunpack.c.h.b16 %v305
  %v392 = vunpack.c.l.b16 %v306
  %v393 = vunpack.c.h.b16 %v306
  %v394 = vunpack.c.l.b16 %v307
  %v395 = vunpack.c.h.b16 %v307
  %v396 = vunpack.c.l.b16 %v308
  %v397 = vunpack.c.h.b16 %v308
  %v398 = vunpack.c.l.b16 %v309
  %v399 = vunpack.c.h.b16 %v309
  %v400 = vunpack.c.l.b16 %v310
  %v401 = vunpack.c.h.b16 %v310
  %v402 = vunpack.c.l.b16 %v311
  %v403 = vunpack.c.h.b16 %v311
  %v404 = vunpack.c.l.b16 %v312
  %v405 = vunpack.c.h.b16 %v312
  %v406 = vunpack.c.l.b16 %v313
  %v407 = vunpack.c.h.b16 %v313
  %v408 = vunpack.c.l.b16 %v314
  %v409 = vunpack.c.h.b16 %v314
  %v410 = vunpack.c.l.b16 %v315
  %v411 = vunpack.c.h.b16 %v315
  %v412 = vpack.c.b16 %v348, %v348
  %v413 = vpack.c.b16 %v349, %v349
  %v414 = vpack.c.b16 %v350, %v350
  %v415 = vpack.c.b16 %v351, %v351
  %v416 = vpack.c.b16 %v352, %v352
  %v417 = vpack.c.b16 %v353, %v353
  %v418 = vpack.c.b16 %v354, %v354
  %v419 = vpack.c.b16 %v355, %v355
  %v420 = vpack.c.b16 %v356, %v356
  %v421 = vpack.c.b16 %v357, %v357
  %v422 = vpack.c.b16 %v358, %v358
  %v423 = vpack.c.b16 %v359, %v359
  %v424 = vpack.c.b16 %v360, %v360
  %v425 = vpack.c.b16 %v361, %v361
  %v426 = vpack.c.b16 %v362, %v362
  %v427 = vpack.c.b16 %v363, %v363
  %v428 = vpack.c.b16 %v364, %v364
  %v429 = vpack.c.b16 %v365, %v365
  %v430 = vpack.c.b16 %v366, %v366
  %v431 = vpack.c.b16 %v367, %v367
  %v432 = vpack.c.b16 %v368, %v368
  %v433 = vpack.c.b16 %v369, %v369
  %v434 = vpack.c.b16 %v370, %v370
  %v435 = vpack.c.b16 %v371, %v371
  %v436 = vpack.c.b16 %v372, %v372
  %v437 = vpack.c.b16 %v373, %v373
  %v438 = vpack.c.b16 %v374, %v374
  %v439 = vpack.c.b16 %v375, %v375
  %v440 = vpack.c.b16 %v376, %v376
  %v441 = vpack.c.b16 %v377, %v377
  %v442 = vpack.c.b16 %v378, %v378
  %v443 = vpack.c.b16 %v379, %v379
  %v444 = vpack.c.b16 %v380, %v380
  %v445 = vpack.c.b16 %v381, %v381
  %v446 = vpack.c.b16 %v382, %v382
  %v447 = vpack.c.b16 %v383, %v383
  %v448 = vpack.c.b16 %v384, %v384
  %v449 = vpack.c.b16 %v385, %v385
  %v450 = vpack.c.b16 %v386, %v386
  %v451 = vpack.c.b16 %v387, %v387
  %v452 = vpack.c.b16 %v388, %v388
  %v453 = vpack.c.b16 %v389, %v389
  %v454 = vpack.c.b16 %v390, %v390
  %v455 = vpack.c.b16 %v391, %v391
  %v456 = vpack.c.b16 %v392, %v392
  %v457 = vpack.c.b16 %v393, %v393
  %v458 = vpack.c.b16 %v394, %v394
  %v459 = vpack.c.b16 %v395, %v395
  %v460 = vpack.c.b16 %v396, %v396
  %v461 = vpack.c.b16 %v397, %v397
  %v462 = vpack.c.b16 %v398, %v398
  %v463 = vpack.c.b16 %v399, %v399
  %v464 = vpack.c.b16 %v400, %v400
  %v465 = vpack.c.b16 %v401, %v401
  %v466 = vpack.c.b16 %v402, %v402
  %v467 = vpack.c.b16 %v403, %v403
  %v468 = vpack.c.b16 %v404, %v404
  %v469 = vpack.c.b16 %v405, %v405
  %v470 = vpack.c.b16 %v406, %v406
  %v471 = vpack.c.b16 %v407, %v407
  %v472 = vpack.c.b16 %v408, %v408
  %v473 = vpack.c.b16 %v409, %v409
  %v474 = vpack.c.b16 %v410, %v410
  %v475 = vpack.c.b16 %v411, %v411
  %540 = vst [vmem:[%s3] sm:$0xf] %v412
  %541 = vst [vmem:[%s3 + $0x4] sm:$0xf] %v413
  %542 = vst [vmem:[%s3 + $0x8] sm:$0xf] %v414
  %543 = vst [vmem:[%s3 + $0xc] sm:$0xf] %v415
  %544 = vst [vmem:[%s3 + $0x10] sm:$0xf] %v416
  %545 = vst [vmem:[%s3 + $0x14] sm:$0xf] %v417
  %546 = vst [vmem:[%s3 + $0x18] sm:$0xf] %v418
  %547 = vst [vmem:[%s3 + $0x1c] sm:$0xf] %v419
  %548 = vst [vmem:[%s3 + $0x20] sm:$0xf] %v420
  %549 = vst [vmem:[%s3 + $0x24] sm:$0xf] %v421
  %550 = vst [vmem:[%s3 + $0x28] sm:$0xf] %v422
  %551 = vst [vmem:[%s3 + $0x2c] sm:$0xf] %v423
  %552 = vst [vmem:[%s3 + $0x30] sm:$0xf] %v424
  %553 = vst [vmem:[%s3 + $0x34] sm:$0xf] %v425
  %554 = vst [vmem:[%s3 + $0x38] sm:$0xf] %v426
  %555 = vst [vmem:[%s3 + $0x3c] sm:$0xf] %v427
  %556 = vst [vmem:[%s3 + $0x40] sm:$0xf] %v428
  %557 = vst [vmem:[%s3 + $0x44] sm:$0xf] %v429
  %558 = vst [vmem:[%s3 + $0x48] sm:$0xf] %v430
  %559 = vst [vmem:[%s3 + $0x4c] sm:$0xf] %v431
  %560 = vst [vmem:[%s3 + $0x50] sm:$0xf] %v432
  %561 = vst [vmem:[%s3 + $0x54] sm:$0xf] %v433
  %562 = vst [vmem:[%s3 + $0x58] sm:$0xf] %v434
  %563 = vst [vmem:[%s3 + $0x5c] sm:$0xf] %v435
  %564 = vst [vmem:[%s3 + $0x60] sm:$0xf] %v436
  %565 = vst [vmem:[%s3 + $0x64] sm:$0xf] %v437
  %566 = vst [vmem:[%s3 + $0x68] sm:$0xf] %v438
  %567 = vst [vmem:[%s3 + $0x6c] sm:$0xf] %v439
  %568 = vst [vmem:[%s3 + $0x70] sm:$0xf] %v440
  %569 = vst [vmem:[%s3 + $0x74] sm:$0xf] %v441
  %570 = vst [vmem:[%s3 + $0x78] sm:$0xf] %v442
  %571 = vst [vmem:[%s3 + $0x7c] sm:$0xf] %v443
  %572 = vst [vmem:[%s3 + $0x80] sm:$0xf] %v444
  %573 = vst [vmem:[%s3 + $0x84] sm:$0xf] %v445
  %574 = vst [vmem:[%s3 + $0x88] sm:$0xf] %v446
  %575 = vst [vmem:[%s3 + $0x8c] sm:$0xf] %v447
  %576 = vst [vmem:[%s3 + $0x90] sm:$0xf] %v448
  %577 = vst [vmem:[%s3 + $0x94] sm:$0xf] %v449
  %578 = vst [vmem:[%s3 + $0x98] sm:$0xf] %v450
  %579 = vst [vmem:[%s3 + $0x9c] sm:$0xf] %v451
  %580 = vst [vmem:[%s3 + $0xa0] sm:$0xf] %v452
  %581 = vst [vmem:[%s3 + $0xa4] sm:$0xf] %v453
  %582 = vst [vmem:[%s3 + $0xa8] sm:$0xf] %v454
  %583 = vst [vmem:[%s3 + $0xac] sm:$0xf] %v455
  %584 = vst [vmem:[%s3 + $0xb0] sm:$0xf] %v456
  %585 = vst [vmem:[%s3 + $0xb4] sm:$0xf] %v457
  %586 = vst [vmem:[%s3 + $0xb8] sm:$0xf] %v458
  %587 = vst [vmem:[%s3 + $0xbc] sm:$0xf] %v459
  %588 = vst [vmem:[%s3 + $0xc0] sm:$0xf] %v460
  %589 = vst [vmem:[%s3 + $0xc4] sm:$0xf] %v461
  %590 = vst [vmem:[%s3 + $0xc8] sm:$0xf] %v462
  %591 = vst [vmem:[%s3 + $0xcc] sm:$0xf] %v463
  %592 = vst [vmem:[%s3 + $0xd0] sm:$0xf] %v464
  %593 = vst [vmem:[%s3 + $0xd4] sm:$0xf] %v465
  %594 = vst [vmem:[%s3 + $0xd8] sm:$0xf] %v466
  %595 = vst [vmem:[%s3 + $0xdc] sm:$0xf] %v467
  %596 = vst [vmem:[%s3 + $0xe0] sm:$0xf] %v468
  %597 = vst [vmem:[%s3 + $0xe4] sm:$0xf] %v469
  %598 = vst [vmem:[%s3 + $0xe8] sm:$0xf] %v470
  %599 = vst [vmem:[%s3 + $0xec] sm:$0xf] %v471
  %600 = vst [vmem:[%s3 + $0xf0] sm:$0xf] %v472
  %601 = vst [vmem:[%s3 + $0xf4] sm:$0xf] %v473
  %602 = vst [vmem:[%s3 + $0xf8] sm:$0xf] %v474
  %603 = vst [vmem:[%s3 + $0xfc] sm:$0xf] %v475
  // Predicated region
  $region14: #{netg_celeba_forward.14} parent=0 // pred_check
    _
  $region15: #{netg_celeba_forward.14} parent=0 // pred_check_branch
    %605 = sbr.rel (0) target = $region17
  $region16: #{netg_celeba_forward.14} parent=0 // pred_region
    _
  $region17: #{netg_celeba_forward.14} parent=0 // pred_fallthru
    _
  // Predicated region
  $region18: #{netg_celeba_forward.14} parent=0 // pred_check
    _
  $region19: #{netg_celeba_forward.14} parent=0 // pred_check_branch
    %607 = sbr.rel (0) target = $region21
  $region20: #{netg_celeba_forward.14} parent=0 // pred_region
    _
  $region21: #{netg_celeba_forward.14} parent=0 // pred_fallthru
    _

// kernel: netg_celeba_forward.15
$region0: #{netg_celeba_forward.15}
  #allocation0 [shape = 'u32[]', space=smem, size = 0x4, offset = 0x4, fixed_abs, tag = 'smem constant byte address 0x4 - core index']
  #allocation1 [shape = 'u32[144,128]{1,0:T(1,128)}', space=vmem, size = 0x12000, scoped, tag = 'internal scratch']
  %s0 = inlined_call_operand.vmem [shape: bf16[4,512,64], index: 0, kind: input, shape index: {}]
  %s1 = inlined_call_operand.vmem [shape: bf16[4,64,128], index: 1, kind: input, shape index: {}]
  %s2 = inlined_call_operand.vmem [shape: f32[4,512,128], index: 2, kind: output, shape index: {}]
  %s3 = sld [smem:[#allocation0]]
  $region41: #{netg_celeba_forward.15} parent=0
    _
  %s5 = ssub.s32 1, %s3
  %s6 = scalar_select 0, %s5, %s3
  loop: start=0, step=1, limit=6
  $region2: #{netg_celeba_forward.15} parent=0 // loop_pre_header
    _
  $region3: #{netg_celeba_forward.15} parent=0 // loop_header
    %s8 = sphi 0, %s12
    %p9 = scmp.ge.s32.totalorder %s8, 6
    %s15 = sphi 0, %s27
    %s16 = sphi 0, %s23
    %s17 = sphi 0, %s15
    %s18 = sphi 0, %s16
    %s19 = sphi 0, %s17
    %s20 = sphi 0, %s18
    %s32 = sphi 0, %s34
    %s35 = sphi 0, %s32
    %s36 = sphi 0, %s35
    %s52 = sphi 0, %s36
    %s58 = sphi 0, %s60
    %s61 = sphi 0, %s58
    %s62 = sphi 0, %s61
    %s78 = sphi 0, %s62
    %s86 = sphi 0, %s88
    %s89 = sphi 0, %s86
    %s90 = sphi 0, %s89
    %s106 = sphi 0, %s90
  $region4: #{netg_celeba_forward.15} parent=0 // loop_header_branch
    %11 = sbr.rel (%p9) target = $region8
  $region5: #{netg_celeba_forward.15} parent=0 // loop_body
    %s13 = ssub.s32 %s8, 1
    %s14 = ssub.s32 %s8, 2
    %s21 = sadd.s32 1, %s16
    %p22 = scmp.ge.s32.totalorder %s21, 1
    %s23 = scalar_select %p22, 0, %s21
    %s24 = sadd.s32 1, %s15
    %s25 = scalar_select %p22, %s24, %s15
    %p26 = scmp.ge.s32.totalorder %s25, 4
    %s27 = scalar_select %p26, 0, %s25
    %s28 = ssub.s32 %s15, %s27
    %s29 = ssub.s32 %s16, %s23
    %s30 = sor.u32 %s28, %s29
    %p31 = scmp.eq.s32.totalorder %s30, 0
    %s33 = sadd.s32 %s32, 1
    %s34 = scalar_select %p31, %s32, %s33
    %p37 = pneg %p31
    %p38 = scmp.eq.s32.totalorder %s8, 3
    %p39 = por %p37, %p38
    %p40 = scmp.ne.s32.totalorder %s32, %s35
    %p41 = scmp.eq.s32.totalorder %s8, 0
    %p42 = por %p40, %p41
    %p43 = scmp.ne.s32.totalorder %s32, %s35
    %p44 = scmp.eq.s32.totalorder %s13, 3
    %p45 = por %p43, %p44
    %p46 = scmp.ne.s32.totalorder %s35, %s36
    %p47 = scmp.eq.s32.totalorder %s13, 0
    %p48 = por %p46, %p47
    %p49 = scmp.ne.s32.totalorder %s35, %s36
    %p50 = scmp.eq.s32.totalorder %s14, 3
    %p51 = por %p49, %p50
    %p53 = scmp.ne.s32.totalorder %s36, %s52
    %p54 = scmp.eq.s32.totalorder %s14, 0
    %p55 = por %p53, %p54
    %s56 = ssub.s32 %s15, %s27
    %p57 = scmp.eq.s32.totalorder %s56, 0
    %s59 = sadd.s32 %s58, 1
    %s60 = scalar_select %p57, %s58, %s59
    %p63 = pneg %p57
    %p64 = scmp.eq.s32.totalorder %s8, 3
    %p65 = por %p63, %p64
    %p66 = scmp.ne.s32.totalorder %s58, %s61
    %p67 = scmp.eq.s32.totalorder %s8, 0
    %p68 = por %p66, %p67
    %p69 = scmp.ne.s32.totalorder %s58, %s61
    %p70 = scmp.eq.s32.totalorder %s13, 3
    %p71 = por %p69, %p70
    %p72 = scmp.ne.s32.totalorder %s61, %s62
    %p73 = scmp.eq.s32.totalorder %s13, 0
    %p74 = por %p72, %p73
    %p75 = scmp.ne.s32.totalorder %s61, %s62
    %p76 = scmp.eq.s32.totalorder %s14, 3
    %p77 = por %p75, %p76
    %p79 = scmp.ne.s32.totalorder %s62, %s78
    %p80 = scmp.eq.s32.totalorder %s14, 0
    %p81 = por %p79, %p80
    %s82 = ssub.s32 %s15, %s27
    %s83 = ssub.s32 %s16, %s23
    %s84 = sor.u32 %s82, %s83
    %p85 = scmp.eq.s32.totalorder %s84, 0
    %s87 = sadd.s32 %s86, 1
    %s88 = scalar_select %p85, %s86, %s87
    %p91 = pneg %p85
    %p92 = scmp.eq.s32.totalorder %s8, 3
    %p93 = por %p91, %p92
    %p94 = scmp.ne.s32.totalorder %s86, %s89
    %p95 = scmp.eq.s32.totalorder %s8, 0
    %p96 = por %p94, %p95
    %p97 = scmp.ne.s32.totalorder %s86, %s89
    %p98 = scmp.eq.s32.totalorder %s13, 3
    %p99 = por %p97, %p98
    %p100 = scmp.ne.s32.totalorder %s89, %s90
    %p101 = scmp.eq.s32.totalorder %s13, 0
    %p102 = por %p100, %p101
    %p103 = scmp.ne.s32.totalorder %s89, %s90
    %p104 = scmp.eq.s32.totalorder %s14, 3
    %p105 = por %p103, %p104
    %p107 = scmp.ne.s32.totalorder %s90, %s106
    %p108 = scmp.eq.s32.totalorder %s14, 0
    %p109 = por %p107, %p108
    %p110 = scmp.le.s32.totalorder 1, %s8
    %p111 = scmp.lt.s32.totalorder %s8, 5
    %p112 = pnand %p110, %p111
    %p113 = pneg %p112
    // Predicated region
    $region9: #{netg_celeba_forward.15} parent=5 // pred_check
      _
    $region10: #{netg_celeba_forward.15} parent=5 // pred_check_branch
      %115 = sbr.rel (%p112) target = $region12
    $region11: #{netg_celeba_forward.15} parent=5 // pred_region
      %s116 = ssub.s32 %s8, 1
    $region12: #{netg_celeba_forward.15} parent=5 // pred_fallthru
      _
    %p117 = scmp.lt.s32.totalorder %s8, 4
    // Predicated region
    $region13: #{netg_celeba_forward.15} parent=5 // pred_check
      %p118 = pneg %p117
    $region14: #{netg_celeba_forward.15} parent=5 // pred_check_branch
      %120 = sbr.rel (%p118) target = $region16
    $region15: #{netg_celeba_forward.15} parent=5 // pred_region
      // Predicated region
      $region17: #{netg_celeba_forward.15} parent=15 // pred_check
        %p121 = pneg %p42
      $region18: #{netg_celeba_forward.15} parent=15 // pred_check_branch
        %123 = sbr.rel (%p121) target = $region20
      $region19: #{netg_celeba_forward.15} parent=15 // pred_region
        %s124 = smul.u32 64, %s16
        %p125 = scmp.lt.s32.totalorder %s15, 3
        %s126 = scalar_select %p125, %s15, 3
        %p127 = scmp.lt.s32.totalorder %s124, 63
        %s128 = scalar_select %p127, %s124, 63
        %s129 = smul.addr %s126, 64
        %s130 = sadd.s32 %s128, %s129
        %s131 = smul.addr %s130, 4
        %s132 = scalar_lea.vmem %s0, %s131
        %s133 = smul.u32 64, %s16
      $region20: #{netg_celeba_forward.15} parent=15 // pred_fallthru
        _
      // Predicated region
      $region21: #{netg_celeba_forward.15} parent=15 // pred_check
        %p134 = pneg %p68
      $region22: #{netg_celeba_forward.15} parent=15 // pred_check_branch
        %136 = sbr.rel (%p134) target = $region24
      $region23: #{netg_celeba_forward.15} parent=15 // pred_region
        %p137 = scmp.lt.s32.totalorder %s15, 3
        %s138 = scalar_select %p137, %s15, 3
        %s139 = smul.addr %s138, 8
        %s140 = smul.addr %s139, 4
        %s141 = scalar_lea.vmem %s1, %s140
      $region24: #{netg_celeba_forward.15} parent=15 // pred_fallthru
        _
    $region16: #{netg_celeba_forward.15} parent=5 // pred_fallthru
      _
    %p142 = scmp.le.s32.totalorder 1, %s8
    %p143 = scmp.lt.s32.totalorder %s8, 5
    %p144 = pnand %p142, %p143
    %p145 = pneg %p144
    // Predicated region
    $region25: #{netg_celeba_forward.15} parent=5 // pred_check
      _
    $region26: #{netg_celeba_forward.15} parent=5 // pred_check_branch
      %147 = sbr.rel (%p144) target = $region28
    $region27: #{netg_celeba_forward.15} parent=5 // pred_region
      %s148 = ssub.s32 %s8, 1
      %s149 = smul.u32 64, %s18
      %p150 = scmp.lt.s32.totalorder %s17, 3
      %s151 = scalar_select %p150, %s17, 3
      %p152 = scmp.lt.s32.totalorder %s149, 63
      %s153 = scalar_select %p152, %s149, 63
      %s154 = smul.addr %s151, 64
      %s155 = sadd.s32 %s153, %s154
      %s156 = smul.addr %s155, 4
      %s157 = scalar_lea.vmem %s0, %s156
      %p158 = pneg %p48
      %p159 = pneg %p45
      %p160 = scmp.lt.s32.totalorder %s17, 3
      %s161 = scalar_select %p160, %s17, 3
      %s162 = smul.addr %s161, 8
      %s163 = smul.addr %s162, 4
      %s164 = scalar_lea.vmem %s1, %s163
      %p165 = pneg %p74
      %p166 = pneg %p71
      %p167 = pneg %p102
      %p168 = pneg %p99
      %s169 = smul.u32 64, %s18
      %p170 = scmp.lt.s32.totalorder %s17, 3
      %s171 = scalar_select %p170, %s17, 3
      %p172 = scmp.lt.s32.totalorder %s169, 63
      %s173 = scalar_select %p172, %s169, 63
      %s174 = smul.addr %s171, 64
      %s175 = sadd.s32 %s173, %s174
      %s176 = smul.addr %s175, 8
      %s177 = scalar_lea.vmem %s2, %s176
      %s178 = smul.u32 64, %s18
      %p179 = scmp.lt.s32.totalorder %s17, 3
      %s180 = scalar_select %p179, %s17, 3
      %p181 = scmp.lt.s32.totalorder %s178, 63
      %s182 = scalar_select %p181, %s178, 63
      %s183 = smul.addr %s180, 64
      %s184 = sadd.s32 %s182, %s183
      %s185 = smul.addr %s184, 4
      %s186 = scalar_lea.vmem %s0, %s185
      %s187 = smul.u32 64, %s18
      %p188 = scmp.lt.s32.totalorder %s17, 3
      %s189 = scalar_select %p188, %s17, 3
      %s190 = smul.addr %s189, 8
      %s191 = smul.addr %s190, 4
      %s192 = scalar_lea.vmem %s1, %s191
      %s193 = smul.u32 64, %s18
      %p194 = scmp.lt.s32.totalorder %s17, 3
      %s195 = scalar_select %p194, %s17, 3
      %p196 = scmp.lt.s32.totalorder %s193, 63
      %s197 = scalar_select %p196, %s193, 63
      %s198 = smul.addr %s195, 64
      %s199 = sadd.s32 %s197, %s198
      %s200 = smul.addr %s199, 8
      %s201 = scalar_lea.vmem %s2, %s200
      %s202 = smul.u32 64, %s18
      %v204 = vld [vmem:[%s186] sm:$0xf]
      %v205 = vld [vmem:[%s186 + $0x4] sm:$0xf]
      %v206 = vld [vmem:[%s186 + $0x8] sm:$0xf]
      %v207 = vld [vmem:[%s186 + $0xc] sm:$0xf]
      %v208 = vld [vmem:[%s186 + $0x10] sm:$0xf]
      %v209 = vld [vmem:[%s186 + $0x14] sm:$0xf]
      %v210 = vld [vmem:[%s186 + $0x18] sm:$0xf]
      %v211 = vld [vmem:[%s186 + $0x1c] sm:$0xf]
      %v212 = vld [vmem:[%s186 + $0x20] sm:$0xf]
      %v213 = vld [vmem:[%s186 + $0x24] sm:$0xf]
      %v214 = vld [vmem:[%s186 + $0x28] sm:$0xf]
      %v215 = vld [vmem:[%s186 + $0x2c] sm:$0xf]
      %v216 = vld [vmem:[%s186 + $0x30] sm:$0xf]
      %v217 = vld [vmem:[%s186 + $0x34] sm:$0xf]
      %v218 = vld [vmem:[%s186 + $0x38] sm:$0xf]
      %v219 = vld [vmem:[%s186 + $0x3c] sm:$0xf]
      %v220 = vld [vmem:[%s186 + $0x40] sm:$0xf]
      %v221 = vld [vmem:[%s186 + $0x44] sm:$0xf]
      %v222 = vld [vmem:[%s186 + $0x48] sm:$0xf]
      %v223 = vld [vmem:[%s186 + $0x4c] sm:$0xf]
      %v224 = vld [vmem:[%s186 + $0x50] sm:$0xf]
      %v225 = vld [vmem:[%s186 + $0x54] sm:$0xf]
      %v226 = vld [vmem:[%s186 + $0x58] sm:$0xf]
      %v227 = vld [vmem:[%s186 + $0x5c] sm:$0xf]
      %v228 = vld [vmem:[%s186 + $0x60] sm:$0xf]
      %v229 = vld [vmem:[%s186 + $0x64] sm:$0xf]
      %v230 = vld [vmem:[%s186 + $0x68] sm:$0xf]
      %v231 = vld [vmem:[%s186 + $0x6c] sm:$0xf]
      %v232 = vld [vmem:[%s186 + $0x70] sm:$0xf]
      %v233 = vld [vmem:[%s186 + $0x74] sm:$0xf]
      %v234 = vld [vmem:[%s186 + $0x78] sm:$0xf]
      %v235 = vld [vmem:[%s186 + $0x7c] sm:$0xf]
      %v236 = vld [vmem:[%s186 + $0x80] sm:$0xf]
      %v237 = vld [vmem:[%s186 + $0x84] sm:$0xf]
      %v238 = vld [vmem:[%s186 + $0x88] sm:$0xf]
      %v239 = vld [vmem:[%s186 + $0x8c] sm:$0xf]
      %v240 = vld [vmem:[%s186 + $0x90] sm:$0xf]
      %v241 = vld [vmem:[%s186 + $0x94] sm:$0xf]
      %v242 = vld [vmem:[%s186 + $0x98] sm:$0xf]
      %v243 = vld [vmem:[%s186 + $0x9c] sm:$0xf]
      %v244 = vld [vmem:[%s186 + $0xa0] sm:$0xf]
      %v245 = vld [vmem:[%s186 + $0xa4] sm:$0xf]
      %v246 = vld [vmem:[%s186 + $0xa8] sm:$0xf]
      %v247 = vld [vmem:[%s186 + $0xac] sm:$0xf]
      %v248 = vld [vmem:[%s186 + $0xb0] sm:$0xf]
      %v249 = vld [vmem:[%s186 + $0xb4] sm:$0xf]
      %v250 = vld [vmem:[%s186 + $0xb8] sm:$0xf]
      %v251 = vld [vmem:[%s186 + $0xbc] sm:$0xf]
      %v252 = vld [vmem:[%s186 + $0xc0] sm:$0xf]
      %v253 = vld [vmem:[%s186 + $0xc4] sm:$0xf]
      %v254 = vld [vmem:[%s186 + $0xc8] sm:$0xf]
      %v255 = vld [vmem:[%s186 + $0xcc] sm:$0xf]
      %v256 = vld [vmem:[%s186 + $0xd0] sm:$0xf]
      %v257 = vld [vmem:[%s186 + $0xd4] sm:$0xf]
      %v258 = vld [vmem:[%s186 + $0xd8] sm:$0xf]
      %v259 = vld [vmem:[%s186 + $0xdc] sm:$0xf]
      %v260 = vld [vmem:[%s186 + $0xe0] sm:$0xf]
      %v261 = vld [vmem:[%s186 + $0xe4] sm:$0xf]
      %v262 = vld [vmem:[%s186 + $0xe8] sm:$0xf]
      %v263 = vld [vmem:[%s186 + $0xec] sm:$0xf]
      %v264 = vld [vmem:[%s186 + $0xf0] sm:$0xf]
      %v265 = vld [vmem:[%s186 + $0xf4] sm:$0xf]
      %v266 = vld [vmem:[%s186 + $0xf8] sm:$0xf]
      %v267 = vld [vmem:[%s186 + $0xfc] sm:$0xf]
      %v268 = vld [vmem:[%s192] sm:$0xf]
      %v269 = vld [vmem:[%s192 + $0x4] sm:$0xf]
      %v270 = vld [vmem:[%s192 + $0x8] sm:$0xf]
      %v271 = vld [vmem:[%s192 + $0xc] sm:$0xf]
      %v272 = vld [vmem:[%s192 + $0x10] sm:$0xf]
      %v273 = vld [vmem:[%s192 + $0x14] sm:$0xf]
      %v274 = vld [vmem:[%s192 + $0x18] sm:$0xf]
      %v275 = vld [vmem:[%s192 + $0x1c] sm:$0xf]
      %v340 = vunpack.c.l.b16 %v204
      %v341 = vunpack.c.l.b16 %v205
      %v342 = vunpack.c.l.b16 %v206
      %v343 = vunpack.c.l.b16 %v207
      %v344 = vunpack.c.l.b16 %v208
      %v345 = vunpack.c.l.b16 %v209
      %v346 = vunpack.c.l.b16 %v210
      %v347 = vunpack.c.l.b16 %v211
      %v348 = vunpack.c.l.b16 %v212
      %v349 = vunpack.c.l.b16 %v213
      %v350 = vunpack.c.l.b16 %v214
      %v351 = vunpack.c.l.b16 %v215
      %v352 = vunpack.c.l.b16 %v216
      %v353 = vunpack.c.l.b16 %v217
      %v354 = vunpack.c.l.b16 %v218
      %v355 = vunpack.c.l.b16 %v219
      %v356 = vunpack.c.l.b16 %v220
      %v357 = vunpack.c.l.b16 %v221
      %v358 = vunpack.c.l.b16 %v222
      %v359 = vunpack.c.l.b16 %v223
      %v360 = vunpack.c.l.b16 %v224
      %v361 = vunpack.c.l.b16 %v225
      %v362 = vunpack.c.l.b16 %v226
      %v363 = vunpack.c.l.b16 %v227
      %v364 = vunpack.c.l.b16 %v228
      %v365 = vunpack.c.l.b16 %v229
      %v366 = vunpack.c.l.b16 %v230
      %v367 = vunpack.c.l.b16 %v231
      %v368 = vunpack.c.l.b16 %v232
      %v369 = vunpack.c.l.b16 %v233
      %v370 = vunpack.c.l.b16 %v234
      %v371 = vunpack.c.l.b16 %v235
      %v372 = vunpack.c.l.b16 %v236
      %v373 = vunpack.c.l.b16 %v237
      %v374 = vunpack.c.l.b16 %v238
      %v375 = vunpack.c.l.b16 %v239
      %v376 = vunpack.c.l.b16 %v240
      %v377 = vunpack.c.l.b16 %v241
      %v378 = vunpack.c.l.b16 %v242
      %v379 = vunpack.c.l.b16 %v243
      %v380 = vunpack.c.l.b16 %v244
      %v381 = vunpack.c.l.b16 %v245
      %v382 = vunpack.c.l.b16 %v246
      %v383 = vunpack.c.l.b16 %v247
      %v384 = vunpack.c.l.b16 %v248
      %v385 = vunpack.c.l.b16 %v249
      %v386 = vunpack.c.l.b16 %v250
      %v387 = vunpack.c.l.b16 %v251
      %v388 = vunpack.c.l.b16 %v252
      %v389 = vunpack.c.l.b16 %v253
      %v390 = vunpack.c.l.b16 %v254
      %v391 = vunpack.c.l.b16 %v255
      %v392 = vunpack.c.l.b16 %v256
      %v393 = vunpack.c.l.b16 %v257
      %v394 = vunpack.c.l.b16 %v258
      %v395 = vunpack.c.l.b16 %v259
      %v396 = vunpack.c.l.b16 %v260
      %v397 = vunpack.c.l.b16 %v261
      %v398 = vunpack.c.l.b16 %v262
      %v399 = vunpack.c.l.b16 %v263
      %v400 = vunpack.c.l.b16 %v264
      %v401 = vunpack.c.l.b16 %v265
      %v402 = vunpack.c.l.b16 %v266
      %v403 = vunpack.c.l.b16 %v267
      %v404 = vpack.c.b16 %v341, %v340
      %v405 = vpack.c.b16 %v343, %v342
      %v406 = vpack.c.b16 %v345, %v344
      %v407 = vpack.c.b16 %v347, %v346
      %v408 = vpack.c.b16 %v349, %v348
      %v409 = vpack.c.b16 %v351, %v350
      %v410 = vpack.c.b16 %v353, %v352
      %v411 = vpack.c.b16 %v355, %v354
      %v412 = vpack.c.b16 %v357, %v356
      %v413 = vpack.c.b16 %v359, %v358
      %v414 = vpack.c.b16 %v361, %v360
      %v415 = vpack.c.b16 %v363, %v362
      %v416 = vpack.c.b16 %v365, %v364
      %v417 = vpack.c.b16 %v367, %v366
      %v418 = vpack.c.b16 %v369, %v368
      %v419 = vpack.c.b16 %v371, %v370
      %v420 = vpack.c.b16 %v373, %v372
      %v421 = vpack.c.b16 %v375, %v374
      %v422 = vpack.c.b16 %v377, %v376
      %v423 = vpack.c.b16 %v379, %v378
      %v424 = vpack.c.b16 %v381, %v380
      %v425 = vpack.c.b16 %v383, %v382
      %v426 = vpack.c.b16 %v385, %v384
      %v427 = vpack.c.b16 %v387, %v386
      %v428 = vpack.c.b16 %v389, %v388
      %v429 = vpack.c.b16 %v391, %v390
      %v430 = vpack.c.b16 %v393, %v392
      %v431 = vpack.c.b16 %v395, %v394
      %v432 = vpack.c.b16 %v397, %v396
      %v433 = vpack.c.b16 %v399, %v398
      %v434 = vpack.c.b16 %v401, %v400
      %v435 = vpack.c.b16 %v403, %v402
      %v444 = vunpack.c.l.b16 %v268
      %v445 = vunpack.c.l.b16 %v269
      %v446 = vunpack.c.l.b16 %v270
      %v447 = vunpack.c.l.b16 %v271
      %v448 = vunpack.c.l.b16 %v272
      %v449 = vunpack.c.l.b16 %v273
      %v450 = vunpack.c.l.b16 %v274
      %v451 = vunpack.c.l.b16 %v275
      %v452 = vpack.c.b16 %v445, %v444
      %v453 = vpack.c.b16 %v447, %v446
      %v454 = vpack.c.b16 %v449, %v448
      %v455 = vpack.c.b16 %v451, %v450
      %vm460 = vcmask 523264
      %v462 = vsel %vm460, %v404, 0
      %v465 = vsel %vm460, %v405, 0
      %v468 = vsel %vm460, %v406, 0
      %v471 = vsel %vm460, %v407, 0
      %v474 = vsel %vm460, %v408, 0
      %v477 = vsel %vm460, %v409, 0
      %v480 = vsel %vm460, %v410, 0
      %v483 = vsel %vm460, %v411, 0
      %v486 = vsel %vm460, %v412, 0
      %v489 = vsel %vm460, %v413, 0
      %v492 = vsel %vm460, %v414, 0
      %v495 = vsel %vm460, %v415, 0
      %v498 = vsel %vm460, %v416, 0
      %v501 = vsel %vm460, %v417, 0
      %v504 = vsel %vm460, %v418, 0
      %v507 = vsel %vm460, %v419, 0
      %v510 = vsel %vm460, %v420, 0
      %v513 = vsel %vm460, %v421, 0
      %v516 = vsel %vm460, %v422, 0
      %v519 = vsel %vm460, %v423, 0
      %v522 = vsel %vm460, %v424, 0
      %v525 = vsel %vm460, %v425, 0
      %v528 = vsel %vm460, %v426, 0
      %v531 = vsel %vm460, %v427, 0
      %v534 = vsel %vm460, %v428, 0
      %v537 = vsel %vm460, %v429, 0
      %v540 = vsel %vm460, %v430, 0
      %v543 = vsel %vm460, %v431, 0
      %v546 = vsel %vm460, %v432, 0
      %v549 = vsel %vm460, %v433, 0
      %v552 = vsel %vm460, %v434, 0
      %v555 = vsel %vm460, %v435, 0
      %557 = vmatprep.subr.bf16.mxu0 0
      %558 = vmatpush1.bf16.msra.mxu0 %v452
      %559 = vmatprep.subr.bf16.mxu0 0
      %560 = vmatpush1.bf16.msra.mxu0 %v453
      %561 = vmatprep.subr.bf16.mxu0 0
      %562 = vmatpush1.bf16.msra.mxu0 %v454
      %563 = vmatprep.subr.bf16.mxu0 0
      %564 = vmatpush1.bf16.msra.mxu0 %v455
      %565 = vmatprep.subr.bf16.mxu0 0
      %566 = vmatpush1.bf16.msra.mxu0 0
      %567 = vmatprep.subr.bf16.mxu0 0
      %568 = vmatpush1.bf16.msra.mxu0 0
      %569 = vmatprep.subr.bf16.mxu0 0
      %570 = vmatpush1.bf16.msra.mxu0 0
      %571 = vmatprep.subr.bf16.mxu0 0
      %572 = vmatpush1.bf16.msra.mxu0 0
      %573 = vmatprep.subr.bf16.mxu0 0
      %574 = vmatpush1.bf16.msra.mxu0 0
      %575 = vmatprep.subr.bf16.mxu0 0
      %576 = vmatpush1.bf16.msra.mxu0 0
      %577 = vmatprep.subr.bf16.mxu0 0
      %578 = vmatpush1.bf16.msra.mxu0 0
      %579 = vmatprep.subr.bf16.mxu0 0
      %580 = vmatpush1.bf16.msra.mxu0 0
      %581 = vmatprep.subr.bf16.mxu0 0
      %582 = vmatpush1.bf16.msra.mxu0 0
      %583 = vmatprep.subr.bf16.mxu0 0
      %584 = vmatpush1.bf16.msra.mxu0 0
      %585 = vmatprep.subr.bf16.mxu0 0
      %586 = vmatpush1.bf16.msra.mxu0 0
      %587 = vmatprep.subr.bf16.mxu0 0
      %588 = vmatpush1.bf16.msra.mxu0 0
      %589 = vmatprep.mubr.bf16.mxu0 0
      %590 = vmatmul.mubr.bf16.gmra.mrb[0].mxu0 %v462
      %v591 = vpop.f32.mrb[0].mxu0
      %v592 = vadd.f32 0.0, %v591
      %v593 = vpop.f32.mrb[0].mxu0
      %v594 = vpop.f32.mrb[0].mxu0
      %v595 = vadd.f32 0.0, %v594
      %v596 = vpop.f32.mrb[0].mxu0
      %597 = vmatprep.mubr.bf16.mxu0 0
      %598 = vmatmul.mubr.bf16.gmra.mrb[0].mxu0 %v465
      %v599 = vpop.f32.mrb[0].mxu0
      %v600 = vadd.f32 0.0, %v599
      %v601 = vpop.f32.mrb[0].mxu0
      %v602 = vpop.f32.mrb[0].mxu0
      %v603 = vadd.f32 0.0, %v602
      %v604 = vpop.f32.mrb[0].mxu0
      %605 = vmatprep.mubr.bf16.mxu0 0
      %606 = vmatmul.mubr.bf16.gmra.mrb[0].mxu0 %v468
      %v607 = vpop.f32.mrb[0].mxu0
      %v608 = vadd.f32 0.0, %v607
      %v609 = vpop.f32.mrb[0].mxu0
      %v610 = vpop.f32.mrb[0].mxu0
      %v611 = vadd.f32 0.0, %v610
      %v612 = vpop.f32.mrb[0].mxu0
      %613 = vmatprep.mubr.bf16.mxu0 0
      %614 = vmatmul.mubr.bf16.gmra.mrb[0].mxu0 %v471
      %v615 = vpop.f32.mrb[0].mxu0
      %v616 = vadd.f32 0.0, %v615
      %v617 = vpop.f32.mrb[0].mxu0
      %v618 = vpop.f32.mrb[0].mxu0
      %v619 = vadd.f32 0.0, %v618
      %v620 = vpop.f32.mrb[0].mxu0
      %621 = vmatprep.mubr.bf16.mxu0 0
      %622 = vmatmul.mubr.bf16.gmra.mrb[0].mxu0 %v474
      %v623 = vpop.f32.mrb[0].mxu0
      %v624 = vadd.f32 0.0, %v623
      %v625 = vpop.f32.mrb[0].mxu0
      %v626 = vpop.f32.mrb[0].mxu0
      %v627 = vadd.f32 0.0, %v626
      %v628 = vpop.f32.mrb[0].mxu0
      %629 = vmatprep.mubr.bf16.mxu0 0
      %630 = vmatmul.mubr.bf16.gmra.mrb[0].mxu0 %v477
      %v631 = vpop.f32.mrb[0].mxu0
      %v632 = vadd.f32 0.0, %v631
      %v633 = vpop.f32.mrb[0].mxu0
      %v634 = vpop.f32.mrb[0].mxu0
      %v635 = vadd.f32 0.0, %v634
      %v636 = vpop.f32.mrb[0].mxu0
      %637 = vmatprep.mubr.bf16.mxu0 0
      %638 = vmatmul.mubr.bf16.gmra.mrb[0].mxu0 %v480
      %v639 = vpop.f32.mrb[0].mxu0
      %v640 = vadd.f32 0.0, %v639
      %v641 = vpop.f32.mrb[0].mxu0
      %v642 = vpop.f32.mrb[0].mxu0
      %v643 = vadd.f32 0.0, %v642
      %v644 = vpop.f32.mrb[0].mxu0
      %645 = vmatprep.mubr.bf16.mxu0 0
      %646 = vmatmul.mubr.bf16.gmra.mrb[0].mxu0 %v483
      %v647 = vpop.f32.mrb[0].mxu0
      %v648 = vadd.f32 0.0, %v647
      %v649 = vpop.f32.mrb[0].mxu0
      %v650 = vpop.f32.mrb[0].mxu0
      %v651 = vadd.f32 0.0, %v650
      %v652 = vpop.f32.mrb[0].mxu0
      %653 = vmatprep.mubr.bf16.mxu0 0
      %654 = vmatmul.mubr.bf16.gmra.mrb[0].mxu0 %v486
      %v655 = vpop.f32.mrb[0].mxu0
      %v656 = vadd.f32 0.0, %v655
      %v657 = vpop.f32.mrb[0].mxu0
      %v658 = vpop.f32.mrb[0].mxu0
      %v659 = vadd.f32 0.0, %v658
      %v660 = vpop.f32.mrb[0].mxu0
      %661 = vmatprep.mubr.bf16.mxu0 0
      %662 = vmatmul.mubr.bf16.gmra.mrb[0].mxu0 %v489
      %v663 = vpop.f32.mrb[0].mxu0
      %v664 = vadd.f32 0.0, %v663
      %v665 = vpop.f32.mrb[0].mxu0
      %v666 = vpop.f32.mrb[0].mxu0
      %v667 = vadd.f32 0.0, %v666
      %v668 = vpop.f32.mrb[0].mxu0
      %669 = vmatprep.mubr.bf16.mxu0 0
      %670 = vmatmul.mubr.bf16.gmra.mrb[0].mxu0 %v492
      %v671 = vpop.f32.mrb[0].mxu0
      %v672 = vadd.f32 0.0, %v671
      %v673 = vpop.f32.mrb[0].mxu0
      %v674 = vpop.f32.mrb[0].mxu0
      %v675 = vadd.f32 0.0, %v674
      %v676 = vpop.f32.mrb[0].mxu0
      %677 = vmatprep.mubr.bf16.mxu0 0
      %678 = vmatmul.mubr.bf16.gmra.mrb[0].mxu0 %v495
      %v679 = vpop.f32.mrb[0].mxu0
      %v680 = vadd.f32 0.0, %v679
      %v681 = vpop.f32.mrb[0].mxu0
      %v682 = vpop.f32.mrb[0].mxu0
      %v683 = vadd.f32 0.0, %v682
      %v684 = vpop.f32.mrb[0].mxu0
      %685 = vmatprep.mubr.bf16.mxu0 0
      %686 = vmatmul.mubr.bf16.gmra.mrb[0].mxu0 %v498
      %v687 = vpop.f32.mrb[0].mxu0
      %v688 = vadd.f32 0.0, %v687
      %v689 = vpop.f32.mrb[0].mxu0
      %v690 = vpop.f32.mrb[0].mxu0
      %v691 = vadd.f32 0.0, %v690
      %v692 = vpop.f32.mrb[0].mxu0
      %693 = vmatprep.mubr.bf16.mxu0 0
      %694 = vmatmul.mubr.bf16.gmra.mrb[0].mxu0 %v501
      %v695 = vpop.f32.mrb[0].mxu0
      %v696 = vadd.f32 0.0, %v695
      %v697 = vpop.f32.mrb[0].mxu0
      %v698 = vpop.f32.mrb[0].mxu0
      %v699 = vadd.f32 0.0, %v698
      %v700 = vpop.f32.mrb[0].mxu0
      %701 = vmatprep.mubr.bf16.mxu0 0
      %702 = vmatmul.mubr.bf16.gmra.mrb[0].mxu0 %v504
      %v703 = vpop.f32.mrb[0].mxu0
      %v704 = vadd.f32 0.0, %v703
      %v705 = vpop.f32.mrb[0].mxu0
      %v706 = vpop.f32.mrb[0].mxu0
      %v707 = vadd.f32 0.0, %v706
      %v708 = vpop.f32.mrb[0].mxu0
      %709 = vmatprep.mubr.bf16.mxu0 0
      %710 = vmatmul.mubr.bf16.gmra.mrb[0].mxu0 %v507
      %v711 = vpop.f32.mrb[0].mxu0
      %v712 = vadd.f32 0.0, %v711
      %v713 = vpop.f32.mrb[0].mxu0
      %v714 = vpop.f32.mrb[0].mxu0
      %v715 = vadd.f32 0.0, %v714
      %v716 = vpop.f32.mrb[0].mxu0
      %717 = vmatprep.mubr.bf16.mxu0 0
      %718 = vmatmul.mubr.bf16.gmra.mrb[0].mxu0 %v510
      %v719 = vpop.f32.mrb[0].mxu0
      %v720 = vadd.f32 0.0, %v719
      %v721 = vpop.f32.mrb[0].mxu0
      %v722 = vpop.f32.mrb[0].mxu0
      %v723 = vadd.f32 0.0, %v722
      %v724 = vpop.f32.mrb[0].mxu0
      %725 = vmatprep.mubr.bf16.mxu0 0
      %726 = vmatmul.mubr.bf16.gmra.mrb[0].mxu0 %v513
      %v727 = vpop.f32.mrb[0].mxu0
      %v728 = vadd.f32 0.0, %v727
      %v729 = vpop.f32.mrb[0].mxu0
      %v730 = vpop.f32.mrb[0].mxu0
      %v731 = vadd.f32 0.0, %v730
      %v732 = vpop.f32.mrb[0].mxu0
      %733 = vmatprep.mubr.bf16.mxu0 0
      %734 = vmatmul.mubr.bf16.gmra.mrb[0].mxu0 %v516
      %v735 = vpop.f32.mrb[0].mxu0
      %v736 = vadd.f32 0.0, %v735
      %v737 = vpop.f32.mrb[0].mxu0
      %v738 = vpop.f32.mrb[0].mxu0
      %v739 = vadd.f32 0.0, %v738
      %v740 = vpop.f32.mrb[0].mxu0
      %741 = vmatprep.mubr.bf16.mxu0 0
      %742 = vmatmul.mubr.bf16.gmra.mrb[0].mxu0 %v519
      %v743 = vpop.f32.mrb[0].mxu0
      %v744 = vadd.f32 0.0, %v743
      %v745 = vpop.f32.mrb[0].mxu0
      %v746 = vpop.f32.mrb[0].mxu0
      %v747 = vadd.f32 0.0, %v746
      %v748 = vpop.f32.mrb[0].mxu0
      %749 = vmatprep.mubr.bf16.mxu0 0
      %750 = vmatmul.mubr.bf16.gmra.mrb[0].mxu0 %v522
      %v751 = vpop.f32.mrb[0].mxu0
      %v752 = vadd.f32 0.0, %v751
      %v753 = vpop.f32.mrb[0].mxu0
      %v754 = vpop.f32.mrb[0].mxu0
      %v755 = vadd.f32 0.0, %v754
      %v756 = vpop.f32.mrb[0].mxu0
      %757 = vmatprep.mubr.bf16.mxu0 0
      %758 = vmatmul.mubr.bf16.gmra.mrb[0].mxu0 %v525
      %v759 = vpop.f32.mrb[0].mxu0
      %v760 = vadd.f32 0.0, %v759
      %v761 = vpop.f32.mrb[0].mxu0
      %v762 = vpop.f32.mrb[0].mxu0
      %v763 = vadd.f32 0.0, %v762
      %v764 = vpop.f32.mrb[0].mxu0
      %765 = vmatprep.mubr.bf16.mxu0 0
      %766 = vmatmul.mubr.bf16.gmra.mrb[0].mxu0 %v528
      %v767 = vpop.f32.mrb[0].mxu0
      %v768 = vadd.f32 0.0, %v767
      %v769 = vpop.f32.mrb[0].mxu0
      %v770 = vpop.f32.mrb[0].mxu0
      %v771 = vadd.f32 0.0, %v770
      %v772 = vpop.f32.mrb[0].mxu0
      %773 = vmatprep.mubr.bf16.mxu0 0
      %774 = vmatmul.mubr.bf16.gmra.mrb[0].mxu0 %v531
      %v775 = vpop.f32.mrb[0].mxu0
      %v776 = vadd.f32 0.0, %v775
      %v777 = vpop.f32.mrb[0].mxu0
      %v778 = vpop.f32.mrb[0].mxu0
      %v779 = vadd.f32 0.0, %v778
      %v780 = vpop.f32.mrb[0].mxu0
      %781 = vmatprep.mubr.bf16.mxu0 0
      %782 = vmatmul.mubr.bf16.gmra.mrb[0].mxu0 %v534
      %v783 = vpop.f32.mrb[0].mxu0
      %v784 = vadd.f32 0.0, %v783
      %v785 = vpop.f32.mrb[0].mxu0
      %v786 = vpop.f32.mrb[0].mxu0
      %v787 = vadd.f32 0.0, %v786
      %v788 = vpop.f32.mrb[0].mxu0
      %789 = vmatprep.mubr.bf16.mxu0 0
      %790 = vmatmul.mubr.bf16.gmra.mrb[0].mxu0 %v537
      %v791 = vpop.f32.mrb[0].mxu0
      %v792 = vadd.f32 0.0, %v791
      %v793 = vpop.f32.mrb[0].mxu0
      %v794 = vpop.f32.mrb[0].mxu0
      %v795 = vadd.f32 0.0, %v794
      %v796 = vpop.f32.mrb[0].mxu0
      %797 = vmatprep.mubr.bf16.mxu0 0
      %798 = vmatmul.mubr.bf16.gmra.mrb[0].mxu0 %v540
      %v799 = vpop.f32.mrb[0].mxu0
      %v800 = vadd.f32 0.0, %v799
      %v801 = vpop.f32.mrb[0].mxu0
      %v802 = vpop.f32.mrb[0].mxu0
      %v803 = vadd.f32 0.0, %v802
      %v804 = vpop.f32.mrb[0].mxu0
      %805 = vmatprep.mubr.bf16.mxu0 0
      %806 = vmatmul.mubr.bf16.gmra.mrb[0].mxu0 %v543
      %v807 = vpop.f32.mrb[0].mxu0
      %v808 = vadd.f32 0.0, %v807
      %v809 = vpop.f32.mrb[0].mxu0
      %v810 = vpop.f32.mrb[0].mxu0
      %v811 = vadd.f32 0.0, %v810
      %v812 = vpop.f32.mrb[0].mxu0
      %813 = vmatprep.mubr.bf16.mxu0 0
      %814 = vmatmul.mubr.bf16.gmra.mrb[0].mxu0 %v546
      %v815 = vpop.f32.mrb[0].mxu0
      %v816 = vadd.f32 0.0, %v815
      %v817 = vpop.f32.mrb[0].mxu0
      %v818 = vpop.f32.mrb[0].mxu0
      %v819 = vadd.f32 0.0, %v818
      %v820 = vpop.f32.mrb[0].mxu0
      %821 = vmatprep.mubr.bf16.mxu0 0
      %822 = vmatmul.mubr.bf16.gmra.mrb[0].mxu0 %v549
      %v823 = vpop.f32.mrb[0].mxu0
      %v824 = vadd.f32 0.0, %v823
      %v825 = vpop.f32.mrb[0].mxu0
      %v826 = vpop.f32.mrb[0].mxu0
      %v827 = vadd.f32 0.0, %v826
      %v828 = vpop.f32.mrb[0].mxu0
      %829 = vmatprep.mubr.bf16.mxu0 0
      %830 = vmatmul.mubr.bf16.gmra.mrb[0].mxu0 %v552
      %v831 = vpop.f32.mrb[0].mxu0
      %v832 = vadd.f32 0.0, %v831
      %v833 = vpop.f32.mrb[0].mxu0
      %v834 = vpop.f32.mrb[0].mxu0
      %v835 = vadd.f32 0.0, %v834
      %v836 = vpop.f32.mrb[0].mxu0
      %837 = vmatprep.mubr.bf16.mxu0 0
      %838 = vmatmul.mubr.bf16.gmra.mrb[0].mxu0 %v555
      %v839 = vpop.f32.mrb[0].mxu0
      %v840 = vadd.f32 0.0, %v839
      %v841 = vpop.f32.mrb[0].mxu0
      %v842 = vpop.f32.mrb[0].mxu0
      %v843 = vadd.f32 0.0, %v842
      %v844 = vpop.f32.mrb[0].mxu0
      %845 = vdwg.mxu0
      %846 = vst [vmem:[%s201] sm:$0xff] %v592
      %847 = vst [vmem:[%s201 + $0x8] sm:$0xff] %v595
      %848 = vst [vmem:[%s201 + $0x10] sm:$0xff] %v600
      %849 = vst [vmem:[%s201 + $0x18] sm:$0xff] %v603
      %850 = vst [vmem:[%s201 + $0x20] sm:$0xff] %v608
      %851 = vst [vmem:[%s201 + $0x28] sm:$0xff] %v611
      %852 = vst [vmem:[%s201 + $0x30] sm:$0xff] %v616
      %853 = vst [vmem:[%s201 + $0x38] sm:$0xff] %v619
      %854 = vst [vmem:[%s201 + $0x40] sm:$0xff] %v624
      %855 = vst [vmem:[%s201 + $0x48] sm:$0xff] %v627
      %856 = vst [vmem:[%s201 + $0x50] sm:$0xff] %v632
      %857 = vst [vmem:[%s201 + $0x58] sm:$0xff] %v635
      %858 = vst [vmem:[%s201 + $0x60] sm:$0xff] %v640
      %859 = vst [vmem:[%s201 + $0x68] sm:$0xff] %v643
      %860 = vst [vmem:[%s201 + $0x70] sm:$0xff] %v648
      %861 = vst [vmem:[%s201 + $0x78] sm:$0xff] %v651
      %862 = vst [vmem:[%s201 + $0x80] sm:$0xff] %v656
      %863 = vst [vmem:[%s201 + $0x88] sm:$0xff] %v659
      %864 = vst [vmem:[%s201 + $0x90] sm:$0xff] %v664
      %865 = vst [vmem:[%s201 + $0x98] sm:$0xff] %v667
      %866 = vst [vmem:[%s201 + $0xa0] sm:$0xff] %v672
      %867 = vst [vmem:[%s201 + $0xa8] sm:$0xff] %v675
      %868 = vst [vmem:[%s201 + $0xb0] sm:$0xff] %v680
      %869 = vst [vmem:[%s201 + $0xb8] sm:$0xff] %v683
      %870 = vst [vmem:[%s201 + $0xc0] sm:$0xff] %v688
      %871 = vst [vmem:[%s201 + $0xc8] sm:$0xff] %v691
      %872 = vst [vmem:[%s201 + $0xd0] sm:$0xff] %v696
      %873 = vst [vmem:[%s201 + $0xd8] sm:$0xff] %v699
      %874 = vst [vmem:[%s201 + $0xe0] sm:$0xff] %v704
      %875 = vst [vmem:[%s201 + $0xe8] sm:$0xff] %v707
      %876 = vst [vmem:[%s201 + $0xf0] sm:$0xff] %v712
      %877 = vst [vmem:[%s201 + $0xf8] sm:$0xff] %v715
      %878 = vst [vmem:[%s201 + $0x100] sm:$0xff] %v720
      %879 = vst [vmem:[%s201 + $0x108] sm:$0xff] %v723
      %880 = vst [vmem:[%s201 + $0x110] sm:$0xff] %v728
      %881 = vst [vmem:[%s201 + $0x118] sm:$0xff] %v731
      %882 = vst [vmem:[%s201 + $0x120] sm:$0xff] %v736
      %883 = vst [vmem:[%s201 + $0x128] sm:$0xff] %v739
      %884 = vst [vmem:[%s201 + $0x130] sm:$0xff] %v744
      %885 = vst [vmem:[%s201 + $0x138] sm:$0xff] %v747
      %886 = vst [vmem:[%s201 + $0x140] sm:$0xff] %v752
      %887 = vst [vmem:[%s201 + $0x148] sm:$0xff] %v755
      %888 = vst [vmem:[%s201 + $0x150] sm:$0xff] %v760
      %889 = vst [vmem:[%s201 + $0x158] sm:$0xff] %v763
      %890 = vst [vmem:[%s201 + $0x160] sm:$0xff] %v768
      %891 = vst [vmem:[%s201 + $0x168] sm:$0xff] %v771
      %892 = vst [vmem:[%s201 + $0x170] sm:$0xff] %v776
      %893 = vst [vmem:[%s201 + $0x178] sm:$0xff] %v779
      %894 = vst [vmem:[%s201 + $0x180] sm:$0xff] %v784
      %895 = vst [vmem:[%s201 + $0x188] sm:$0xff] %v787
      %896 = vst [vmem:[%s201 + $0x190] sm:$0xff] %v792
      %897 = vst [vmem:[%s201 + $0x198] sm:$0xff] %v795
      %898 = vst [vmem:[%s201 + $0x1a0] sm:$0xff] %v800
      %899 = vst [vmem:[%s201 + $0x1a8] sm:$0xff] %v803
      %900 = vst [vmem:[%s201 + $0x1b0] sm:$0xff] %v808
      %901 = vst [vmem:[%s201 + $0x1b8] sm:$0xff] %v811
      %902 = vst [vmem:[%s201 + $0x1c0] sm:$0xff] %v816
      %903 = vst [vmem:[%s201 + $0x1c8] sm:$0xff] %v819
      %904 = vst [vmem:[%s201 + $0x1d0] sm:$0xff] %v824
      %905 = vst [vmem:[%s201 + $0x1d8] sm:$0xff] %v827
      %906 = vst [vmem:[%s201 + $0x1e0] sm:$0xff] %v832
      %907 = vst [vmem:[%s201 + $0x1e8] sm:$0xff] %v835
      %908 = vst [vmem:[%s201 + $0x1f0] sm:$0xff] %v840
      %909 = vst [vmem:[%s201 + $0x1f8] sm:$0xff] %v843
      %s910 = smul.u32 64, %s18
      %p911 = scmp.lt.s32.totalorder %s17, 3
      %s912 = scalar_select %p911, %s17, 3
      %p913 = scmp.lt.s32.totalorder %s910, 63
      %s914 = scalar_select %p913, %s910, 63
      %s915 = smul.addr %s912, 64
      %s916 = sadd.s32 %s914, %s915
      %s917 = smul.addr %s916, 8
      %s918 = scalar_lea.vmem %s2, %s917
      // Predicated region
      $region29: #{netg_celeba_forward.15} parent=27 // pred_check
        %p919 = pneg %p99
      $region30: #{netg_celeba_forward.15} parent=27 // pred_check_branch
        %921 = sbr.rel (%p919) target = $region32
      $region31: #{netg_celeba_forward.15} parent=27 // pred_region
        %s922 = smul.u32 64, %s18
      $region32: #{netg_celeba_forward.15} parent=27 // pred_fallthru
        _
    $region28: #{netg_celeba_forward.15} parent=5 // pred_fallthru
      _
    %p923 = scmp.le.s32.totalorder 2, %s8
    // Predicated region
    $region33: #{netg_celeba_forward.15} parent=5 // pred_check
      %p924 = pneg %p923
    $region34: #{netg_celeba_forward.15} parent=5 // pred_check_branch
      %926 = sbr.rel (%p924) target = $region36
    $region35: #{netg_celeba_forward.15} parent=5 // pred_region
      %s927 = ssub.s32 %s8, 2
      // Predicated region
      $region37: #{netg_celeba_forward.15} parent=35 // pred_check
        %p928 = pneg %p105
      $region38: #{netg_celeba_forward.15} parent=35 // pred_check_branch
        %930 = sbr.rel (%p928) target = $region40
      $region39: #{netg_celeba_forward.15} parent=35 // pred_region
        %s931 = smul.u32 64, %s20
        %p932 = scmp.lt.s32.totalorder %s19, 3
        %s933 = scalar_select %p932, %s19, 3
        %p934 = scmp.lt.s32.totalorder %s931, 63
        %s935 = scalar_select %p934, %s931, 63
        %s936 = smul.addr %s933, 64
        %s937 = sadd.s32 %s935, %s936
        %s938 = smul.addr %s937, 8
        %s939 = scalar_lea.vmem %s2, %s938
      $region40: #{netg_celeba_forward.15} parent=35 // pred_fallthru
        _
    $region36: #{netg_celeba_forward.15} parent=5 // pred_fallthru
      _
  $region6: #{netg_celeba_forward.15} parent=0 // loop_footer
    %s12 = sadd.s32 1, %s8
  $region7: #{netg_celeba_forward.15} parent=0 // loop_footer_branch
    %7 = sbr.rel target = $region3
  $region8: #{netg_celeba_forward.15} parent=0 // loop_exit
    _

// kernel: netg_celeba_forward.16
$region0: #{netg_celeba_forward.16}
  #allocation0 [shape = 'u32[]', space=smem, size = 0x4, offset = 0x4, fixed_abs, tag = 'smem constant byte address 0x4 - core index']
  #allocation1 [shape = 'u32[144,128]{1,0:T(1,128)}', space=vmem, size = 0x12000, scoped, tag = 'internal scratch']
  %s0 = inlined_call_operand.vmem [shape: f32[2048,128], index: 0, kind: input, shape index: {}]
  %s1 = inlined_call_operand.vmem [shape: f32[1,128], index: 1, kind: input, shape index: {}]
  %s2 = inlined_call_operand.vmem [shape: f32[1,128], index: 2, kind: input, shape index: {}]
  %s3 = inlined_call_operand.vmem [shape: bf16[2048,128], index: 3, kind: output, shape index: {}]
  %s4 = sld [smem:[#allocation0]]
  $region45: #{netg_celeba_forward.16} parent=0
    _
  %s6 = ssub.s32 1, %s4
  %s7 = scalar_select 0, %s6, %s4
  loop: start=0, step=1, limit=6
  $region2: #{netg_celeba_forward.16} parent=0 // loop_pre_header
    _
  $region3: #{netg_celeba_forward.16} parent=0 // loop_header
    %s9 = sphi 0, %s13
    %p10 = scmp.ge.s32.totalorder %s9, 6
    %s19 = sphi 0, %s21
    %s22 = sphi 0, %s19
    %s23 = sphi 0, %s22
    %s39 = sphi 0, %s23
    %s43 = sphi 0, %s43
    %s45 = sphi 0, %s43
    %s46 = sphi 0, %s45
    %s60 = sphi 0, %s46
    %s64 = sphi 0, %s64
    %s66 = sphi 0, %s64
    %s67 = sphi 0, %s66
    %s81 = sphi 0, %s67
    %s87 = sphi 0, %s89
    %s90 = sphi 0, %s87
    %s91 = sphi 0, %s90
    %s107 = sphi 0, %s91
  $region4: #{netg_celeba_forward.16} parent=0 // loop_header_branch
    %12 = sbr.rel (%p10) target = $region8
  $region5: #{netg_celeba_forward.16} parent=0 // loop_body
    %s14 = ssub.s32 %s9, 1
    %s15 = ssub.s32 %s9, 2
    %s16 = sadd.s32 %s9, 1
    %s17 = ssub.s32 %s9, %s16
    %p18 = scmp.eq.s32.totalorder %s17, 0
    %s20 = sadd.s32 %s19, 1
    %s21 = scalar_select %p18, %s19, %s20
    %p24 = pneg %p18
    %p25 = scmp.eq.s32.totalorder %s9, 3
    %p26 = por %p24, %p25
    %p27 = scmp.ne.s32.totalorder %s19, %s22
    %p28 = scmp.eq.s32.totalorder %s9, 0
    %p29 = por %p27, %p28
    %p30 = scmp.ne.s32.totalorder %s19, %s22
    %p31 = scmp.eq.s32.totalorder %s14, 3
    %p32 = por %p30, %p31
    %p33 = scmp.ne.s32.totalorder %s22, %s23
    %p34 = scmp.eq.s32.totalorder %s14, 0
    %p35 = por %p33, %p34
    %p36 = scmp.ne.s32.totalorder %s22, %s23
    %p37 = scmp.eq.s32.totalorder %s15, 3
    %p38 = por %p36, %p37
    %p40 = scmp.ne.s32.totalorder %s23, %s39
    %p41 = scmp.eq.s32.totalorder %s15, 0
    %p42 = por %p40, %p41
    %s44 = sadd.s32 %s43, 1
    %p47 = scmp.eq.s32.totalorder %s9, 3
    %p48 = scmp.ne.s32.totalorder %s43, %s45
    %p49 = scmp.eq.s32.totalorder %s9, 0
    %p50 = por %p48, %p49
    %p51 = scmp.ne.s32.totalorder %s43, %s45
    %p52 = scmp.eq.s32.totalorder %s14, 3
    %p53 = por %p51, %p52
    %p54 = scmp.ne.s32.totalorder %s45, %s46
    %p55 = scmp.eq.s32.totalorder %s14, 0
    %p56 = por %p54, %p55
    %p57 = scmp.ne.s32.totalorder %s45, %s46
    %p58 = scmp.eq.s32.totalorder %s15, 3
    %p59 = por %p57, %p58
    %p61 = scmp.ne.s32.totalorder %s46, %s60
    %p62 = scmp.eq.s32.totalorder %s15, 0
    %p63 = por %p61, %p62
    %s65 = sadd.s32 %s64, 1
    %p68 = scmp.eq.s32.totalorder %s9, 3
    %p69 = scmp.ne.s32.totalorder %s64, %s66
    %p70 = scmp.eq.s32.totalorder %s9, 0
    %p71 = por %p69, %p70
    %p72 = scmp.ne.s32.totalorder %s64, %s66
    %p73 = scmp.eq.s32.totalorder %s14, 3
    %p74 = por %p72, %p73
    %p75 = scmp.ne.s32.totalorder %s66, %s67
    %p76 = scmp.eq.s32.totalorder %s14, 0
    %p77 = por %p75, %p76
    %p78 = scmp.ne.s32.totalorder %s66, %s67
    %p79 = scmp.eq.s32.totalorder %s15, 3
    %p80 = por %p78, %p79
    %p82 = scmp.ne.s32.totalorder %s67, %s81
    %p83 = scmp.eq.s32.totalorder %s15, 0
    %p84 = por %p82, %p83
    %s85 = ssub.s32 %s9, %s16
    %p86 = scmp.eq.s32.totalorder %s85, 0
    %s88 = sadd.s32 %s87, 1
    %s89 = scalar_select %p86, %s87, %s88
    %p92 = pneg %p86
    %p93 = scmp.eq.s32.totalorder %s9, 3
    %p94 = por %p92, %p93
    %p95 = scmp.ne.s32.totalorder %s87, %s90
    %p96 = scmp.eq.s32.totalorder %s9, 0
    %p97 = por %p95, %p96
    %p98 = scmp.ne.s32.totalorder %s87, %s90
    %p99 = scmp.eq.s32.totalorder %s14, 3
    %p100 = por %p98, %p99
    %p101 = scmp.ne.s32.totalorder %s90, %s91
    %p102 = scmp.eq.s32.totalorder %s14, 0
    %p103 = por %p101, %p102
    %p104 = scmp.ne.s32.totalorder %s90, %s91
    %p105 = scmp.eq.s32.totalorder %s15, 3
    %p106 = por %p104, %p105
    %p108 = scmp.ne.s32.totalorder %s91, %s107
    %p109 = scmp.eq.s32.totalorder %s15, 0
    %p110 = por %p108, %p109
    %p111 = scmp.le.s32.totalorder 1, %s9
    %p112 = scmp.lt.s32.totalorder %s9, 5
    %p113 = pnand %p111, %p112
    %p114 = pneg %p113
    // Predicated region
    $region9: #{netg_celeba_forward.16} parent=5 // pred_check
      _
    $region10: #{netg_celeba_forward.16} parent=5 // pred_check_branch
      %116 = sbr.rel (%p113) target = $region12
    $region11: #{netg_celeba_forward.16} parent=5 // pred_region
      %s117 = ssub.s32 %s9, 1
      // Predicated region
      $region13: #{netg_celeba_forward.16} parent=11 // pred_check
        %p118 = pneg %p56
      $region14: #{netg_celeba_forward.16} parent=11 // pred_check_branch
        %120 = sbr.rel (%p118) target = $region16
      $region15: #{netg_celeba_forward.16} parent=11 // pred_region
        _
      $region16: #{netg_celeba_forward.16} parent=11 // pred_fallthru
        _
      // Predicated region
      $region17: #{netg_celeba_forward.16} parent=11 // pred_check
        %p121 = pneg %p77
      $region18: #{netg_celeba_forward.16} parent=11 // pred_check_branch
        %123 = sbr.rel (%p121) target = $region20
      $region19: #{netg_celeba_forward.16} parent=11 // pred_region
        _
      $region20: #{netg_celeba_forward.16} parent=11 // pred_fallthru
        _
    $region12: #{netg_celeba_forward.16} parent=5 // pred_fallthru
      _
    %p124 = scmp.lt.s32.totalorder %s9, 4
    // Predicated region
    $region21: #{netg_celeba_forward.16} parent=5 // pred_check
      %p125 = pneg %p124
    $region22: #{netg_celeba_forward.16} parent=5 // pred_check_branch
      %127 = sbr.rel (%p125) target = $region24
    $region23: #{netg_celeba_forward.16} parent=5 // pred_region
      // Predicated region
      $region25: #{netg_celeba_forward.16} parent=23 // pred_check
        %p128 = pneg %p29
      $region26: #{netg_celeba_forward.16} parent=23 // pred_check_branch
        %130 = sbr.rel (%p128) target = $region28
      $region27: #{netg_celeba_forward.16} parent=23 // pred_region
        %s131 = smul.u32 64, %s9
        %p132 = scmp.lt.s32.totalorder %s131, 255
        %s133 = scalar_select %p132, %s131, 255
        %s134 = smul.addr %s133, 8
        %s135 = scalar_lea.vmem %s0, %s134
        %s136 = smul.u32 64, %s9
      $region28: #{netg_celeba_forward.16} parent=23 // pred_fallthru
        _
    $region24: #{netg_celeba_forward.16} parent=5 // pred_fallthru
      _
    %p137 = scmp.le.s32.totalorder 1, %s9
    %p138 = scmp.lt.s32.totalorder %s9, 5
    %p139 = pnand %p137, %p138
    %p140 = pneg %p139
    // Predicated region
    $region29: #{netg_celeba_forward.16} parent=5 // pred_check
      _
    $region30: #{netg_celeba_forward.16} parent=5 // pred_check_branch
      %142 = sbr.rel (%p139) target = $region32
    $region31: #{netg_celeba_forward.16} parent=5 // pred_region
      %s143 = ssub.s32 %s9, 1
      %s144 = smul.u32 64, %s14
      %p145 = scmp.lt.s32.totalorder %s144, 255
      %s146 = scalar_select %p145, %s144, 255
      %s147 = smul.addr %s146, 8
      %s148 = scalar_lea.vmem %s0, %s147
      %p149 = pneg %p35
      %p150 = pneg %p32
      %p151 = pneg %p56
      %p152 = pneg %p53
      %p153 = pneg %p77
      %p154 = pneg %p74
      %p155 = pneg %p103
      %p156 = pneg %p100
      %s157 = smul.u32 64, %s14
      %p158 = scmp.lt.s32.totalorder %s157, 255
      %s159 = scalar_select %p158, %s157, 255
      %s160 = smul.addr %s159, 4
      %s161 = scalar_lea.vmem %s3, %s160
      %s162 = smul.u32 64, %s14
      %p163 = scmp.lt.s32.totalorder %s162, 255
      %s164 = scalar_select %p163, %s162, 255
      %s165 = smul.addr %s164, 8
      %s166 = scalar_lea.vmem %s0, %s165
      %s167 = smul.u32 64, %s14
      %s168 = smul.u32 64, %s14
      %p169 = scmp.lt.s32.totalorder %s168, 255
      %s170 = scalar_select %p169, %s168, 255
      %s171 = smul.addr %s170, 4
      %s172 = scalar_lea.vmem %s3, %s171
      %s173 = smul.u32 64, %s14
      %v174 = vld [vmem:[%s166] sm:$0xff]
      %v175 = vld [vmem:[%s166 + $0x8] sm:$0xff]
      %v176 = vld [vmem:[%s166 + $0x10] sm:$0xff]
      %v177 = vld [vmem:[%s166 + $0x18] sm:$0xff]
      %v178 = vld [vmem:[%s166 + $0x20] sm:$0xff]
      %v179 = vld [vmem:[%s166 + $0x28] sm:$0xff]
      %v180 = vld [vmem:[%s166 + $0x30] sm:$0xff]
      %v181 = vld [vmem:[%s166 + $0x38] sm:$0xff]
      %v182 = vld [vmem:[%s166 + $0x40] sm:$0xff]
      %v183 = vld [vmem:[%s166 + $0x48] sm:$0xff]
      %v184 = vld [vmem:[%s166 + $0x50] sm:$0xff]
      %v185 = vld [vmem:[%s166 + $0x58] sm:$0xff]
      %v186 = vld [vmem:[%s166 + $0x60] sm:$0xff]
      %v187 = vld [vmem:[%s166 + $0x68] sm:$0xff]
      %v188 = vld [vmem:[%s166 + $0x70] sm:$0xff]
      %v189 = vld [vmem:[%s166 + $0x78] sm:$0xff]
      %v190 = vld [vmem:[%s166 + $0x80] sm:$0xff]
      %v191 = vld [vmem:[%s166 + $0x88] sm:$0xff]
      %v192 = vld [vmem:[%s166 + $0x90] sm:$0xff]
      %v193 = vld [vmem:[%s166 + $0x98] sm:$0xff]
      %v194 = vld [vmem:[%s166 + $0xa0] sm:$0xff]
      %v195 = vld [vmem:[%s166 + $0xa8] sm:$0xff]
      %v196 = vld [vmem:[%s166 + $0xb0] sm:$0xff]
      %v197 = vld [vmem:[%s166 + $0xb8] sm:$0xff]
      %v198 = vld [vmem:[%s166 + $0xc0] sm:$0xff]
      %v199 = vld [vmem:[%s166 + $0xc8] sm:$0xff]
      %v200 = vld [vmem:[%s166 + $0xd0] sm:$0xff]
      %v201 = vld [vmem:[%s166 + $0xd8] sm:$0xff]
      %v202 = vld [vmem:[%s166 + $0xe0] sm:$0xff]
      %v203 = vld [vmem:[%s166 + $0xe8] sm:$0xff]
      %v204 = vld [vmem:[%s166 + $0xf0] sm:$0xff]
      %v205 = vld [vmem:[%s166 + $0xf8] sm:$0xff]
      %v206 = vld [vmem:[%s166 + $0x100] sm:$0xff]
      %v207 = vld [vmem:[%s166 + $0x108] sm:$0xff]
      %v208 = vld [vmem:[%s166 + $0x110] sm:$0xff]
      %v209 = vld [vmem:[%s166 + $0x118] sm:$0xff]
      %v210 = vld [vmem:[%s166 + $0x120] sm:$0xff]
      %v211 = vld [vmem:[%s166 + $0x128] sm:$0xff]
      %v212 = vld [vmem:[%s166 + $0x130] sm:$0xff]
      %v213 = vld [vmem:[%s166 + $0x138] sm:$0xff]
      %v214 = vld [vmem:[%s166 + $0x140] sm:$0xff]
      %v215 = vld [vmem:[%s166 + $0x148] sm:$0xff]
      %v216 = vld [vmem:[%s166 + $0x150] sm:$0xff]
      %v217 = vld [vmem:[%s166 + $0x158] sm:$0xff]
      %v218 = vld [vmem:[%s166 + $0x160] sm:$0xff]
      %v219 = vld [vmem:[%s166 + $0x168] sm:$0xff]
      %v220 = vld [vmem:[%s166 + $0x170] sm:$0xff]
      %v221 = vld [vmem:[%s166 + $0x178] sm:$0xff]
      %v222 = vld [vmem:[%s166 + $0x180] sm:$0xff]
      %v223 = vld [vmem:[%s166 + $0x188] sm:$0xff]
      %v224 = vld [vmem:[%s166 + $0x190] sm:$0xff]
      %v225 = vld [vmem:[%s166 + $0x198] sm:$0xff]
      %v226 = vld [vmem:[%s166 + $0x1a0] sm:$0xff]
      %v227 = vld [vmem:[%s166 + $0x1a8] sm:$0xff]
      %v228 = vld [vmem:[%s166 + $0x1b0] sm:$0xff]
      %v229 = vld [vmem:[%s166 + $0x1b8] sm:$0xff]
      %v230 = vld [vmem:[%s166 + $0x1c0] sm:$0xff]
      %v231 = vld [vmem:[%s166 + $0x1c8] sm:$0xff]
      %v232 = vld [vmem:[%s166 + $0x1d0] sm:$0xff]
      %v233 = vld [vmem:[%s166 + $0x1d8] sm:$0xff]
      %v234 = vld [vmem:[%s166 + $0x1e0] sm:$0xff]
      %v235 = vld [vmem:[%s166 + $0x1e8] sm:$0xff]
      %v236 = vld [vmem:[%s166 + $0x1f0] sm:$0xff]
      %v237 = vld [vmem:[%s166 + $0x1f8] sm:$0xff]
      %v238 = vld [vmem:[%s1] sm:$0x1]
      %v240 = vlaneseq
      %v241 = vshrl.u32 %v240, 7
      %v242 = vsub.s32 0, %v241
      %v243 = vrot.slane %v238, %v242
      %v245 = vmul.f32 %v174, %v243
      %v246 = vmul.f32 %v175, %v243
      %v247 = vmul.f32 %v176, %v243
      %v248 = vmul.f32 %v177, %v243
      %v249 = vmul.f32 %v178, %v243
      %v250 = vmul.f32 %v179, %v243
      %v251 = vmul.f32 %v180, %v243
      %v252 = vmul.f32 %v181, %v243
      %v253 = vmul.f32 %v182, %v243
      %v254 = vmul.f32 %v183, %v243
      %v255 = vmul.f32 %v184, %v243
      %v256 = vmul.f32 %v185, %v243
      %v257 = vmul.f32 %v186, %v243
      %v258 = vmul.f32 %v187, %v243
      %v259 = vmul.f32 %v188, %v243
      %v260 = vmul.f32 %v189, %v243
      %v261 = vmul.f32 %v190, %v243
      %v262 = vmul.f32 %v191, %v243
      %v263 = vmul.f32 %v192, %v243
      %v264 = vmul.f32 %v193, %v243
      %v265 = vmul.f32 %v194, %v243
      %v266 = vmul.f32 %v195, %v243
      %v267 = vmul.f32 %v196, %v243
      %v268 = vmul.f32 %v197, %v243
      %v269 = vmul.f32 %v198, %v243
      %v270 = vmul.f32 %v199, %v243
      %v271 = vmul.f32 %v200, %v243
      %v272 = vmul.f32 %v201, %v243
      %v273 = vmul.f32 %v202, %v243
      %v274 = vmul.f32 %v203, %v243
      %v275 = vmul.f32 %v204, %v243
      %v276 = vmul.f32 %v205, %v243
      %v277 = vmul.f32 %v206, %v243
      %v278 = vmul.f32 %v207, %v243
      %v279 = vmul.f32 %v208, %v243
      %v280 = vmul.f32 %v209, %v243
      %v281 = vmul.f32 %v210, %v243
      %v282 = vmul.f32 %v211, %v243
      %v283 = vmul.f32 %v212, %v243
      %v284 = vmul.f32 %v213, %v243
      %v285 = vmul.f32 %v214, %v243
      %v286 = vmul.f32 %v215, %v243
      %v287 = vmul.f32 %v216, %v243
      %v288 = vmul.f32 %v217, %v243
      %v289 = vmul.f32 %v218, %v243
      %v290 = vmul.f32 %v219, %v243
      %v291 = vmul.f32 %v220, %v243
      %v292 = vmul.f32 %v221, %v243
      %v293 = vmul.f32 %v222, %v243
      %v294 = vmul.f32 %v223, %v243
      %v295 = vmul.f32 %v224, %v243
      %v296 = vmul.f32 %v225, %v243
      %v297 = vmul.f32 %v226, %v243
      %v298 = vmul.f32 %v227, %v243
      %v299 = vmul.f32 %v228, %v243
      %v300 = vmul.f32 %v229, %v243
      %v301 = vmul.f32 %v230, %v243
      %v302 = vmul.f32 %v231, %v243
      %v303 = vmul.f32 %v232, %v243
      %v304 = vmul.f32 %v233, %v243
      %v305 = vmul.f32 %v234, %v243
      %v306 = vmul.f32 %v235, %v243
      %v307 = vmul.f32 %v236, %v243
      %v308 = vmul.f32 %v237, %v243
      %v309 = vld [vmem:[%s2] sm:$0x1]
      %v311 = vlaneseq
      %v312 = vshrl.u32 %v311, 7
      %v313 = vsub.s32 0, %v312
      %v314 = vrot.slane %v309, %v313
      %v316 = vadd.f32 %v245, %v314
      %v317 = vadd.f32 %v246, %v314
      %v318 = vadd.f32 %v247, %v314
      %v319 = vadd.f32 %v248, %v314
      %v320 = vadd.f32 %v249, %v314
      %v321 = vadd.f32 %v250, %v314
      %v322 = vadd.f32 %v251, %v314
      %v323 = vadd.f32 %v252, %v314
      %v324 = vadd.f32 %v253, %v314
      %v325 = vadd.f32 %v254, %v314
      %v326 = vadd.f32 %v255, %v314
      %v327 = vadd.f32 %v256, %v314
      %v328 = vadd.f32 %v257, %v314
      %v329 = vadd.f32 %v258, %v314
      %v330 = vadd.f32 %v259, %v314
      %v331 = vadd.f32 %v260, %v314
      %v332 = vadd.f32 %v261, %v314
      %v333 = vadd.f32 %v262, %v314
      %v334 = vadd.f32 %v263, %v314
      %v335 = vadd.f32 %v264, %v314
      %v336 = vadd.f32 %v265, %v314
      %v337 = vadd.f32 %v266, %v314
      %v338 = vadd.f32 %v267, %v314
      %v339 = vadd.f32 %v268, %v314
      %v340 = vadd.f32 %v269, %v314
      %v341 = vadd.f32 %v270, %v314
      %v342 = vadd.f32 %v271, %v314
      %v343 = vadd.f32 %v272, %v314
      %v344 = vadd.f32 %v273, %v314
      %v345 = vadd.f32 %v274, %v314
      %v346 = vadd.f32 %v275, %v314
      %v347 = vadd.f32 %v276, %v314
      %v348 = vadd.f32 %v277, %v314
      %v349 = vadd.f32 %v278, %v314
      %v350 = vadd.f32 %v279, %v314
      %v351 = vadd.f32 %v280, %v314
      %v352 = vadd.f32 %v281, %v314
      %v353 = vadd.f32 %v282, %v314
      %v354 = vadd.f32 %v283, %v314
      %v355 = vadd.f32 %v284, %v314
      %v356 = vadd.f32 %v285, %v314
      %v357 = vadd.f32 %v286, %v314
      %v358 = vadd.f32 %v287, %v314
      %v359 = vadd.f32 %v288, %v314
      %v360 = vadd.f32 %v289, %v314
      %v361 = vadd.f32 %v290, %v314
      %v362 = vadd.f32 %v291, %v314
      %v363 = vadd.f32 %v292, %v314
      %v364 = vadd.f32 %v293, %v314
      %v365 = vadd.f32 %v294, %v314
      %v366 = vadd.f32 %v295, %v314
      %v367 = vadd.f32 %v296, %v314
      %v368 = vadd.f32 %v297, %v314
      %v369 = vadd.f32 %v298, %v314
      %v370 = vadd.f32 %v299, %v314
      %v371 = vadd.f32 %v300, %v314
      %v372 = vadd.f32 %v301, %v314
      %v373 = vadd.f32 %v302, %v314
      %v374 = vadd.f32 %v303, %v314
      %v375 = vadd.f32 %v304, %v314
      %v376 = vadd.f32 %v305, %v314
      %v377 = vadd.f32 %v306, %v314
      %v378 = vadd.f32 %v307, %v314
      %v379 = vadd.f32 %v308, %v314
      %v380 = vmax.f32 %v316, 0.0
      %v381 = vmax.f32 %v317, 0.0
      %v382 = vmax.f32 %v318, 0.0
      %v383 = vmax.f32 %v319, 0.0
      %v384 = vmax.f32 %v320, 0.0
      %v385 = vmax.f32 %v321, 0.0
      %v386 = vmax.f32 %v322, 0.0
      %v387 = vmax.f32 %v323, 0.0
      %v388 = vmax.f32 %v324, 0.0
      %v389 = vmax.f32 %v325, 0.0
      %v390 = vmax.f32 %v326, 0.0
      %v391 = vmax.f32 %v327, 0.0
      %v392 = vmax.f32 %v328, 0.0
      %v393 = vmax.f32 %v329, 0.0
      %v394 = vmax.f32 %v330, 0.0
      %v395 = vmax.f32 %v331, 0.0
      %v396 = vmax.f32 %v332, 0.0
      %v397 = vmax.f32 %v333, 0.0
      %v398 = vmax.f32 %v334, 0.0
      %v399 = vmax.f32 %v335, 0.0
      %v400 = vmax.f32 %v336, 0.0
      %v401 = vmax.f32 %v337, 0.0
      %v402 = vmax.f32 %v338, 0.0
      %v403 = vmax.f32 %v339, 0.0
      %v404 = vmax.f32 %v340, 0.0
      %v405 = vmax.f32 %v341, 0.0
      %v406 = vmax.f32 %v342, 0.0
      %v407 = vmax.f32 %v343, 0.0
      %v408 = vmax.f32 %v344, 0.0
      %v409 = vmax.f32 %v345, 0.0
      %v410 = vmax.f32 %v346, 0.0
      %v411 = vmax.f32 %v347, 0.0
      %v412 = vmax.f32 %v348, 0.0
      %v413 = vmax.f32 %v349, 0.0
      %v414 = vmax.f32 %v350, 0.0
      %v415 = vmax.f32 %v351, 0.0
      %v416 = vmax.f32 %v352, 0.0
      %v417 = vmax.f32 %v353, 0.0
      %v418 = vmax.f32 %v354, 0.0
      %v419 = vmax.f32 %v355, 0.0
      %v420 = vmax.f32 %v356, 0.0
      %v421 = vmax.f32 %v357, 0.0
      %v422 = vmax.f32 %v358, 0.0
      %v423 = vmax.f32 %v359, 0.0
      %v424 = vmax.f32 %v360, 0.0
      %v425 = vmax.f32 %v361, 0.0
      %v426 = vmax.f32 %v362, 0.0
      %v427 = vmax.f32 %v363, 0.0
      %v428 = vmax.f32 %v364, 0.0
      %v429 = vmax.f32 %v365, 0.0
      %v430 = vmax.f32 %v366, 0.0
      %v431 = vmax.f32 %v367, 0.0
      %v432 = vmax.f32 %v368, 0.0
      %v433 = vmax.f32 %v369, 0.0
      %v434 = vmax.f32 %v370, 0.0
      %v435 = vmax.f32 %v371, 0.0
      %v436 = vmax.f32 %v372, 0.0
      %v437 = vmax.f32 %v373, 0.0
      %v438 = vmax.f32 %v374, 0.0
      %v439 = vmax.f32 %v375, 0.0
      %v440 = vmax.f32 %v376, 0.0
      %v441 = vmax.f32 %v377, 0.0
      %v442 = vmax.f32 %v378, 0.0
      %v443 = vmax.f32 %v379, 0.0
      %v444 = vpack.c.bf16 %v381, %v380
      %v445 = vpack.c.bf16 %v383, %v382
      %v446 = vpack.c.bf16 %v385, %v384
      %v447 = vpack.c.bf16 %v387, %v386
      %v448 = vpack.c.bf16 %v389, %v388
      %v449 = vpack.c.bf16 %v391, %v390
      %v450 = vpack.c.bf16 %v393, %v392
      %v451 = vpack.c.bf16 %v395, %v394
      %v452 = vpack.c.bf16 %v397, %v396
      %v453 = vpack.c.bf16 %v399, %v398
      %v454 = vpack.c.bf16 %v401, %v400
      %v455 = vpack.c.bf16 %v403, %v402
      %v456 = vpack.c.bf16 %v405, %v404
      %v457 = vpack.c.bf16 %v407, %v406
      %v458 = vpack.c.bf16 %v409, %v408
      %v459 = vpack.c.bf16 %v411, %v410
      %v460 = vpack.c.bf16 %v413, %v412
      %v461 = vpack.c.bf16 %v415, %v414
      %v462 = vpack.c.bf16 %v417, %v416
      %v463 = vpack.c.bf16 %v419, %v418
      %v464 = vpack.c.bf16 %v421, %v420
      %v465 = vpack.c.bf16 %v423, %v422
      %v466 = vpack.c.bf16 %v425, %v424
      %v467 = vpack.c.bf16 %v427, %v426
      %v468 = vpack.c.bf16 %v429, %v428
      %v469 = vpack.c.bf16 %v431, %v430
      %v470 = vpack.c.bf16 %v433, %v432
      %v471 = vpack.c.bf16 %v435, %v434
      %v472 = vpack.c.bf16 %v437, %v436
      %v473 = vpack.c.bf16 %v439, %v438
      %v474 = vpack.c.bf16 %v441, %v440
      %v475 = vpack.c.bf16 %v443, %v442
      %v508 = vunpack.c.l.b16 %v444
      %v509 = vunpack.c.h.b16 %v444
      %v510 = vunpack.c.l.b16 %v445
      %v511 = vunpack.c.h.b16 %v445
      %v512 = vunpack.c.l.b16 %v446
      %v513 = vunpack.c.h.b16 %v446
      %v514 = vunpack.c.l.b16 %v447
      %v515 = vunpack.c.h.b16 %v447
      %v516 = vunpack.c.l.b16 %v448
      %v517 = vunpack.c.h.b16 %v448
      %v518 = vunpack.c.l.b16 %v449
      %v519 = vunpack.c.h.b16 %v449
      %v520 = vunpack.c.l.b16 %v450
      %v521 = vunpack.c.h.b16 %v450
      %v522 = vunpack.c.l.b16 %v451
      %v523 = vunpack.c.h.b16 %v451
      %v524 = vunpack.c.l.b16 %v452
      %v525 = vunpack.c.h.b16 %v452
      %v526 = vunpack.c.l.b16 %v453
      %v527 = vunpack.c.h.b16 %v453
      %v528 = vunpack.c.l.b16 %v454
      %v529 = vunpack.c.h.b16 %v454
      %v530 = vunpack.c.l.b16 %v455
      %v531 = vunpack.c.h.b16 %v455
      %v532 = vunpack.c.l.b16 %v456
      %v533 = vunpack.c.h.b16 %v456
      %v534 = vunpack.c.l.b16 %v457
      %v535 = vunpack.c.h.b16 %v457
      %v536 = vunpack.c.l.b16 %v458
      %v537 = vunpack.c.h.b16 %v458
      %v538 = vunpack.c.l.b16 %v459
      %v539 = vunpack.c.h.b16 %v459
      %v540 = vunpack.c.l.b16 %v460
      %v541 = vunpack.c.h.b16 %v460
      %v542 = vunpack.c.l.b16 %v461
      %v543 = vunpack.c.h.b16 %v461
      %v544 = vunpack.c.l.b16 %v462
      %v545 = vunpack.c.h.b16 %v462
      %v546 = vunpack.c.l.b16 %v463
      %v547 = vunpack.c.h.b16 %v463
      %v548 = vunpack.c.l.b16 %v464
      %v549 = vunpack.c.h.b16 %v464
      %v550 = vunpack.c.l.b16 %v465
      %v551 = vunpack.c.h.b16 %v465
      %v552 = vunpack.c.l.b16 %v466
      %v553 = vunpack.c.h.b16 %v466
      %v554 = vunpack.c.l.b16 %v467
      %v555 = vunpack.c.h.b16 %v467
      %v556 = vunpack.c.l.b16 %v468
      %v557 = vunpack.c.h.b16 %v468
      %v558 = vunpack.c.l.b16 %v469
      %v559 = vunpack.c.h.b16 %v469
      %v560 = vunpack.c.l.b16 %v470
      %v561 = vunpack.c.h.b16 %v470
      %v562 = vunpack.c.l.b16 %v471
      %v563 = vunpack.c.h.b16 %v471
      %v564 = vunpack.c.l.b16 %v472
      %v565 = vunpack.c.h.b16 %v472
      %v566 = vunpack.c.l.b16 %v473
      %v567 = vunpack.c.h.b16 %v473
      %v568 = vunpack.c.l.b16 %v474
      %v569 = vunpack.c.h.b16 %v474
      %v570 = vunpack.c.l.b16 %v475
      %v571 = vunpack.c.h.b16 %v475
      %v572 = vpack.c.b16 %v508, %v508
      %v573 = vpack.c.b16 %v509, %v509
      %v574 = vpack.c.b16 %v510, %v510
      %v575 = vpack.c.b16 %v511, %v511
      %v576 = vpack.c.b16 %v512, %v512
      %v577 = vpack.c.b16 %v513, %v513
      %v578 = vpack.c.b16 %v514, %v514
      %v579 = vpack.c.b16 %v515, %v515
      %v580 = vpack.c.b16 %v516, %v516
      %v581 = vpack.c.b16 %v517, %v517
      %v582 = vpack.c.b16 %v518, %v518
      %v583 = vpack.c.b16 %v519, %v519
      %v584 = vpack.c.b16 %v520, %v520
      %v585 = vpack.c.b16 %v521, %v521
      %v586 = vpack.c.b16 %v522, %v522
      %v587 = vpack.c.b16 %v523, %v523
      %v588 = vpack.c.b16 %v524, %v524
      %v589 = vpack.c.b16 %v525, %v525
      %v590 = vpack.c.b16 %v526, %v526
      %v591 = vpack.c.b16 %v527, %v527
      %v592 = vpack.c.b16 %v528, %v528
      %v593 = vpack.c.b16 %v529, %v529
      %v594 = vpack.c.b16 %v530, %v530
      %v595 = vpack.c.b16 %v531, %v531
      %v596 = vpack.c.b16 %v532, %v532
      %v597 = vpack.c.b16 %v533, %v533
      %v598 = vpack.c.b16 %v534, %v534
      %v599 = vpack.c.b16 %v535, %v535
      %v600 = vpack.c.b16 %v536, %v536
      %v601 = vpack.c.b16 %v537, %v537
      %v602 = vpack.c.b16 %v538, %v538
      %v603 = vpack.c.b16 %v539, %v539
      %v604 = vpack.c.b16 %v540, %v540
      %v605 = vpack.c.b16 %v541, %v541
      %v606 = vpack.c.b16 %v542, %v542
      %v607 = vpack.c.b16 %v543, %v543
      %v608 = vpack.c.b16 %v544, %v544
      %v609 = vpack.c.b16 %v545, %v545
      %v610 = vpack.c.b16 %v546, %v546
      %v611 = vpack.c.b16 %v547, %v547
      %v612 = vpack.c.b16 %v548, %v548
      %v613 = vpack.c.b16 %v549, %v549
      %v614 = vpack.c.b16 %v550, %v550
      %v615 = vpack.c.b16 %v551, %v551
      %v616 = vpack.c.b16 %v552, %v552
      %v617 = vpack.c.b16 %v553, %v553
      %v618 = vpack.c.b16 %v554, %v554
      %v619 = vpack.c.b16 %v555, %v555
      %v620 = vpack.c.b16 %v556, %v556
      %v621 = vpack.c.b16 %v557, %v557
      %v622 = vpack.c.b16 %v558, %v558
      %v623 = vpack.c.b16 %v559, %v559
      %v624 = vpack.c.b16 %v560, %v560
      %v625 = vpack.c.b16 %v561, %v561
      %v626 = vpack.c.b16 %v562, %v562
      %v627 = vpack.c.b16 %v563, %v563
      %v628 = vpack.c.b16 %v564, %v564
      %v629 = vpack.c.b16 %v565, %v565
      %v630 = vpack.c.b16 %v566, %v566
      %v631 = vpack.c.b16 %v567, %v567
      %v632 = vpack.c.b16 %v568, %v568
      %v633 = vpack.c.b16 %v569, %v569
      %v634 = vpack.c.b16 %v570, %v570
      %v635 = vpack.c.b16 %v571, %v571
      %700 = vst [vmem:[%s172] sm:$0xf] %v572
      %701 = vst [vmem:[%s172 + $0x4] sm:$0xf] %v573
      %702 = vst [vmem:[%s172 + $0x8] sm:$0xf] %v574
      %703 = vst [vmem:[%s172 + $0xc] sm:$0xf] %v575
      %704 = vst [vmem:[%s172 + $0x10] sm:$0xf] %v576
      %705 = vst [vmem:[%s172 + $0x14] sm:$0xf] %v577
      %706 = vst [vmem:[%s172 + $0x18] sm:$0xf] %v578
      %707 = vst [vmem:[%s172 + $0x1c] sm:$0xf] %v579
      %708 = vst [vmem:[%s172 + $0x20] sm:$0xf] %v580
      %709 = vst [vmem:[%s172 + $0x24] sm:$0xf] %v581
      %710 = vst [vmem:[%s172 + $0x28] sm:$0xf] %v582
      %711 = vst [vmem:[%s172 + $0x2c] sm:$0xf] %v583
      %712 = vst [vmem:[%s172 + $0x30] sm:$0xf] %v584
      %713 = vst [vmem:[%s172 + $0x34] sm:$0xf] %v585
      %714 = vst [vmem:[%s172 + $0x38] sm:$0xf] %v586
      %715 = vst [vmem:[%s172 + $0x3c] sm:$0xf] %v587
      %716 = vst [vmem:[%s172 + $0x40] sm:$0xf] %v588
      %717 = vst [vmem:[%s172 + $0x44] sm:$0xf] %v589
      %718 = vst [vmem:[%s172 + $0x48] sm:$0xf] %v590
      %719 = vst [vmem:[%s172 + $0x4c] sm:$0xf] %v591
      %720 = vst [vmem:[%s172 + $0x50] sm:$0xf] %v592
      %721 = vst [vmem:[%s172 + $0x54] sm:$0xf] %v593
      %722 = vst [vmem:[%s172 + $0x58] sm:$0xf] %v594
      %723 = vst [vmem:[%s172 + $0x5c] sm:$0xf] %v595
      %724 = vst [vmem:[%s172 + $0x60] sm:$0xf] %v596
      %725 = vst [vmem:[%s172 + $0x64] sm:$0xf] %v597
      %726 = vst [vmem:[%s172 + $0x68] sm:$0xf] %v598
      %727 = vst [vmem:[%s172 + $0x6c] sm:$0xf] %v599
      %728 = vst [vmem:[%s172 + $0x70] sm:$0xf] %v600
      %729 = vst [vmem:[%s172 + $0x74] sm:$0xf] %v601
      %730 = vst [vmem:[%s172 + $0x78] sm:$0xf] %v602
      %731 = vst [vmem:[%s172 + $0x7c] sm:$0xf] %v603
      %732 = vst [vmem:[%s172 + $0x80] sm:$0xf] %v604
      %733 = vst [vmem:[%s172 + $0x84] sm:$0xf] %v605
      %734 = vst [vmem:[%s172 + $0x88] sm:$0xf] %v606
      %735 = vst [vmem:[%s172 + $0x8c] sm:$0xf] %v607
      %736 = vst [vmem:[%s172 + $0x90] sm:$0xf] %v608
      %737 = vst [vmem:[%s172 + $0x94] sm:$0xf] %v609
      %738 = vst [vmem:[%s172 + $0x98] sm:$0xf] %v610
      %739 = vst [vmem:[%s172 + $0x9c] sm:$0xf] %v611
      %740 = vst [vmem:[%s172 + $0xa0] sm:$0xf] %v612
      %741 = vst [vmem:[%s172 + $0xa4] sm:$0xf] %v613
      %742 = vst [vmem:[%s172 + $0xa8] sm:$0xf] %v614
      %743 = vst [vmem:[%s172 + $0xac] sm:$0xf] %v615
      %744 = vst [vmem:[%s172 + $0xb0] sm:$0xf] %v616
      %745 = vst [vmem:[%s172 + $0xb4] sm:$0xf] %v617
      %746 = vst [vmem:[%s172 + $0xb8] sm:$0xf] %v618
      %747 = vst [vmem:[%s172 + $0xbc] sm:$0xf] %v619
      %748 = vst [vmem:[%s172 + $0xc0] sm:$0xf] %v620
      %749 = vst [vmem:[%s172 + $0xc4] sm:$0xf] %v621
      %750 = vst [vmem:[%s172 + $0xc8] sm:$0xf] %v622
      %751 = vst [vmem:[%s172 + $0xcc] sm:$0xf] %v623
      %752 = vst [vmem:[%s172 + $0xd0] sm:$0xf] %v624
      %753 = vst [vmem:[%s172 + $0xd4] sm:$0xf] %v625
      %754 = vst [vmem:[%s172 + $0xd8] sm:$0xf] %v626
      %755 = vst [vmem:[%s172 + $0xdc] sm:$0xf] %v627
      %756 = vst [vmem:[%s172 + $0xe0] sm:$0xf] %v628
      %757 = vst [vmem:[%s172 + $0xe4] sm:$0xf] %v629
      %758 = vst [vmem:[%s172 + $0xe8] sm:$0xf] %v630
      %759 = vst [vmem:[%s172 + $0xec] sm:$0xf] %v631
      %760 = vst [vmem:[%s172 + $0xf0] sm:$0xf] %v632
      %761 = vst [vmem:[%s172 + $0xf4] sm:$0xf] %v633
      %762 = vst [vmem:[%s172 + $0xf8] sm:$0xf] %v634
      %763 = vst [vmem:[%s172 + $0xfc] sm:$0xf] %v635
      %s764 = smul.u32 64, %s14
      %p765 = scmp.lt.s32.totalorder %s764, 255
      %s766 = scalar_select %p765, %s764, 255
      %s767 = smul.addr %s766, 4
      %s768 = scalar_lea.vmem %s3, %s767
      // Predicated region
      $region33: #{netg_celeba_forward.16} parent=31 // pred_check
        %p769 = pneg %p100
      $region34: #{netg_celeba_forward.16} parent=31 // pred_check_branch
        %771 = sbr.rel (%p769) target = $region36
      $region35: #{netg_celeba_forward.16} parent=31 // pred_region
        %s772 = smul.u32 64, %s14
      $region36: #{netg_celeba_forward.16} parent=31 // pred_fallthru
        _
    $region32: #{netg_celeba_forward.16} parent=5 // pred_fallthru
      _
    %p773 = scmp.le.s32.totalorder 2, %s9
    // Predicated region
    $region37: #{netg_celeba_forward.16} parent=5 // pred_check
      %p774 = pneg %p773
    $region38: #{netg_celeba_forward.16} parent=5 // pred_check_branch
      %776 = sbr.rel (%p774) target = $region40
    $region39: #{netg_celeba_forward.16} parent=5 // pred_region
      %s777 = ssub.s32 %s9, 2
      // Predicated region
      $region41: #{netg_celeba_forward.16} parent=39 // pred_check
        %p778 = pneg %p106
      $region42: #{netg_celeba_forward.16} parent=39 // pred_check_branch
        %780 = sbr.rel (%p778) target = $region44
      $region43: #{netg_celeba_forward.16} parent=39 // pred_region
        %s781 = smul.u32 64, %s15
        %p782 = scmp.lt.s32.totalorder %s781, 255
        %s783 = scalar_select %p782, %s781, 255
        %s784 = smul.addr %s783, 4
        %s785 = scalar_lea.vmem %s3, %s784
      $region44: #{netg_celeba_forward.16} parent=39 // pred_fallthru
        _
    $region40: #{netg_celeba_forward.16} parent=5 // pred_fallthru
      _
  $region6: #{netg_celeba_forward.16} parent=0 // loop_footer
    %s13 = sadd.s32 1, %s9
  $region7: #{netg_celeba_forward.16} parent=0 // loop_footer_branch
    %8 = sbr.rel target = $region3
  $region8: #{netg_celeba_forward.16} parent=0 // loop_exit
    _

// kernel: netg_celeba_forward.17
$region0: #{netg_celeba_forward.17}
  #allocation0 [shape = 'u32[]', space=smem, size = 0x4, offset = 0x4, fixed_abs, tag = 'smem constant byte address 0x4 - core index']
  #allocation1 [shape = 'u32[144,128]{1,0:T(1,128)}', space=vmem, size = 0x12000, scoped, tag = 'internal scratch']
  %s0 = inlined_call_operand.vmem [shape: bf16[4,2048,32], index: 0, kind: input, shape index: {}]
  %s1 = inlined_call_operand.vmem [shape: bf16[4,32,128], index: 1, kind: input, shape index: {}]
  %s2 = inlined_call_operand.vmem [shape: f32[4,2048,128], index: 2, kind: output, shape index: {}]
  %s3 = sld [smem:[#allocation0]]
  $region41: #{netg_celeba_forward.17} parent=0
    _
  %s5 = ssub.s32 1, %s3
  %s6 = scalar_select 0, %s5, %s3
  loop: start=0, step=1, limit=18
  $region2: #{netg_celeba_forward.17} parent=0 // loop_pre_header
    _
  $region3: #{netg_celeba_forward.17} parent=0 // loop_header
    %s8 = sphi 0, %s12
    %p9 = scmp.ge.s32.totalorder %s8, 18
    %s15 = sphi 0, %s27
    %s16 = sphi 0, %s23
    %s17 = sphi 0, %s15
    %s18 = sphi 0, %s16
    %s19 = sphi 0, %s17
    %s20 = sphi 0, %s18
    %s32 = sphi 0, %s34
    %s35 = sphi 0, %s32
    %s36 = sphi 0, %s35
    %s52 = sphi 0, %s36
    %s58 = sphi 0, %s60
    %s61 = sphi 0, %s58
    %s62 = sphi 0, %s61
    %s78 = sphi 0, %s62
    %s86 = sphi 0, %s88
    %s89 = sphi 0, %s86
    %s90 = sphi 0, %s89
    %s106 = sphi 0, %s90
  $region4: #{netg_celeba_forward.17} parent=0 // loop_header_branch
    %11 = sbr.rel (%p9) target = $region8
  $region5: #{netg_celeba_forward.17} parent=0 // loop_body
    %s13 = ssub.s32 %s8, 1
    %s14 = ssub.s32 %s8, 2
    %s21 = sadd.s32 1, %s16
    %p22 = scmp.ge.s32.totalorder %s21, 4
    %s23 = scalar_select %p22, 0, %s21
    %s24 = sadd.s32 1, %s15
    %s25 = scalar_select %p22, %s24, %s15
    %p26 = scmp.ge.s32.totalorder %s25, 4
    %s27 = scalar_select %p26, 0, %s25
    %s28 = ssub.s32 %s15, %s27
    %s29 = ssub.s32 %s16, %s23
    %s30 = sor.u32 %s28, %s29
    %p31 = scmp.eq.s32.totalorder %s30, 0
    %s33 = sadd.s32 %s32, 1
    %s34 = scalar_select %p31, %s32, %s33
    %p37 = pneg %p31
    %p38 = scmp.eq.s32.totalorder %s8, 15
    %p39 = por %p37, %p38
    %p40 = scmp.ne.s32.totalorder %s32, %s35
    %p41 = scmp.eq.s32.totalorder %s8, 0
    %p42 = por %p40, %p41
    %p43 = scmp.ne.s32.totalorder %s32, %s35
    %p44 = scmp.eq.s32.totalorder %s13, 15
    %p45 = por %p43, %p44
    %p46 = scmp.ne.s32.totalorder %s35, %s36
    %p47 = scmp.eq.s32.totalorder %s13, 0
    %p48 = por %p46, %p47
    %p49 = scmp.ne.s32.totalorder %s35, %s36
    %p50 = scmp.eq.s32.totalorder %s14, 15
    %p51 = por %p49, %p50
    %p53 = scmp.ne.s32.totalorder %s36, %s52
    %p54 = scmp.eq.s32.totalorder %s14, 0
    %p55 = por %p53, %p54
    %s56 = ssub.s32 %s15, %s27
    %p57 = scmp.eq.s32.totalorder %s56, 0
    %s59 = sadd.s32 %s58, 1
    %s60 = scalar_select %p57, %s58, %s59
    %p63 = pneg %p57
    %p64 = scmp.eq.s32.totalorder %s8, 15
    %p65 = por %p63, %p64
    %p66 = scmp.ne.s32.totalorder %s58, %s61
    %p67 = scmp.eq.s32.totalorder %s8, 0
    %p68 = por %p66, %p67
    %p69 = scmp.ne.s32.totalorder %s58, %s61
    %p70 = scmp.eq.s32.totalorder %s13, 15
    %p71 = por %p69, %p70
    %p72 = scmp.ne.s32.totalorder %s61, %s62
    %p73 = scmp.eq.s32.totalorder %s13, 0
    %p74 = por %p72, %p73
    %p75 = scmp.ne.s32.totalorder %s61, %s62
    %p76 = scmp.eq.s32.totalorder %s14, 15
    %p77 = por %p75, %p76
    %p79 = scmp.ne.s32.totalorder %s62, %s78
    %p80 = scmp.eq.s32.totalorder %s14, 0
    %p81 = por %p79, %p80
    %s82 = ssub.s32 %s15, %s27
    %s83 = ssub.s32 %s16, %s23
    %s84 = sor.u32 %s82, %s83
    %p85 = scmp.eq.s32.totalorder %s84, 0
    %s87 = sadd.s32 %s86, 1
    %s88 = scalar_select %p85, %s86, %s87
    %p91 = pneg %p85
    %p92 = scmp.eq.s32.totalorder %s8, 15
    %p93 = por %p91, %p92
    %p94 = scmp.ne.s32.totalorder %s86, %s89
    %p95 = scmp.eq.s32.totalorder %s8, 0
    %p96 = por %p94, %p95
    %p97 = scmp.ne.s32.totalorder %s86, %s89
    %p98 = scmp.eq.s32.totalorder %s13, 15
    %p99 = por %p97, %p98
    %p100 = scmp.ne.s32.totalorder %s89, %s90
    %p101 = scmp.eq.s32.totalorder %s13, 0
    %p102 = por %p100, %p101
    %p103 = scmp.ne.s32.totalorder %s89, %s90
    %p104 = scmp.eq.s32.totalorder %s14, 15
    %p105 = por %p103, %p104
    %p107 = scmp.ne.s32.totalorder %s90, %s106
    %p108 = scmp.eq.s32.totalorder %s14, 0
    %p109 = por %p107, %p108
    %p110 = scmp.le.s32.totalorder 1, %s8
    %p111 = scmp.lt.s32.totalorder %s8, 17
    %p112 = pnand %p110, %p111
    %p113 = pneg %p112
    // Predicated region
    $region9: #{netg_celeba_forward.17} parent=5 // pred_check
      _
    $region10: #{netg_celeba_forward.17} parent=5 // pred_check_branch
      %115 = sbr.rel (%p112) target = $region12
    $region11: #{netg_celeba_forward.17} parent=5 // pred_region
      %s116 = ssub.s32 %s8, 1
    $region12: #{netg_celeba_forward.17} parent=5 // pred_fallthru
      _
    %p117 = scmp.lt.s32.totalorder %s8, 16
    // Predicated region
    $region13: #{netg_celeba_forward.17} parent=5 // pred_check
      %p118 = pneg %p117
    $region14: #{netg_celeba_forward.17} parent=5 // pred_check_branch
      %120 = sbr.rel (%p118) target = $region16
    $region15: #{netg_celeba_forward.17} parent=5 // pred_region
      // Predicated region
      $region17: #{netg_celeba_forward.17} parent=15 // pred_check
        %p121 = pneg %p42
      $region18: #{netg_celeba_forward.17} parent=15 // pred_check_branch
        %123 = sbr.rel (%p121) target = $region20
      $region19: #{netg_celeba_forward.17} parent=15 // pred_region
        %s124 = smul.u32 64, %s16
        %p125 = scmp.lt.s32.totalorder %s15, 3
        %s126 = scalar_select %p125, %s15, 3
        %p127 = scmp.lt.s32.totalorder %s124, 255
        %s128 = scalar_select %p127, %s124, 255
        %s129 = smul.addr %s126, 256
        %s130 = sadd.s32 %s128, %s129
        %s131 = smul.addr %s130, 4
        %s132 = scalar_lea.vmem %s0, %s131
        %s133 = smul.u32 64, %s16
      $region20: #{netg_celeba_forward.17} parent=15 // pred_fallthru
        _
      // Predicated region
      $region21: #{netg_celeba_forward.17} parent=15 // pred_check
        %p134 = pneg %p68
      $region22: #{netg_celeba_forward.17} parent=15 // pred_check_branch
        %136 = sbr.rel (%p134) target = $region24
      $region23: #{netg_celeba_forward.17} parent=15 // pred_region
        %p137 = scmp.lt.s32.totalorder %s15, 3
        %s138 = scalar_select %p137, %s15, 3
        %s139 = smul.addr %s138, 4
        %s140 = smul.addr %s139, 4
        %s141 = scalar_lea.vmem %s1, %s140
      $region24: #{netg_celeba_forward.17} parent=15 // pred_fallthru
        _
    $region16: #{netg_celeba_forward.17} parent=5 // pred_fallthru
      _
    %p142 = scmp.le.s32.totalorder 1, %s8
    %p143 = scmp.lt.s32.totalorder %s8, 17
    %p144 = pnand %p142, %p143
    %p145 = pneg %p144
    // Predicated region
    $region25: #{netg_celeba_forward.17} parent=5 // pred_check
      _
    $region26: #{netg_celeba_forward.17} parent=5 // pred_check_branch
      %147 = sbr.rel (%p144) target = $region28
    $region27: #{netg_celeba_forward.17} parent=5 // pred_region
      %s148 = ssub.s32 %s8, 1
      %s149 = smul.u32 64, %s18
      %p150 = scmp.lt.s32.totalorder %s17, 3
      %s151 = scalar_select %p150, %s17, 3
      %p152 = scmp.lt.s32.totalorder %s149, 255
      %s153 = scalar_select %p152, %s149, 255
      %s154 = smul.addr %s151, 256
      %s155 = sadd.s32 %s153, %s154
      %s156 = smul.addr %s155, 4
      %s157 = scalar_lea.vmem %s0, %s156
      %p158 = pneg %p48
      %p159 = pneg %p45
      %p160 = scmp.lt.s32.totalorder %s17, 3
      %s161 = scalar_select %p160, %s17, 3
      %s162 = smul.addr %s161, 4
      %s163 = smul.addr %s162, 4
      %s164 = scalar_lea.vmem %s1, %s163
      %p165 = pneg %p74
      %p166 = pneg %p71
      %p167 = pneg %p102
      %p168 = pneg %p99
      %s169 = smul.u32 64, %s18
      %p170 = scmp.lt.s32.totalorder %s17, 3
      %s171 = scalar_select %p170, %s17, 3
      %p172 = scmp.lt.s32.totalorder %s169, 255
      %s173 = scalar_select %p172, %s169, 255
      %s174 = smul.addr %s171, 256
      %s175 = sadd.s32 %s173, %s174
      %s176 = smul.addr %s175, 8
      %s177 = scalar_lea.vmem %s2, %s176
      %s178 = smul.u32 64, %s18
      %p179 = scmp.lt.s32.totalorder %s17, 3
      %s180 = scalar_select %p179, %s17, 3
      %p181 = scmp.lt.s32.totalorder %s178, 255
      %s182 = scalar_select %p181, %s178, 255
      %s183 = smul.addr %s180, 256
      %s184 = sadd.s32 %s182, %s183
      %s185 = smul.addr %s184, 4
      %s186 = scalar_lea.vmem %s0, %s185
      %s187 = smul.u32 64, %s18
      %p188 = scmp.lt.s32.totalorder %s17, 3
      %s189 = scalar_select %p188, %s17, 3
      %s190 = smul.addr %s189, 4
      %s191 = smul.addr %s190, 4
      %s192 = scalar_lea.vmem %s1, %s191
      %s193 = smul.u32 64, %s18
      %p194 = scmp.lt.s32.totalorder %s17, 3
      %s195 = scalar_select %p194, %s17, 3
      %p196 = scmp.lt.s32.totalorder %s193, 255
      %s197 = scalar_select %p196, %s193, 255
      %s198 = smul.addr %s195, 256
      %s199 = sadd.s32 %s197, %s198
      %s200 = smul.addr %s199, 8
      %s201 = scalar_lea.vmem %s2, %s200
      %s202 = smul.u32 64, %s18
      %v204 = vld [vmem:[%s186] sm:$0xf]
      %v205 = vld [vmem:[%s186 + $0x4] sm:$0xf]
      %v206 = vld [vmem:[%s186 + $0x8] sm:$0xf]
      %v207 = vld [vmem:[%s186 + $0xc] sm:$0xf]
      %v208 = vld [vmem:[%s186 + $0x10] sm:$0xf]
      %v209 = vld [vmem:[%s186 + $0x14] sm:$0xf]
      %v210 = vld [vmem:[%s186 + $0x18] sm:$0xf]
      %v211 = vld [vmem:[%s186 + $0x1c] sm:$0xf]
      %v212 = vld [vmem:[%s186 + $0x20] sm:$0xf]
      %v213 = vld [vmem:[%s186 + $0x24] sm:$0xf]
      %v214 = vld [vmem:[%s186 + $0x28] sm:$0xf]
      %v215 = vld [vmem:[%s186 + $0x2c] sm:$0xf]
      %v216 = vld [vmem:[%s186 + $0x30] sm:$0xf]
      %v217 = vld [vmem:[%s186 + $0x34] sm:$0xf]
      %v218 = vld [vmem:[%s186 + $0x38] sm:$0xf]
      %v219 = vld [vmem:[%s186 + $0x3c] sm:$0xf]
      %v220 = vld [vmem:[%s186 + $0x40] sm:$0xf]
      %v221 = vld [vmem:[%s186 + $0x44] sm:$0xf]
      %v222 = vld [vmem:[%s186 + $0x48] sm:$0xf]
      %v223 = vld [vmem:[%s186 + $0x4c] sm:$0xf]
      %v224 = vld [vmem:[%s186 + $0x50] sm:$0xf]
      %v225 = vld [vmem:[%s186 + $0x54] sm:$0xf]
      %v226 = vld [vmem:[%s186 + $0x58] sm:$0xf]
      %v227 = vld [vmem:[%s186 + $0x5c] sm:$0xf]
      %v228 = vld [vmem:[%s186 + $0x60] sm:$0xf]
      %v229 = vld [vmem:[%s186 + $0x64] sm:$0xf]
      %v230 = vld [vmem:[%s186 + $0x68] sm:$0xf]
      %v231 = vld [vmem:[%s186 + $0x6c] sm:$0xf]
      %v232 = vld [vmem:[%s186 + $0x70] sm:$0xf]
      %v233 = vld [vmem:[%s186 + $0x74] sm:$0xf]
      %v234 = vld [vmem:[%s186 + $0x78] sm:$0xf]
      %v235 = vld [vmem:[%s186 + $0x7c] sm:$0xf]
      %v236 = vld [vmem:[%s186 + $0x80] sm:$0xf]
      %v237 = vld [vmem:[%s186 + $0x84] sm:$0xf]
      %v238 = vld [vmem:[%s186 + $0x88] sm:$0xf]
      %v239 = vld [vmem:[%s186 + $0x8c] sm:$0xf]
      %v240 = vld [vmem:[%s186 + $0x90] sm:$0xf]
      %v241 = vld [vmem:[%s186 + $0x94] sm:$0xf]
      %v242 = vld [vmem:[%s186 + $0x98] sm:$0xf]
      %v243 = vld [vmem:[%s186 + $0x9c] sm:$0xf]
      %v244 = vld [vmem:[%s186 + $0xa0] sm:$0xf]
      %v245 = vld [vmem:[%s186 + $0xa4] sm:$0xf]
      %v246 = vld [vmem:[%s186 + $0xa8] sm:$0xf]
      %v247 = vld [vmem:[%s186 + $0xac] sm:$0xf]
      %v248 = vld [vmem:[%s186 + $0xb0] sm:$0xf]
      %v249 = vld [vmem:[%s186 + $0xb4] sm:$0xf]
      %v250 = vld [vmem:[%s186 + $0xb8] sm:$0xf]
      %v251 = vld [vmem:[%s186 + $0xbc] sm:$0xf]
      %v252 = vld [vmem:[%s186 + $0xc0] sm:$0xf]
      %v253 = vld [vmem:[%s186 + $0xc4] sm:$0xf]
      %v254 = vld [vmem:[%s186 + $0xc8] sm:$0xf]
      %v255 = vld [vmem:[%s186 + $0xcc] sm:$0xf]
      %v256 = vld [vmem:[%s186 + $0xd0] sm:$0xf]
      %v257 = vld [vmem:[%s186 + $0xd4] sm:$0xf]
      %v258 = vld [vmem:[%s186 + $0xd8] sm:$0xf]
      %v259 = vld [vmem:[%s186 + $0xdc] sm:$0xf]
      %v260 = vld [vmem:[%s186 + $0xe0] sm:$0xf]
      %v261 = vld [vmem:[%s186 + $0xe4] sm:$0xf]
      %v262 = vld [vmem:[%s186 + $0xe8] sm:$0xf]
      %v263 = vld [vmem:[%s186 + $0xec] sm:$0xf]
      %v264 = vld [vmem:[%s186 + $0xf0] sm:$0xf]
      %v265 = vld [vmem:[%s186 + $0xf4] sm:$0xf]
      %v266 = vld [vmem:[%s186 + $0xf8] sm:$0xf]
      %v267 = vld [vmem:[%s186 + $0xfc] sm:$0xf]
      %v268 = vld [vmem:[%s192] sm:$0xf]
      %v269 = vld [vmem:[%s192 + $0x4] sm:$0xf]
      %v270 = vld [vmem:[%s192 + $0x8] sm:$0xf]
      %v271 = vld [vmem:[%s192 + $0xc] sm:$0xf]
      %v336 = vunpack.c.l.b16 %v204
      %v337 = vunpack.c.l.b16 %v205
      %v338 = vunpack.c.l.b16 %v206
      %v339 = vunpack.c.l.b16 %v207
      %v340 = vunpack.c.l.b16 %v208
      %v341 = vunpack.c.l.b16 %v209
      %v342 = vunpack.c.l.b16 %v210
      %v343 = vunpack.c.l.b16 %v211
      %v344 = vunpack.c.l.b16 %v212
      %v345 = vunpack.c.l.b16 %v213
      %v346 = vunpack.c.l.b16 %v214
      %v347 = vunpack.c.l.b16 %v215
      %v348 = vunpack.c.l.b16 %v216
      %v349 = vunpack.c.l.b16 %v217
      %v350 = vunpack.c.l.b16 %v218
      %v351 = vunpack.c.l.b16 %v219
      %v352 = vunpack.c.l.b16 %v220
      %v353 = vunpack.c.l.b16 %v221
      %v354 = vunpack.c.l.b16 %v222
      %v355 = vunpack.c.l.b16 %v223
      %v356 = vunpack.c.l.b16 %v224
      %v357 = vunpack.c.l.b16 %v225
      %v358 = vunpack.c.l.b16 %v226
      %v359 = vunpack.c.l.b16 %v227
      %v360 = vunpack.c.l.b16 %v228
      %v361 = vunpack.c.l.b16 %v229
      %v362 = vunpack.c.l.b16 %v230
      %v363 = vunpack.c.l.b16 %v231
      %v364 = vunpack.c.l.b16 %v232
      %v365 = vunpack.c.l.b16 %v233
      %v366 = vunpack.c.l.b16 %v234
      %v367 = vunpack.c.l.b16 %v235
      %v368 = vunpack.c.l.b16 %v236
      %v369 = vunpack.c.l.b16 %v237
      %v370 = vunpack.c.l.b16 %v238
      %v371 = vunpack.c.l.b16 %v239
      %v372 = vunpack.c.l.b16 %v240
      %v373 = vunpack.c.l.b16 %v241
      %v374 = vunpack.c.l.b16 %v242
      %v375 = vunpack.c.l.b16 %v243
      %v376 = vunpack.c.l.b16 %v244
      %v377 = vunpack.c.l.b16 %v245
      %v378 = vunpack.c.l.b16 %v246
      %v379 = vunpack.c.l.b16 %v247
      %v380 = vunpack.c.l.b16 %v248
      %v381 = vunpack.c.l.b16 %v249
      %v382 = vunpack.c.l.b16 %v250
      %v383 = vunpack.c.l.b16 %v251
      %v384 = vunpack.c.l.b16 %v252
      %v385 = vunpack.c.l.b16 %v253
      %v386 = vunpack.c.l.b16 %v254
      %v387 = vunpack.c.l.b16 %v255
      %v388 = vunpack.c.l.b16 %v256
      %v389 = vunpack.c.l.b16 %v257
      %v390 = vunpack.c.l.b16 %v258
      %v391 = vunpack.c.l.b16 %v259
      %v392 = vunpack.c.l.b16 %v260
      %v393 = vunpack.c.l.b16 %v261
      %v394 = vunpack.c.l.b16 %v262
      %v395 = vunpack.c.l.b16 %v263
      %v396 = vunpack.c.l.b16 %v264
      %v397 = vunpack.c.l.b16 %v265
      %v398 = vunpack.c.l.b16 %v266
      %v399 = vunpack.c.l.b16 %v267
      %v400 = vpack.c.b16 %v337, %v336
      %v401 = vpack.c.b16 %v339, %v338
      %v402 = vpack.c.b16 %v341, %v340
      %v403 = vpack.c.b16 %v343, %v342
      %v404 = vpack.c.b16 %v345, %v344
      %v405 = vpack.c.b16 %v347, %v346
      %v406 = vpack.c.b16 %v349, %v348
      %v407 = vpack.c.b16 %v351, %v350
      %v408 = vpack.c.b16 %v353, %v352
      %v409 = vpack.c.b16 %v355, %v354
      %v410 = vpack.c.b16 %v357, %v356
      %v411 = vpack.c.b16 %v359, %v358
      %v412 = vpack.c.b16 %v361, %v360
      %v413 = vpack.c.b16 %v363, %v362
      %v414 = vpack.c.b16 %v365, %v364
      %v415 = vpack.c.b16 %v367, %v366
      %v416 = vpack.c.b16 %v369, %v368
      %v417 = vpack.c.b16 %v371, %v370
      %v418 = vpack.c.b16 %v373, %v372
      %v419 = vpack.c.b16 %v375, %v374
      %v420 = vpack.c.b16 %v377, %v376
      %v421 = vpack.c.b16 %v379, %v378
      %v422 = vpack.c.b16 %v381, %v380
      %v423 = vpack.c.b16 %v383, %v382
      %v424 = vpack.c.b16 %v385, %v384
      %v425 = vpack.c.b16 %v387, %v386
      %v426 = vpack.c.b16 %v389, %v388
      %v427 = vpack.c.b16 %v391, %v390
      %v428 = vpack.c.b16 %v393, %v392
      %v429 = vpack.c.b16 %v395, %v394
      %v430 = vpack.c.b16 %v397, %v396
      %v431 = vpack.c.b16 %v399, %v398
      %v436 = vunpack.c.l.b16 %v268
      %v437 = vunpack.c.l.b16 %v269
      %v438 = vunpack.c.l.b16 %v270
      %v439 = vunpack.c.l.b16 %v271
      %v440 = vpack.c.b16 %v437, %v436
      %v441 = vpack.c.b16 %v439, %v438
      %vm444 = vcmask 261120
      %v446 = vsel %vm444, %v400, 0
      %v449 = vsel %vm444, %v401, 0
      %v452 = vsel %vm444, %v402, 0
      %v455 = vsel %vm444, %v403, 0
      %v458 = vsel %vm444, %v404, 0
      %v461 = vsel %vm444, %v405, 0
      %v464 = vsel %vm444, %v406, 0
      %v467 = vsel %vm444, %v407, 0
      %v470 = vsel %vm444, %v408, 0
      %v473 = vsel %vm444, %v409, 0
      %v476 = vsel %vm444, %v410, 0
      %v479 = vsel %vm444, %v411, 0
      %v482 = vsel %vm444, %v412, 0
      %v485 = vsel %vm444, %v413, 0
      %v488 = vsel %vm444, %v414, 0
      %v491 = vsel %vm444, %v415, 0
      %v494 = vsel %vm444, %v416, 0
      %v497 = vsel %vm444, %v417, 0
      %v500 = vsel %vm444, %v418, 0
      %v503 = vsel %vm444, %v419, 0
      %v506 = vsel %vm444, %v420, 0
      %v509 = vsel %vm444, %v421, 0
      %v512 = vsel %vm444, %v422, 0
      %v515 = vsel %vm444, %v423, 0
      %v518 = vsel %vm444, %v424, 0
      %v521 = vsel %vm444, %v425, 0
      %v524 = vsel %vm444, %v426, 0
      %v527 = vsel %vm444, %v427, 0
      %v530 = vsel %vm444, %v428, 0
      %v533 = vsel %vm444, %v429, 0
      %v536 = vsel %vm444, %v430, 0
      %v539 = vsel %vm444, %v431, 0
      %541 = vmatprep.subr.bf16.mxu0 0
      %542 = vmatpush1.bf16.msra.mxu0 %v440
      %543 = vmatprep.subr.bf16.mxu0 0
      %544 = vmatpush1.bf16.msra.mxu0 %v441
      %545 = vmatprep.subr.bf16.mxu0 0
      %546 = vmatpush1.bf16.msra.mxu0 0
      %547 = vmatprep.subr.bf16.mxu0 0
      %548 = vmatpush1.bf16.msra.mxu0 0
      %549 = vmatprep.subr.bf16.mxu0 0
      %550 = vmatpush1.bf16.msra.mxu0 0
      %551 = vmatprep.subr.bf16.mxu0 0
      %552 = vmatpush1.bf16.msra.mxu0 0
      %553 = vmatprep.subr.bf16.mxu0 0
      %554 = vmatpush1.bf16.msra.mxu0 0
      %555 = vmatprep.subr.bf16.mxu0 0
      %556 = vmatpush1.bf16.msra.mxu0 0
      %557 = vmatprep.subr.bf16.mxu0 0
      %558 = vmatpush1.bf16.msra.mxu0 0
      %559 = vmatprep.subr.bf16.mxu0 0
      %560 = vmatpush1.bf16.msra.mxu0 0
      %561 = vmatprep.subr.bf16.mxu0 0
      %562 = vmatpush1.bf16.msra.mxu0 0
      %563 = vmatprep.subr.bf16.mxu0 0
      %564 = vmatpush1.bf16.msra.mxu0 0
      %565 = vmatprep.subr.bf16.mxu0 0
      %566 = vmatpush1.bf16.msra.mxu0 0
      %567 = vmatprep.subr.bf16.mxu0 0
      %568 = vmatpush1.bf16.msra.mxu0 0
      %569 = vmatprep.subr.bf16.mxu0 0
      %570 = vmatpush1.bf16.msra.mxu0 0
      %571 = vmatprep.subr.bf16.mxu0 0
      %572 = vmatpush1.bf16.msra.mxu0 0
      %573 = vmatprep.mubr.bf16.mxu0 0
      %574 = vmatmul.mubr.bf16.gmra.mrb[0].mxu0 %v446
      %v575 = vpop.f32.mrb[0].mxu0
      %v576 = vadd.f32 0.0, %v575
      %v577 = vpop.f32.mrb[0].mxu0
      %v578 = vpop.f32.mrb[0].mxu0
      %v579 = vadd.f32 0.0, %v578
      %v580 = vpop.f32.mrb[0].mxu0
      %581 = vmatprep.mubr.bf16.mxu0 0
      %582 = vmatmul.mubr.bf16.gmra.mrb[0].mxu0 %v449
      %v583 = vpop.f32.mrb[0].mxu0
      %v584 = vadd.f32 0.0, %v583
      %v585 = vpop.f32.mrb[0].mxu0
      %v586 = vpop.f32.mrb[0].mxu0
      %v587 = vadd.f32 0.0, %v586
      %v588 = vpop.f32.mrb[0].mxu0
      %589 = vmatprep.mubr.bf16.mxu0 0
      %590 = vmatmul.mubr.bf16.gmra.mrb[0].mxu0 %v452
      %v591 = vpop.f32.mrb[0].mxu0
      %v592 = vadd.f32 0.0, %v591
      %v593 = vpop.f32.mrb[0].mxu0
      %v594 = vpop.f32.mrb[0].mxu0
      %v595 = vadd.f32 0.0, %v594
      %v596 = vpop.f32.mrb[0].mxu0
      %597 = vmatprep.mubr.bf16.mxu0 0
      %598 = vmatmul.mubr.bf16.gmra.mrb[0].mxu0 %v455
      %v599 = vpop.f32.mrb[0].mxu0
      %v600 = vadd.f32 0.0, %v599
      %v601 = vpop.f32.mrb[0].mxu0
      %v602 = vpop.f32.mrb[0].mxu0
      %v603 = vadd.f32 0.0, %v602
      %v604 = vpop.f32.mrb[0].mxu0
      %605 = vmatprep.mubr.bf16.mxu0 0
      %606 = vmatmul.mubr.bf16.gmra.mrb[0].mxu0 %v458
      %v607 = vpop.f32.mrb[0].mxu0
      %v608 = vadd.f32 0.0, %v607
      %v609 = vpop.f32.mrb[0].mxu0
      %v610 = vpop.f32.mrb[0].mxu0
      %v611 = vadd.f32 0.0, %v610
      %v612 = vpop.f32.mrb[0].mxu0
      %613 = vmatprep.mubr.bf16.mxu0 0
      %614 = vmatmul.mubr.bf16.gmra.mrb[0].mxu0 %v461
      %v615 = vpop.f32.mrb[0].mxu0
      %v616 = vadd.f32 0.0, %v615
      %v617 = vpop.f32.mrb[0].mxu0
      %v618 = vpop.f32.mrb[0].mxu0
      %v619 = vadd.f32 0.0, %v618
      %v620 = vpop.f32.mrb[0].mxu0
      %621 = vmatprep.mubr.bf16.mxu0 0
      %622 = vmatmul.mubr.bf16.gmra.mrb[0].mxu0 %v464
      %v623 = vpop.f32.mrb[0].mxu0
      %v624 = vadd.f32 0.0, %v623
      %v625 = vpop.f32.mrb[0].mxu0
      %v626 = vpop.f32.mrb[0].mxu0
      %v627 = vadd.f32 0.0, %v626
      %v628 = vpop.f32.mrb[0].mxu0
      %629 = vmatprep.mubr.bf16.mxu0 0
      %630 = vmatmul.mubr.bf16.gmra.mrb[0].mxu0 %v467
      %v631 = vpop.f32.mrb[0].mxu0
      %v632 = vadd.f32 0.0, %v631
      %v633 = vpop.f32.mrb[0].mxu0
      %v634 = vpop.f32.mrb[0].mxu0
      %v635 = vadd.f32 0.0, %v634
      %v636 = vpop.f32.mrb[0].mxu0
      %637 = vmatprep.mubr.bf16.mxu0 0
      %638 = vmatmul.mubr.bf16.gmra.mrb[0].mxu0 %v470
      %v639 = vpop.f32.mrb[0].mxu0
      %v640 = vadd.f32 0.0, %v639
      %v641 = vpop.f32.mrb[0].mxu0
      %v642 = vpop.f32.mrb[0].mxu0
      %v643 = vadd.f32 0.0, %v642
      %v644 = vpop.f32.mrb[0].mxu0
      %645 = vmatprep.mubr.bf16.mxu0 0
      %646 = vmatmul.mubr.bf16.gmra.mrb[0].mxu0 %v473
      %v647 = vpop.f32.mrb[0].mxu0
      %v648 = vadd.f32 0.0, %v647
      %v649 = vpop.f32.mrb[0].mxu0
      %v650 = vpop.f32.mrb[0].mxu0
      %v651 = vadd.f32 0.0, %v650
      %v652 = vpop.f32.mrb[0].mxu0
      %653 = vmatprep.mubr.bf16.mxu0 0
      %654 = vmatmul.mubr.bf16.gmra.mrb[0].mxu0 %v476
      %v655 = vpop.f32.mrb[0].mxu0
      %v656 = vadd.f32 0.0, %v655
      %v657 = vpop.f32.mrb[0].mxu0
      %v658 = vpop.f32.mrb[0].mxu0
      %v659 = vadd.f32 0.0, %v658
      %v660 = vpop.f32.mrb[0].mxu0
      %661 = vmatprep.mubr.bf16.mxu0 0
      %662 = vmatmul.mubr.bf16.gmra.mrb[0].mxu0 %v479
      %v663 = vpop.f32.mrb[0].mxu0
      %v664 = vadd.f32 0.0, %v663
      %v665 = vpop.f32.mrb[0].mxu0
      %v666 = vpop.f32.mrb[0].mxu0
      %v667 = vadd.f32 0.0, %v666
      %v668 = vpop.f32.mrb[0].mxu0
      %669 = vmatprep.mubr.bf16.mxu0 0
      %670 = vmatmul.mubr.bf16.gmra.mrb[0].mxu0 %v482
      %v671 = vpop.f32.mrb[0].mxu0
      %v672 = vadd.f32 0.0, %v671
      %v673 = vpop.f32.mrb[0].mxu0
      %v674 = vpop.f32.mrb[0].mxu0
      %v675 = vadd.f32 0.0, %v674
      %v676 = vpop.f32.mrb[0].mxu0
      %677 = vmatprep.mubr.bf16.mxu0 0
      %678 = vmatmul.mubr.bf16.gmra.mrb[0].mxu0 %v485
      %v679 = vpop.f32.mrb[0].mxu0
      %v680 = vadd.f32 0.0, %v679
      %v681 = vpop.f32.mrb[0].mxu0
      %v682 = vpop.f32.mrb[0].mxu0
      %v683 = vadd.f32 0.0, %v682
      %v684 = vpop.f32.mrb[0].mxu0
      %685 = vmatprep.mubr.bf16.mxu0 0
      %686 = vmatmul.mubr.bf16.gmra.mrb[0].mxu0 %v488
      %v687 = vpop.f32.mrb[0].mxu0
      %v688 = vadd.f32 0.0, %v687
      %v689 = vpop.f32.mrb[0].mxu0
      %v690 = vpop.f32.mrb[0].mxu0
      %v691 = vadd.f32 0.0, %v690
      %v692 = vpop.f32.mrb[0].mxu0
      %693 = vmatprep.mubr.bf16.mxu0 0
      %694 = vmatmul.mubr.bf16.gmra.mrb[0].mxu0 %v491
      %v695 = vpop.f32.mrb[0].mxu0
      %v696 = vadd.f32 0.0, %v695
      %v697 = vpop.f32.mrb[0].mxu0
      %v698 = vpop.f32.mrb[0].mxu0
      %v699 = vadd.f32 0.0, %v698
      %v700 = vpop.f32.mrb[0].mxu0
      %701 = vmatprep.mubr.bf16.mxu0 0
      %702 = vmatmul.mubr.bf16.gmra.mrb[0].mxu0 %v494
      %v703 = vpop.f32.mrb[0].mxu0
      %v704 = vadd.f32 0.0, %v703
      %v705 = vpop.f32.mrb[0].mxu0
      %v706 = vpop.f32.mrb[0].mxu0
      %v707 = vadd.f32 0.0, %v706
      %v708 = vpop.f32.mrb[0].mxu0
      %709 = vmatprep.mubr.bf16.mxu0 0
      %710 = vmatmul.mubr.bf16.gmra.mrb[0].mxu0 %v497
      %v711 = vpop.f32.mrb[0].mxu0
      %v712 = vadd.f32 0.0, %v711
      %v713 = vpop.f32.mrb[0].mxu0
      %v714 = vpop.f32.mrb[0].mxu0
      %v715 = vadd.f32 0.0, %v714
      %v716 = vpop.f32.mrb[0].mxu0
      %717 = vmatprep.mubr.bf16.mxu0 0
      %718 = vmatmul.mubr.bf16.gmra.mrb[0].mxu0 %v500
      %v719 = vpop.f32.mrb[0].mxu0
      %v720 = vadd.f32 0.0, %v719
      %v721 = vpop.f32.mrb[0].mxu0
      %v722 = vpop.f32.mrb[0].mxu0
      %v723 = vadd.f32 0.0, %v722
      %v724 = vpop.f32.mrb[0].mxu0
      %725 = vmatprep.mubr.bf16.mxu0 0
      %726 = vmatmul.mubr.bf16.gmra.mrb[0].mxu0 %v503
      %v727 = vpop.f32.mrb[0].mxu0
      %v728 = vadd.f32 0.0, %v727
      %v729 = vpop.f32.mrb[0].mxu0
      %v730 = vpop.f32.mrb[0].mxu0
      %v731 = vadd.f32 0.0, %v730
      %v732 = vpop.f32.mrb[0].mxu0
      %733 = vmatprep.mubr.bf16.mxu0 0
      %734 = vmatmul.mubr.bf16.gmra.mrb[0].mxu0 %v506
      %v735 = vpop.f32.mrb[0].mxu0
      %v736 = vadd.f32 0.0, %v735
      %v737 = vpop.f32.mrb[0].mxu0
      %v738 = vpop.f32.mrb[0].mxu0
      %v739 = vadd.f32 0.0, %v738
      %v740 = vpop.f32.mrb[0].mxu0
      %741 = vmatprep.mubr.bf16.mxu0 0
      %742 = vmatmul.mubr.bf16.gmra.mrb[0].mxu0 %v509
      %v743 = vpop.f32.mrb[0].mxu0
      %v744 = vadd.f32 0.0, %v743
      %v745 = vpop.f32.mrb[0].mxu0
      %v746 = vpop.f32.mrb[0].mxu0
      %v747 = vadd.f32 0.0, %v746
      %v748 = vpop.f32.mrb[0].mxu0
      %749 = vmatprep.mubr.bf16.mxu0 0
      %750 = vmatmul.mubr.bf16.gmra.mrb[0].mxu0 %v512
      %v751 = vpop.f32.mrb[0].mxu0
      %v752 = vadd.f32 0.0, %v751
      %v753 = vpop.f32.mrb[0].mxu0
      %v754 = vpop.f32.mrb[0].mxu0
      %v755 = vadd.f32 0.0, %v754
      %v756 = vpop.f32.mrb[0].mxu0
      %757 = vmatprep.mubr.bf16.mxu0 0
      %758 = vmatmul.mubr.bf16.gmra.mrb[0].mxu0 %v515
      %v759 = vpop.f32.mrb[0].mxu0
      %v760 = vadd.f32 0.0, %v759
      %v761 = vpop.f32.mrb[0].mxu0
      %v762 = vpop.f32.mrb[0].mxu0
      %v763 = vadd.f32 0.0, %v762
      %v764 = vpop.f32.mrb[0].mxu0
      %765 = vmatprep.mubr.bf16.mxu0 0
      %766 = vmatmul.mubr.bf16.gmra.mrb[0].mxu0 %v518
      %v767 = vpop.f32.mrb[0].mxu0
      %v768 = vadd.f32 0.0, %v767
      %v769 = vpop.f32.mrb[0].mxu0
      %v770 = vpop.f32.mrb[0].mxu0
      %v771 = vadd.f32 0.0, %v770
      %v772 = vpop.f32.mrb[0].mxu0
      %773 = vmatprep.mubr.bf16.mxu0 0
      %774 = vmatmul.mubr.bf16.gmra.mrb[0].mxu0 %v521
      %v775 = vpop.f32.mrb[0].mxu0
      %v776 = vadd.f32 0.0, %v775
      %v777 = vpop.f32.mrb[0].mxu0
      %v778 = vpop.f32.mrb[0].mxu0
      %v779 = vadd.f32 0.0, %v778
      %v780 = vpop.f32.mrb[0].mxu0
      %781 = vmatprep.mubr.bf16.mxu0 0
      %782 = vmatmul.mubr.bf16.gmra.mrb[0].mxu0 %v524
      %v783 = vpop.f32.mrb[0].mxu0
      %v784 = vadd.f32 0.0, %v783
      %v785 = vpop.f32.mrb[0].mxu0
      %v786 = vpop.f32.mrb[0].mxu0
      %v787 = vadd.f32 0.0, %v786
      %v788 = vpop.f32.mrb[0].mxu0
      %789 = vmatprep.mubr.bf16.mxu0 0
      %790 = vmatmul.mubr.bf16.gmra.mrb[0].mxu0 %v527
      %v791 = vpop.f32.mrb[0].mxu0
      %v792 = vadd.f32 0.0, %v791
      %v793 = vpop.f32.mrb[0].mxu0
      %v794 = vpop.f32.mrb[0].mxu0
      %v795 = vadd.f32 0.0, %v794
      %v796 = vpop.f32.mrb[0].mxu0
      %797 = vmatprep.mubr.bf16.mxu0 0
      %798 = vmatmul.mubr.bf16.gmra.mrb[0].mxu0 %v530
      %v799 = vpop.f32.mrb[0].mxu0
      %v800 = vadd.f32 0.0, %v799
      %v801 = vpop.f32.mrb[0].mxu0
      %v802 = vpop.f32.mrb[0].mxu0
      %v803 = vadd.f32 0.0, %v802
      %v804 = vpop.f32.mrb[0].mxu0
      %805 = vmatprep.mubr.bf16.mxu0 0
      %806 = vmatmul.mubr.bf16.gmra.mrb[0].mxu0 %v533
      %v807 = vpop.f32.mrb[0].mxu0
      %v808 = vadd.f32 0.0, %v807
      %v809 = vpop.f32.mrb[0].mxu0
      %v810 = vpop.f32.mrb[0].mxu0
      %v811 = vadd.f32 0.0, %v810
      %v812 = vpop.f32.mrb[0].mxu0
      %813 = vmatprep.mubr.bf16.mxu0 0
      %814 = vmatmul.mubr.bf16.gmra.mrb[0].mxu0 %v536
      %v815 = vpop.f32.mrb[0].mxu0
      %v816 = vadd.f32 0.0, %v815
      %v817 = vpop.f32.mrb[0].mxu0
      %v818 = vpop.f32.mrb[0].mxu0
      %v819 = vadd.f32 0.0, %v818
      %v820 = vpop.f32.mrb[0].mxu0
      %821 = vmatprep.mubr.bf16.mxu0 0
      %822 = vmatmul.mubr.bf16.gmra.mrb[0].mxu0 %v539
      %v823 = vpop.f32.mrb[0].mxu0
      %v824 = vadd.f32 0.0, %v823
      %v825 = vpop.f32.mrb[0].mxu0
      %v826 = vpop.f32.mrb[0].mxu0
      %v827 = vadd.f32 0.0, %v826
      %v828 = vpop.f32.mrb[0].mxu0
      %829 = vdwg.mxu0
      %v830 = vtanh.pop %v576
      %v831 = vtanh.pop %v579
      %v832 = vtanh.pop %v584
      %v833 = vtanh.pop %v587
      %v834 = vtanh.pop %v592
      %v835 = vtanh.pop %v595
      %v836 = vtanh.pop %v600
      %v837 = vtanh.pop %v603
      %v838 = vtanh.pop %v608
      %v839 = vtanh.pop %v611
      %v840 = vtanh.pop %v616
      %v841 = vtanh.pop %v619
      %v842 = vtanh.pop %v624
      %v843 = vtanh.pop %v627
      %v844 = vtanh.pop %v632
      %v845 = vtanh.pop %v635
      %v846 = vtanh.pop %v640
      %v847 = vtanh.pop %v643
      %v848 = vtanh.pop %v648
      %v849 = vtanh.pop %v651
      %v850 = vtanh.pop %v656
      %v851 = vtanh.pop %v659
      %v852 = vtanh.pop %v664
      %v853 = vtanh.pop %v667
      %v854 = vtanh.pop %v672
      %v855 = vtanh.pop %v675
      %v856 = vtanh.pop %v680
      %v857 = vtanh.pop %v683
      %v858 = vtanh.pop %v688
      %v859 = vtanh.pop %v691
      %v860 = vtanh.pop %v696
      %v861 = vtanh.pop %v699
      %v862 = vtanh.pop %v704
      %v863 = vtanh.pop %v707
      %v864 = vtanh.pop %v712
      %v865 = vtanh.pop %v715
      %v866 = vtanh.pop %v720
      %v867 = vtanh.pop %v723
      %v868 = vtanh.pop %v728
      %v869 = vtanh.pop %v731
      %v870 = vtanh.pop %v736
      %v871 = vtanh.pop %v739
      %v872 = vtanh.pop %v744
      %v873 = vtanh.pop %v747
      %v874 = vtanh.pop %v752
      %v875 = vtanh.pop %v755
      %v876 = vtanh.pop %v760
      %v877 = vtanh.pop %v763
      %v878 = vtanh.pop %v768
      %v879 = vtanh.pop %v771
      %v880 = vtanh.pop %v776
      %v881 = vtanh.pop %v779
      %v882 = vtanh.pop %v784
      %v883 = vtanh.pop %v787
      %v884 = vtanh.pop %v792
      %v885 = vtanh.pop %v795
      %v886 = vtanh.pop %v800
      %v887 = vtanh.pop %v803
      %v888 = vtanh.pop %v808
      %v889 = vtanh.pop %v811
      %v890 = vtanh.pop %v816
      %v891 = vtanh.pop %v819
      %v892 = vtanh.pop %v824
      %v893 = vtanh.pop %v827
      %894 = vst [vmem:[%s201] sm:$0xff] %v830
      %895 = vst [vmem:[%s201 + $0x8] sm:$0xff] %v831
      %896 = vst [vmem:[%s201 + $0x10] sm:$0xff] %v832
      %897 = vst [vmem:[%s201 + $0x18] sm:$0xff] %v833
      %898 = vst [vmem:[%s201 + $0x20] sm:$0xff] %v834
      %899 = vst [vmem:[%s201 + $0x28] sm:$0xff] %v835
      %900 = vst [vmem:[%s201 + $0x30] sm:$0xff] %v836
      %901 = vst [vmem:[%s201 + $0x38] sm:$0xff] %v837
      %902 = vst [vmem:[%s201 + $0x40] sm:$0xff] %v838
      %903 = vst [vmem:[%s201 + $0x48] sm:$0xff] %v839
      %904 = vst [vmem:[%s201 + $0x50] sm:$0xff] %v840
      %905 = vst [vmem:[%s201 + $0x58] sm:$0xff] %v841
      %906 = vst [vmem:[%s201 + $0x60] sm:$0xff] %v842
      %907 = vst [vmem:[%s201 + $0x68] sm:$0xff] %v843
      %908 = vst [vmem:[%s201 + $0x70] sm:$0xff] %v844
      %909 = vst [vmem:[%s201 + $0x78] sm:$0xff] %v845
      %910 = vst [vmem:[%s201 + $0x80] sm:$0xff] %v846
      %911 = vst [vmem:[%s201 + $0x88] sm:$0xff] %v847
      %912 = vst [vmem:[%s201 + $0x90] sm:$0xff] %v848
      %913 = vst [vmem:[%s201 + $0x98] sm:$0xff] %v849
      %914 = vst [vmem:[%s201 + $0xa0] sm:$0xff] %v850
      %915 = vst [vmem:[%s201 + $0xa8] sm:$0xff] %v851
      %916 = vst [vmem:[%s201 + $0xb0] sm:$0xff] %v852
      %917 = vst [vmem:[%s201 + $0xb8] sm:$0xff] %v853
      %918 = vst [vmem:[%s201 + $0xc0] sm:$0xff] %v854
      %919 = vst [vmem:[%s201 + $0xc8] sm:$0xff] %v855
      %920 = vst [vmem:[%s201 + $0xd0] sm:$0xff] %v856
      %921 = vst [vmem:[%s201 + $0xd8] sm:$0xff] %v857
      %922 = vst [vmem:[%s201 + $0xe0] sm:$0xff] %v858
      %923 = vst [vmem:[%s201 + $0xe8] sm:$0xff] %v859
      %924 = vst [vmem:[%s201 + $0xf0] sm:$0xff] %v860
      %925 = vst [vmem:[%s201 + $0xf8] sm:$0xff] %v861
      %926 = vst [vmem:[%s201 + $0x100] sm:$0xff] %v862
      %927 = vst [vmem:[%s201 + $0x108] sm:$0xff] %v863
      %928 = vst [vmem:[%s201 + $0x110] sm:$0xff] %v864
      %929 = vst [vmem:[%s201 + $0x118] sm:$0xff] %v865
      %930 = vst [vmem:[%s201 + $0x120] sm:$0xff] %v866
      %931 = vst [vmem:[%s201 + $0x128] sm:$0xff] %v867
      %932 = vst [vmem:[%s201 + $0x130] sm:$0xff] %v868
      %933 = vst [vmem:[%s201 + $0x138] sm:$0xff] %v869
      %934 = vst [vmem:[%s201 + $0x140] sm:$0xff] %v870
      %935 = vst [vmem:[%s201 + $0x148] sm:$0xff] %v871
      %936 = vst [vmem:[%s201 + $0x150] sm:$0xff] %v872
      %937 = vst [vmem:[%s201 + $0x158] sm:$0xff] %v873
      %938 = vst [vmem:[%s201 + $0x160] sm:$0xff] %v874
      %939 = vst [vmem:[%s201 + $0x168] sm:$0xff] %v875
      %940 = vst [vmem:[%s201 + $0x170] sm:$0xff] %v876
      %941 = vst [vmem:[%s201 + $0x178] sm:$0xff] %v877
      %942 = vst [vmem:[%s201 + $0x180] sm:$0xff] %v878
      %943 = vst [vmem:[%s201 + $0x188] sm:$0xff] %v879
      %944 = vst [vmem:[%s201 + $0x190] sm:$0xff] %v880
      %945 = vst [vmem:[%s201 + $0x198] sm:$0xff] %v881
      %946 = vst [vmem:[%s201 + $0x1a0] sm:$0xff] %v882
      %947 = vst [vmem:[%s201 + $0x1a8] sm:$0xff] %v883
      %948 = vst [vmem:[%s201 + $0x1b0] sm:$0xff] %v884
      %949 = vst [vmem:[%s201 + $0x1b8] sm:$0xff] %v885
      %950 = vst [vmem:[%s201 + $0x1c0] sm:$0xff] %v886
      %951 = vst [vmem:[%s201 + $0x1c8] sm:$0xff] %v887
      %952 = vst [vmem:[%s201 + $0x1d0] sm:$0xff] %v888
      %953 = vst [vmem:[%s201 + $0x1d8] sm:$0xff] %v889
      %954 = vst [vmem:[%s201 + $0x1e0] sm:$0xff] %v890
      %955 = vst [vmem:[%s201 + $0x1e8] sm:$0xff] %v891
      %956 = vst [vmem:[%s201 + $0x1f0] sm:$0xff] %v892
      %957 = vst [vmem:[%s201 + $0x1f8] sm:$0xff] %v893
      %s958 = smul.u32 64, %s18
      %p959 = scmp.lt.s32.totalorder %s17, 3
      %s960 = scalar_select %p959, %s17, 3
      %p961 = scmp.lt.s32.totalorder %s958, 255
      %s962 = scalar_select %p961, %s958, 255
      %s963 = smul.addr %s960, 256
      %s964 = sadd.s32 %s962, %s963
      %s965 = smul.addr %s964, 8
      %s966 = scalar_lea.vmem %s2, %s965
      // Predicated region
      $region29: #{netg_celeba_forward.17} parent=27 // pred_check
        %p967 = pneg %p99
      $region30: #{netg_celeba_forward.17} parent=27 // pred_check_branch
        %969 = sbr.rel (%p967) target = $region32
      $region31: #{netg_celeba_forward.17} parent=27 // pred_region
        %s970 = smul.u32 64, %s18
      $region32: #{netg_celeba_forward.17} parent=27 // pred_fallthru
        _
    $region28: #{netg_celeba_forward.17} parent=5 // pred_fallthru
      _
    %p971 = scmp.le.s32.totalorder 2, %s8
    // Predicated region
    $region33: #{netg_celeba_forward.17} parent=5 // pred_check
      %p972 = pneg %p971
    $region34: #{netg_celeba_forward.17} parent=5 // pred_check_branch
      %974 = sbr.rel (%p972) target = $region36
    $region35: #{netg_celeba_forward.17} parent=5 // pred_region
      %s975 = ssub.s32 %s8, 2
      // Predicated region
      $region37: #{netg_celeba_forward.17} parent=35 // pred_check
        %p976 = pneg %p105
      $region38: #{netg_celeba_forward.17} parent=35 // pred_check_branch
        %978 = sbr.rel (%p976) target = $region40
      $region39: #{netg_celeba_forward.17} parent=35 // pred_region
        %s979 = smul.u32 64, %s20
        %p980 = scmp.lt.s32.totalorder %s19, 3
        %s981 = scalar_select %p980, %s19, 3
        %p982 = scmp.lt.s32.totalorder %s979, 255
        %s983 = scalar_select %p982, %s979, 255
        %s984 = smul.addr %s981, 256
        %s985 = sadd.s32 %s983, %s984
        %s986 = smul.addr %s985, 8
        %s987 = scalar_lea.vmem %s2, %s986
      $region40: #{netg_celeba_forward.17} parent=35 // pred_fallthru
        _
    $region36: #{netg_celeba_forward.17} parent=5 // pred_fallthru
      _
  $region6: #{netg_celeba_forward.17} parent=0 // loop_footer
    %s12 = sadd.s32 1, %s8
  $region7: #{netg_celeba_forward.17} parent=0 // loop_footer_branch
    %7 = sbr.rel target = $region3
  $region8: #{netg_celeba_forward.17} parent=0 // loop_exit
    _

</llo_original>
